<compile_context>
chip_gen: v7x
topology: tpu7x:2x2x1
jax: 0.10.0
libtpu: 0.0.40
codegen_flags: <defaults>
</compile_context>

<pallas_src>
import jax
import jax.numpy as jnp
from jax.experimental import pallas as pl
from jax.experimental.pallas import tpu as pltpu


def _make_gat_kernel(tm, ts, d_input, n_head, d_head, d_out, include_top,
                     average_heads, include_bias, negative_slope=0.2,
                     bn_eps=1e-5):
    bn_scale = float(1.0 / (1.0 + bn_eps) ** 0.5)   # eval-mode BatchNorm scale
    hd = n_head * d_head

    def kernel(x_dst_ref, h_src_ref, ssrc_ref, sdst_ref, adj_ref, w_lin_ref,
               bias_ref, out_ref, m_ref, l_ref, acc_ref):
        k = pl.program_id(1)          # src-tile index (online-softmax axis)
        nk = pl.num_programs(1)

        # ---- init per-dst-tile online-softmax state -------------------------
        @pl.when(k == 0)
        def _init():
            # Running max starts at 0 (not -inf): exp arguments stay <= 0 and
            # masked logits (-1e30) underflow to exactly 0, so no `* adj`
            # multiply is needed.  Safe while the true max logit > ~-87 (holds
            # for normalized inputs; every row has a self-loop).
            m_ref[...] = jnp.zeros_like(m_ref)
            l_ref[...] = jnp.zeros_like(l_ref)
            acc_ref[...] = jnp.zeros_like(acc_ref)

        # Mask and projected features for this (dst tile, src tile) — built
        # once and reused by every head.
        mask = adj_ref[...] != 0                         # (TM, TS) bool
        h_src = h_src_ref[...]                           # (TS, H*D) bf16

        # ---- per-head flash-style masked edge-softmax (unrolled) ------------
        # TODO(synk): on v6e/v7x the (TM, TS) elementwise path could run in
        # bf16 for ~2x VPU/EUP throughput; kept f32 for v5e portability.
        for h in range(n_head):
            sl = slice(h * d_head, (h + 1) * d_head)
            s_src = ssrc_ref[h:h + 1, :]                 # (1, TS)
            s_dst = sdst_ref[:, h:h + 1]                 # (TM, 1)
            logit = s_dst + s_src                        # (TM, TS)
            logit = jnp.maximum(logit, negative_slope * logit)   # LeakyReLU
            z = jnp.where(mask, logit, -1e30)

            m_prev = m_ref[h]                            # (TM, 1)
            m_new = jnp.maximum(m_prev, jnp.max(z, axis=1, keepdims=True))
            alpha = jnp.exp(m_prev - m_new)
            p = jnp.exp(z - m_new)       # masked entries underflow to 0
            l_ref[h] = alpha * l_ref[h] + jnp.sum(p, axis=1, keepdims=True)
            # bf16 operands on the MXU, f32 accumulation.
            acc_ref[:, sl] = alpha * acc_ref[:, sl] + jnp.dot(
                p.astype(jnp.bfloat16), h_src[:, sl],
                preferred_element_type=jnp.float32)
            m_ref[h] = m_new

        # ---- epilogue: normalize, combine heads, residual, top, bias --------
        @pl.when(k == nk - 1)
        def _epilogue():
            if average_heads:
                comb = jnp.zeros((tm, d_head), jnp.float32)
                for h in range(n_head):
                    sl = slice(h * d_head, (h + 1) * d_head)
                    inv_l = pl.reciprocal(jnp.maximum(l_ref[h], 1e-30))
                    comb = comb + acc_ref[:, sl] * inv_l
                comb = comb * (1.0 / n_head)
            else:
                for h in range(n_head):
                    sl = slice(h * d_head, (h + 1) * d_head)
                    inv_l = pl.reciprocal(jnp.maximum(l_ref[h], 1e-30))
                    acc_ref[:, sl] = acc_ref[:, sl] * inv_l
                comb = acc_ref[...]                      # (TM, H*D)
            comb = comb + jnp.dot(x_dst_ref[...], w_lin_ref[...],
                                  preferred_element_type=jnp.float32)
            if include_top:
                # Eval-mode BatchNorm1d (running_mean=0, running_var=1,
                # gamma=1, beta=0) + ReLU; Dropout(0.75) is identity in eval.
                # TODO(synk): training-mode batch statistics / dropout RNG.
                comb = comb * bn_scale
                comb = jnp.maximum(comb, 0.0)
            if include_bias:
                comb = comb + bias_ref[...]
            out_ref[...] = comb

    return kernel


def gat_conv_forward(x, adj, w_embed_t, w_lin_t, a_src, a_dst, bias, *,
                     n_head, d_head, include_top, average_heads, include_bias,
                     tile_dst=128, tile_src=512):
    N, d_input = x.shape
    hd = n_head * d_head
    d_out = d_head if average_heads else hd

    tm = min(tile_dst, N)
    ts = min(tile_src, N)
    assert N % tm == 0 and N % ts == 0, "N must divide by the tile sizes"
    # TODO(synk): pad ragged N (not a multiple of the tile) with masked rows.
    num_i, num_k = N // tm, N // ts

    # ---- wrapper precompute (ordinary XLA matmuls, done once) ---------------
    h_all = jnp.dot(x, w_embed_t)                        # (N, H*D) f32
    h_r = h_all.reshape(N, n_head, d_head)
    s_src = jnp.einsum('nhd,hd->nh', h_r, a_src)         # (N, H)
    s_dst = jnp.einsum('nhd,hd->nh', h_r, a_dst)         # (N, H)
    s_src_t = s_src.T                                    # (H, N) lane-major
    h_bf16 = h_all.astype(jnp.bfloat16)                  # half the HBM bytes
    adj_i8 = adj.astype(jnp.int8)                        # 4x less than f32
    bias2 = bias.reshape(1, d_out)

    kernel = _make_gat_kernel(tm, ts, d_input, n_head, d_head, d_out,
                              include_top, average_heads, include_bias)

    grid = (num_i, num_k)
    in_specs = [
        pl.BlockSpec((tm, d_input), lambda i, k: (i, 0)),   # x (dst rows)
        pl.BlockSpec((ts, hd), lambda i, k: (k, 0)),        # H = xW (src rows)
        pl.BlockSpec((n_head, ts), lambda i, k: (0, k)),    # s_src (row-major)
        pl.BlockSpec((tm, n_head), lambda i, k: (i, 0)),    # s_dst
        pl.BlockSpec((tm, ts), lambda i, k: (i, k)),        # adj tile (int8)
        pl.BlockSpec((d_input, d_out), lambda i, k: (0, 0)),  # W_lin
        pl.BlockSpec((1, d_out), lambda i, k: (0, 0)),      # bias
    ]
    out_spec = pl.BlockSpec((tm, d_out), lambda i, k: (i, 0))

    scratch = [
        pltpu.VMEM((n_head, tm, 1), jnp.float32),   # running max m (per head)
        pltpu.VMEM((n_head, tm, 1), jnp.float32),   # running sum l (per head)
        pltpu.VMEM((tm, hd), jnp.float32),          # lane-contiguous acc
    ]

    # VMEM budget derived from the actual tile plan (double-buffered inputs +
    # resident output + scratch), with generous headroom but capped so it
    # still fits v7x's 64 MiB VMEM with room for double-buffering.
    working = 2 * (tm * ts                 # adj int8
                   + ts * hd * 2           # H bf16
                   + tm * d_input * 4      # x dst rows
                   + n_head * ts * 4       # s_src
                   + tm * n_head * 4       # s_dst
                   + d_input * d_out * 4 + d_out * 4
                   + tm * d_out * 4)       # output block
    working += (2 * n_head * tm + tm * hd) * 4
    vmem_limit = int(min(max(4 * working, 32 * 1024 * 1024),
                         48 * 1024 * 1024))

    # Advisory cost estimate for the XLA scheduler.
    steps = num_i * num_k
    flops = (steps * n_head * (2 * tm * ts * d_head + 8 * tm * ts)
             + num_i * (2 * tm * d_input * d_out + 4 * tm * d_out))
    transcendentals = steps * n_head * (tm * ts + tm) + num_i * n_head * tm
    bytes_accessed = (N * N                        # int8 adjacency
                      + num_i * N * hd * 2         # H stream (bf16)
                      + num_i * N * n_head * 4     # s_src stream
                      + N * (d_input + n_head + d_out) * 4
                      + d_input * d_out * 4)

    return pl.pallas_call(
        kernel,
        out_shape=jax.ShapeDtypeStruct((N, d_out), jnp.float32),
        grid_spec=pltpu.PrefetchScalarGridSpec(
            num_scalar_prefetch=0,
            grid=grid,
            in_specs=in_specs,
            out_specs=out_spec,
            scratch_shapes=scratch),
        compiler_params=pltpu.CompilerParams(
            # dst tiles shard across TensorCores (v7x megacore); the src-tile
            # axis carries the online-softmax accumulators.
            dimension_semantics=("parallel", "arbitrary"),
            vmem_limit_bytes=vmem_limit),
        cost_estimate=pl.CostEstimate(flops=int(flops),
                                      transcendentals=int(transcendentals),
                                      bytes_accessed=int(bytes_accessed)),
    )(x, h_bf16, s_src_t, s_dst, adj_i8, w_lin_t, bias2)


def gat_conv_reference(x, adj, w_embed_t, w_lin_t, a_src, a_dst, bias, *,
                       n_head, d_head, include_top, average_heads,
                       include_bias, negative_slope=0.2, bn_eps=1e-5):
    """Pure-JAX (f32) reference mirroring the PyTorch/DGL forward."""
    N = x.shape[0]
    h = (x @ w_embed_t).reshape(N, n_head, d_head)
    dot_src = jnp.sum(h * a_src[None], axis=-1)                  # (N, H)
    dot_dst = jnp.sum(h * a_dst[None], axis=-1)                  # (N, H)
    logit = dot_dst[:, None, :] + dot_src[None, :, :]            # (dst, src, H)
    logit = jnp.where(logit > 0, logit, negative_slope * logit)
    mask = adj[:, :, None]
    z = jnp.where(mask > 0, logit, -1e30)
    e = jnp.exp(z - jnp.max(z, axis=1, keepdims=True)) * mask
    prob = e / jnp.maximum(jnp.sum(e, axis=1, keepdims=True), 1e-30)
    out = jnp.einsum('ijh,jhd->ihd', prob, h)                    # (N, H, D)
    if average_heads:
        out = jnp.mean(out, axis=1)
    else:
        out = out.reshape(N, n_head * d_head)
    out = out + x @ w_lin_t
    if include_top:
        out = out / jnp.sqrt(1.0 + bn_eps)
        out = jnp.maximum(out, 0.0)
    if include_bias:
        out = out + bias
    return out


def _xavier_normal(key, shape, fan_in, fan_out, gain):
    std = gain * (2.0 / (fan_in + fan_out)) ** 0.5
    return std * jax.random.normal(key, shape, dtype=jnp.float32)


if __name__ == "__main__":
    # Config (mirrors GATConv.__init__ args); N chosen so the grid has
    # multiple dst tiles and the src axis exercises the online softmax.
    N = 256
    d_input = 16
    d_head = 8
    n_head = 4
    include_top = True
    average_heads = False
    include_bias = True

    gain = 2.0 ** 0.5  # nn.init.calculate_gain('relu')

    key = jax.random.PRNGKey(0)
    k_x, k_adj, k_we, k_wl, k_as, k_ad, k_b = jax.random.split(key, 7)

    # Inputs
    x = jax.random.normal(k_x, (N, d_input), dtype=jnp.float32)
    adj = (jax.random.uniform(k_adj, (N, N)) < 0.1).astype(jnp.float32)
    adj = jnp.maximum(adj, jnp.eye(N, dtype=jnp.float32))  # self-loops

    # Parameters (torch Linear weight is (out, in); kernel takes the transpose)
    HD = n_head * d_head
    d_lin_out = d_head if average_heads else HD
    w_embed = _xavier_normal(k_we, (HD, d_input), d_input, HD, gain)
    w_lin = _xavier_normal(k_wl, (d_lin_out, d_input), d_input, d_lin_out, gain)
    a_src = _xavier_normal(k_as, (n_head, d_head), d_head, n_head, gain)
    a_dst = _xavier_normal(k_ad, (n_head, d_head), d_head, n_head, gain)
    bias = 0.1 * jax.random.normal(k_b, (1, d_lin_out), dtype=jnp.float32)

    kwargs = dict(n_head=n_head, d_head=d_head, include_top=include_top,
                  average_heads=average_heads, include_bias=include_bias)

    out = gat_conv_forward(x, adj, w_embed.T, w_lin.T, a_src, a_dst, bias,
                           **kwargs)
    out = jax.block_until_ready(out)

    ref = gat_conv_reference(x, adj, w_embed.T, w_lin.T, a_src, a_dst, bias,
                             **kwargs)
    assert out.shape == (N, d_lin_out)
    err = jnp.max(jnp.abs(out - ref))
    # bf16 feature stream + bf16 MXU aggregation => ~1e-3..1e-2 error vs the
    # pure-f32 reference.
    assert jnp.allclose(out, ref, atol=5e-2, rtol=5e-2), \
        f"max abs err = {err}"

    print("KERNEL_OK")
</pallas_src>

<mosaic_0001>
module attributes {stable_mosaic.version = 11 : i64} {
  func.func @kernel(%arg0: i32, %arg1: i32, %arg2: memref<128x16xf32, #tpu.memory_space<vmem>>, %arg3: memref<256x32xbf16, #tpu.memory_space<vmem>>, %arg4: memref<4x256xf32, #tpu.memory_space<vmem>>, %arg5: memref<128x4xf32, #tpu.memory_space<vmem>>, %arg6: memref<128x256xi8, #tpu.memory_space<vmem>>, %arg7: memref<16x32xf32, #tpu.memory_space<vmem>>, %arg8: memref<1x32xf32, #tpu.memory_space<vmem>>, %arg9: memref<128x32xf32, #tpu.memory_space<vmem>>, %arg10: memref<4x128x1xf32, #tpu.memory_space<vmem>>, %arg11: memref<4x128x1xf32, #tpu.memory_space<vmem>>, %arg12: memref<128x32xf32, #tpu.memory_space<vmem>>) attributes {dimension_semantics = [#tpu.dimension_semantics<parallel>, #tpu.dimension_semantics<arbitrary>], iteration_bounds = array<i64: 2, 1>, scalar_prefetch = 0 : i64, scratch_operands = 3 : i64, tpu.core_type = #tpu.core_type<tc>, window_params = [{transform_indices = @transform_0, window_bounds = array<i64: 128, 16>}, {transform_indices = @transform_1, window_bounds = array<i64: 256, 32>}, {transform_indices = @transform_2, window_bounds = array<i64: 4, 256>}, {transform_indices = @transform_3, window_bounds = array<i64: 128, 4>}, {transform_indices = @transform_4, window_bounds = array<i64: 128, 256>}, {pipeline_mode = #tpu.pipeline_mode<synchronous>, transform_indices = @transform_5, window_bounds = array<i64: 16, 32>}, {pipeline_mode = #tpu.pipeline_mode<synchronous>, transform_indices = @transform_6, window_bounds = array<i64: 1, 32>}, {transform_indices = @transform_7, window_bounds = array<i64: 128, 32>}]} {
    %c0_i32 = arith.constant 0 : i32
    %0 = arith.cmpi eq, %arg1, %c0_i32 : i32
    %1 = arith.extui %0 : i1 to i32
    %c0_i32_0 = arith.constant 0 : i32
    %2 = arith.cmpi ne, %1, %c0_i32_0 : i32
    scf.if %2 {
      %cst_99 = arith.constant 0.000000e+00 : f32
      %170 = vector.broadcast %cst_99 : f32 to vector<4x128x1xf32>
      %c0_100 = arith.constant 0 : index
      %c0_101 = arith.constant 0 : index
      %c0_102 = arith.constant 0 : index
      %171 = vector.load %arg10[%c0_100, %c0_101, %c0_102] : memref<4x128x1xf32, #tpu.memory_space<vmem>>, vector<4x128x1xf32>
      tpu.vector_store %arg10[%c0_100, %c0_101, %c0_102], %170 {strides = array<i32>} : memref<4x128x1xf32, #tpu.memory_space<vmem>>, vector<4x128x1xf32>,
      %cst_103 = arith.constant 0.000000e+00 : f32
      %172 = vector.broadcast %cst_103 : f32 to vector<4x128x1xf32>
      %c0_104 = arith.constant 0 : index
      %c0_105 = arith.constant 0 : index
      %c0_106 = arith.constant 0 : index
      %173 = vector.load %arg11[%c0_104, %c0_105, %c0_106] : memref<4x128x1xf32, #tpu.memory_space<vmem>>, vector<4x128x1xf32>
      tpu.vector_store %arg11[%c0_104, %c0_105, %c0_106], %172 {strides = array<i32>} : memref<4x128x1xf32, #tpu.memory_space<vmem>>, vector<4x128x1xf32>,
      %cst_107 = arith.constant 0.000000e+00 : f32
      %174 = vector.broadcast %cst_107 : f32 to vector<128x32xf32>
      %c0_108 = arith.constant 0 : index
      %c0_109 = arith.constant 0 : index
      %175 = vector.load %arg12[%c0_108, %c0_109] : memref<128x32xf32, #tpu.memory_space<vmem>>, vector<128x32xf32>
      tpu.vector_store %arg12[%c0_108, %c0_109], %174 {strides = array<i32>} : memref<128x32xf32, #tpu.memory_space<vmem>>, vector<128x32xf32>,
    } else {
    }
    %c0 = arith.constant 0 : index
    %c0_1 = arith.constant 0 : index
    %3 = vector.load %arg6[%c0, %c0_1] : memref<128x256xi8, #tpu.memory_space<vmem>>, vector<128x256xi8>
    %c0_i8 = arith.constant 0 : i8
    %4 = vector.broadcast %c0_i8 : i8 to vector<128x256xi8>
    %5 = arith.cmpi ne, %3, %4 : vector<128x256xi8>
    %c0_2 = arith.constant 0 : index
    %c0_3 = arith.constant 0 : index
    %6 = vector.load %arg3[%c0_2, %c0_3] : memref<256x32xbf16, #tpu.memory_space<vmem>>, vector<256x32xbf16>
    %c0_4 = arith.constant 0 : index
    %c0_5 = arith.constant 0 : index
    %7 = vector.load %arg4[%c0_4, %c0_5] : memref<4x256xf32, #tpu.memory_space<vmem>>, vector<1x256xf32>
    %c0_6 = arith.constant 0 : index
    %c0_7 = arith.constant 0 : index
    %8 = vector.load %arg5[%c0_6, %c0_7] : memref<128x4xf32, #tpu.memory_space<vmem>>, vector<128x1xf32>
    %9 = vector.broadcast %8 : vector<128x1xf32> to vector<128x256xf32>
    %10 = vector.broadcast %7 : vector<1x256xf32> to vector<128x256xf32>
    %11 = arith.addf %9, %10 : vector<128x256xf32>
    %cst = arith.constant 2.000000e-01 : f32
    %12 = vector.broadcast %cst : f32 to vector<128x256xf32>
    %13 = arith.mulf %12, %11 : vector<128x256xf32>
    %14 = arith.maximumf %11, %13 : vector<128x256xf32>
    %cst_8 = arith.constant -1.000000e+30 : f32
    %15 = vector.broadcast %cst_8 : f32 to vector<128x256xf32>
    %16 = arith.select %5, %14, %15 : vector<128x256xi1>, vector<128x256xf32>
    %c0_9 = arith.constant 0 : index
    %c0_10 = arith.constant 0 : index
    %c0_11 = arith.constant 0 : index
    %17 = vector.load %arg10[%c0_9, %c0_10, %c0_11] : memref<4x128x1xf32, #tpu.memory_space<vmem>>, vector<1x128x1xf32>
    %18 = vector.shape_cast %17 : vector<1x128x1xf32> to vector<128x1xf32>
    %cst_12 = arith.constant dense<0xFF800000> : vector<128xf32>
    %19 = vector.multi_reduction <maximumf>, %16, %cst_12 [1] : vector<128x256xf32> to vector<128xf32>
    %20 = vector.shape_cast %19 : vector<128xf32> to vector<128x1xf32>
    %21 = arith.maximumf %18, %20 : vector<128x1xf32>
    %22 = arith.subf %18, %21 : vector<128x1xf32>
    %23 = math.exp %22 : vector<128x1xf32>
    %24 = vector.broadcast %21 : vector<128x1xf32> to vector<128x256xf32>
    %25 = arith.subf %16, %24 : vector<128x256xf32>
    %26 = math.exp %25 : vector<128x256xf32>
    %c0_13 = arith.constant 0 : index
    %c0_14 = arith.constant 0 : index
    %c0_15 = arith.constant 0 : index
    %27 = vector.load %arg11[%c0_13, %c0_14, %c0_15] : memref<4x128x1xf32, #tpu.memory_space<vmem>>, vector<1x128x1xf32>
    %28 = vector.shape_cast %27 : vector<1x128x1xf32> to vector<128x1xf32>
    %29 = arith.mulf %23, %28 : vector<128x1xf32>
    %cst_16 = arith.constant dense<0.000000e+00> : vector<128xf32>
    %30 = vector.multi_reduction <add>, %26, %cst_16 [1] : vector<128x256xf32> to vector<128xf32>
    %31 = vector.shape_cast %30 : vector<128xf32> to vector<128x1xf32>
    %32 = arith.addf %29, %31 : vector<128x1xf32>
    %c0_17 = arith.constant 0 : index
    %c0_18 = arith.constant 0 : index
    %c0_19 = arith.constant 0 : index
    %33 = vector.load %arg11[%c0_17, %c0_18, %c0_19] : memref<4x128x1xf32, #tpu.memory_space<vmem>>, vector<1x128x1xf32>
    %34 = vector.shape_cast %33 : vector<1x128x1xf32> to vector<128x1xf32>
    %35 = vector.shape_cast %32 : vector<128x1xf32> to vector<1x128x1xf32>
    tpu.vector_store %arg11[%c0_17, %c0_18, %c0_19], %35 {strides = array<i32>} : memref<4x128x1xf32, #tpu.memory_space<vmem>>, vector<1x128x1xf32>,
    %c0_20 = arith.constant 0 : index
    %c0_21 = arith.constant 0 : index
    %36 = vector.load %arg12[%c0_20, %c0_21] : memref<128x32xf32, #tpu.memory_space<vmem>>, vector<128x8xf32>
    %37 = vector.broadcast %23 : vector<128x1xf32> to vector<128x8xf32>
    %38 = arith.mulf %37, %36 : vector<128x8xf32>
    %39 = arith.truncf %26 : vector<128x256xf32> to vector<128x256xbf16>
    %40 = vector.extract_strided_slice %6 {offsets = [0, 0], sizes = [256, 8], strides = [1, 1]} : vector<256x32xbf16> to vector<256x8xbf16>
    %cst_22 = arith.constant dense<0.000000e+00> : vector<128x8xf32>
    %41 = tpu.matmul %39, %40, %cst_22 {dimension_numbers = #tpu.dot_dimension_numbers<[1], [0], [0], [1], [0, 0, 1, 1], [], []>} : vector<128x256xbf16>, vector<256x8xbf16>, vector<128x8xf32> -> vector<128x8xf32>
    %42 = arith.addf %38, %41 : vector<128x8xf32>
    %c0_23 = arith.constant 0 : index
    %c0_24 = arith.constant 0 : index
    %43 = vector.load %arg12[%c0_23, %c0_24] : memref<128x32xf32, #tpu.memory_space<vmem>>, vector<128x8xf32>
    tpu.vector_store %arg12[%c0_23, %c0_24], %42 {strides = array<i32>} : memref<128x32xf32, #tpu.memory_space<vmem>>, vector<128x8xf32>,
    %c0_25 = arith.constant 0 : index
    %c0_26 = arith.constant 0 : index
    %c0_27 = arith.constant 0 : index
    %44 = vector.load %arg10[%c0_25, %c0_26, %c0_27] : memref<4x128x1xf32, #tpu.memory_space<vmem>>, vector<1x128x1xf32>
    %45 = vector.shape_cast %44 : vector<1x128x1xf32> to vector<128x1xf32>
    %46 = vector.shape_cast %21 : vector<128x1xf32> to vector<1x128x1xf32>
    tpu.vector_store %arg10[%c0_25, %c0_26, %c0_27], %46 {strides = array<i32>} : memref<4x128x1xf32, #tpu.memory_space<vmem>>, vector<1x128x1xf32>,
    %c1 = arith.constant 1 : index
    %c0_28 = arith.constant 0 : index
    %47 = vector.load %arg4[%c1, %c0_28] : memref<4x256xf32, #tpu.memory_space<vmem>>, vector<1x256xf32>
    %c0_29 = arith.constant 0 : index
    %c1_30 = arith.constant 1 : index
    %48 = vector.load %arg5[%c0_29, %c1_30] : memref<128x4xf32, #tpu.memory_space<vmem>>, vector<128x1xf32>
    %49 = vector.broadcast %48 : vector<128x1xf32> to vector<128x256xf32>
    %50 = vector.broadcast %47 : vector<1x256xf32> to vector<128x256xf32>
    %51 = arith.addf %49, %50 : vector<128x256xf32>
    %cst_31 = arith.constant 2.000000e-01 : f32
    %52 = vector.broadcast %cst_31 : f32 to vector<128x256xf32>
    %53 = arith.mulf %52, %51 : vector<128x256xf32>
    %54 = arith.maximumf %51, %53 : vector<128x256xf32>
    %cst_32 = arith.constant -1.000000e+30 : f32
    %55 = vector.broadcast %cst_32 : f32 to vector<128x256xf32>
    %56 = arith.select %5, %54, %55 : vector<128x256xi1>, vector<128x256xf32>
    %c1_33 = arith.constant 1 : index
    %c0_34 = arith.constant 0 : index
    %c0_35 = arith.constant 0 : index
    %57 = vector.load %arg10[%c1_33, %c0_34, %c0_35] : memref<4x128x1xf32, #tpu.memory_space<vmem>>, vector<1x128x1xf32>
    %58 = vector.shape_cast %57 : vector<1x128x1xf32> to vector<128x1xf32>
    %cst_36 = arith.constant dense<0xFF800000> : vector<128xf32>
    %59 = vector.multi_reduction <maximumf>, %56, %cst_36 [1] : vector<128x256xf32> to vector<128xf32>
    %60 = vector.shape_cast %59 : vector<128xf32> to vector<128x1xf32>
    %61 = arith.maximumf %58, %60 : vector<128x1xf32>
    %62 = arith.subf %58, %61 : vector<128x1xf32>
    %63 = math.exp %62 : vector<128x1xf32>
    %64 = vector.broadcast %61 : vector<128x1xf32> to vector<128x256xf32>
    %65 = arith.subf %56, %64 : vector<128x256xf32>
    %66 = math.exp %65 : vector<128x256xf32>
    %c1_37 = arith.constant 1 : index
    %c0_38 = arith.constant 0 : index
    %c0_39 = arith.constant 0 : index
    %67 = vector.load %arg11[%c1_37, %c0_38, %c0_39] : memref<4x128x1xf32, #tpu.memory_space<vmem>>, vector<1x128x1xf32>
    %68 = vector.shape_cast %67 : vector<1x128x1xf32> to vector<128x1xf32>
    %69 = arith.mulf %63, %68 : vector<128x1xf32>
    %cst_40 = arith.constant dense<0.000000e+00> : vector<128xf32>
    %70 = vector.multi_reduction <add>, %66, %cst_40 [1] : vector<128x256xf32> to vector<128xf32>
    %71 = vector.shape_cast %70 : vector<128xf32> to vector<128x1xf32>
    %72 = arith.addf %69, %71 : vector<128x1xf32>
    %c1_41 = arith.constant 1 : index
    %c0_42 = arith.constant 0 : index
    %c0_43 = arith.constant 0 : index
    %73 = vector.load %arg11[%c1_41, %c0_42, %c0_43] : memref<4x128x1xf32, #tpu.memory_space<vmem>>, vector<1x128x1xf32>
    %74 = vector.shape_cast %73 : vector<1x128x1xf32> to vector<128x1xf32>
    %75 = vector.shape_cast %72 : vector<128x1xf32> to vector<1x128x1xf32>
    tpu.vector_store %arg11[%c1_41, %c0_42, %c0_43], %75 {strides = array<i32>} : memref<4x128x1xf32, #tpu.memory_space<vmem>>, vector<1x128x1xf32>,
    %c0_44 = arith.constant 0 : index
    %c8 = arith.constant 8 : index
    %76 = vector.load %arg12[%c0_44, %c8] : memref<128x32xf32, #tpu.memory_space<vmem>>, vector<128x8xf32>
    %77 = vector.broadcast %63 : vector<128x1xf32> to vector<128x8xf32>
    %78 = arith.mulf %77, %76 : vector<128x8xf32>
    %79 = arith.truncf %66 : vector<128x256xf32> to vector<128x256xbf16>
    %80 = vector.extract_strided_slice %6 {offsets = [0, 8], sizes = [256, 8], strides = [1, 1]} : vector<256x32xbf16> to vector<256x8xbf16>
    %cst_45 = arith.constant dense<0.000000e+00> : vector<128x8xf32>
    %81 = tpu.matmul %79, %80, %cst_45 {dimension_numbers = #tpu.dot_dimension_numbers<[1], [0], [0], [1], [0, 0, 1, 1], [], []>} : vector<128x256xbf16>, vector<256x8xbf16>, vector<128x8xf32> -> vector<128x8xf32>
    %82 = arith.addf %78, %81 : vector<128x8xf32>
    %c0_46 = arith.constant 0 : index
    %c8_47 = arith.constant 8 : index
    %83 = vector.load %arg12[%c0_46, %c8_47] : memref<128x32xf32, #tpu.memory_space<vmem>>, vector<128x8xf32>
    tpu.vector_store %arg12[%c0_46, %c8_47], %82 {strides = array<i32>} : memref<128x32xf32, #tpu.memory_space<vmem>>, vector<128x8xf32>,
    %c1_48 = arith.constant 1 : index
    %c0_49 = arith.constant 0 : index
    %c0_50 = arith.constant 0 : index
    %84 = vector.load %arg10[%c1_48, %c0_49, %c0_50] : memref<4x128x1xf32, #tpu.memory_space<vmem>>, vector<1x128x1xf32>
    %85 = vector.shape_cast %84 : vector<1x128x1xf32> to vector<128x1xf32>
    %86 = vector.shape_cast %61 : vector<128x1xf32> to vector<1x128x1xf32>
    tpu.vector_store %arg10[%c1_48, %c0_49, %c0_50], %86 {strides = array<i32>} : memref<4x128x1xf32, #tpu.memory_space<vmem>>, vector<1x128x1xf32>,
    %c2 = arith.constant 2 : index
    %c0_51 = arith.constant 0 : index
    %87 = vector.load %arg4[%c2, %c0_51] : memref<4x256xf32, #tpu.memory_space<vmem>>, vector<1x256xf32>
    %c0_52 = arith.constant 0 : index
    %c2_53 = arith.constant 2 : index
    %88 = vector.load %arg5[%c0_52, %c2_53] : memref<128x4xf32, #tpu.memory_space<vmem>>, vector<128x1xf32>
    %89 = vector.broadcast %88 : vector<128x1xf32> to vector<128x256xf32>
    %90 = vector.broadcast %87 : vector<1x256xf32> to vector<128x256xf32>
    %91 = arith.addf %89, %90 : vector<128x256xf32>
    %cst_54 = arith.constant 2.000000e-01 : f32
    %92 = vector.broadcast %cst_54 : f32 to vector<128x256xf32>
    %93 = arith.mulf %92, %91 : vector<128x256xf32>
    %94 = arith.maximumf %91, %93 : vector<128x256xf32>
    %cst_55 = arith.constant -1.000000e+30 : f32
    %95 = vector.broadcast %cst_55 : f32 to vector<128x256xf32>
    %96 = arith.select %5, %94, %95 : vector<128x256xi1>, vector<128x256xf32>
    %c2_56 = arith.constant 2 : index
    %c0_57 = arith.constant 0 : index
    %c0_58 = arith.constant 0 : index
    %97 = vector.load %arg10[%c2_56, %c0_57, %c0_58] : memref<4x128x1xf32, #tpu.memory_space<vmem>>, vector<1x128x1xf32>
    %98 = vector.shape_cast %97 : vector<1x128x1xf32> to vector<128x1xf32>
    %cst_59 = arith.constant dense<0xFF800000> : vector<128xf32>
    %99 = vector.multi_reduction <maximumf>, %96, %cst_59 [1] : vector<128x256xf32> to vector<128xf32>
    %100 = vector.shape_cast %99 : vector<128xf32> to vector<128x1xf32>
    %101 = arith.maximumf %98, %100 : vector<128x1xf32>
    %102 = arith.subf %98, %101 : vector<128x1xf32>
    %103 = math.exp %102 : vector<128x1xf32>
    %104 = vector.broadcast %101 : vector<128x1xf32> to vector<128x256xf32>
    %105 = arith.subf %96, %104 : vector<128x256xf32>
    %106 = math.exp %105 : vector<128x256xf32>
    %c2_60 = arith.constant 2 : index
    %c0_61 = arith.constant 0 : index
    %c0_62 = arith.constant 0 : index
    %107 = vector.load %arg11[%c2_60, %c0_61, %c0_62] : memref<4x128x1xf32, #tpu.memory_space<vmem>>, vector<1x128x1xf32>
    %108 = vector.shape_cast %107 : vector<1x128x1xf32> to vector<128x1xf32>
    %109 = arith.mulf %103, %108 : vector<128x1xf32>
    %cst_63 = arith.constant dense<0.000000e+00> : vector<128xf32>
    %110 = vector.multi_reduction <add>, %106, %cst_63 [1] : vector<128x256xf32> to vector<128xf32>
    %111 = vector.shape_cast %110 : vector<128xf32> to vector<128x1xf32>
    %112 = arith.addf %109, %111 : vector<128x1xf32>
    %c2_64 = arith.constant 2 : index
    %c0_65 = arith.constant 0 : index
    %c0_66 = arith.constant 0 : index
    %113 = vector.load %arg11[%c2_64, %c0_65, %c0_66] : memref<4x128x1xf32, #tpu.memory_space<vmem>>, vector<1x128x1xf32>
    %114 = vector.shape_cast %113 : vector<1x128x1xf32> to vector<128x1xf32>
    %115 = vector.shape_cast %112 : vector<128x1xf32> to vector<1x128x1xf32>
    tpu.vector_store %arg11[%c2_64, %c0_65, %c0_66], %115 {strides = array<i32>} : memref<4x128x1xf32, #tpu.memory_space<vmem>>, vector<1x128x1xf32>,
    %c0_67 = arith.constant 0 : index
    %c16 = arith.constant 16 : index
    %116 = vector.load %arg12[%c0_67, %c16] : memref<128x32xf32, #tpu.memory_space<vmem>>, vector<128x8xf32>
    %117 = vector.broadcast %103 : vector<128x1xf32> to vector<128x8xf32>
    %118 = arith.mulf %117, %116 : vector<128x8xf32>
    %119 = arith.truncf %106 : vector<128x256xf32> to vector<128x256xbf16>
    %120 = vector.extract_strided_slice %6 {offsets = [0, 16], sizes = [256, 8], strides = [1, 1]} : vector<256x32xbf16> to vector<256x8xbf16>
    %cst_68 = arith.constant dense<0.000000e+00> : vector<128x8xf32>
    %121 = tpu.matmul %119, %120, %cst_68 {dimension_numbers = #tpu.dot_dimension_numbers<[1], [0], [0], [1], [0, 0, 1, 1], [], []>} : vector<128x256xbf16>, vector<256x8xbf16>, vector<128x8xf32> -> vector<128x8xf32>
    %122 = arith.addf %118, %121 : vector<128x8xf32>
    %c0_69 = arith.constant 0 : index
    %c16_70 = arith.constant 16 : index
    %123 = vector.load %arg12[%c0_69, %c16_70] : memref<128x32xf32, #tpu.memory_space<vmem>>, vector<128x8xf32>
    tpu.vector_store %arg12[%c0_69, %c16_70], %122 {strides = array<i32>} : memref<128x32xf32, #tpu.memory_space<vmem>>, vector<128x8xf32>,
    %c2_71 = arith.constant 2 : index
    %c0_72 = arith.constant 0 : index
    %c0_73 = arith.constant 0 : index
    %124 = vector.load %arg10[%c2_71, %c0_72, %c0_73] : memref<4x128x1xf32, #tpu.memory_space<vmem>>, vector<1x128x1xf32>
    %125 = vector.shape_cast %124 : vector<1x128x1xf32> to vector<128x1xf32>
    %126 = vector.shape_cast %101 : vector<128x1xf32> to vector<1x128x1xf32>
    tpu.vector_store %arg10[%c2_71, %c0_72, %c0_73], %126 {strides = array<i32>} : memref<4x128x1xf32, #tpu.memory_space<vmem>>, vector<1x128x1xf32>,
    %c3 = arith.constant 3 : index
    %c0_74 = arith.constant 0 : index
    %127 = vector.load %arg4[%c3, %c0_74] : memref<4x256xf32, #tpu.memory_space<vmem>>, vector<1x256xf32>
    %c0_75 = arith.constant 0 : index
    %c3_76 = arith.constant 3 : index
    %128 = vector.load %arg5[%c0_75, %c3_76] : memref<128x4xf32, #tpu.memory_space<vmem>>, vector<128x1xf32>
    %129 = vector.broadcast %128 : vector<128x1xf32> to vector<128x256xf32>
    %130 = vector.broadcast %127 : vector<1x256xf32> to vector<128x256xf32>
    %131 = arith.addf %129, %130 : vector<128x256xf32>
    %cst_77 = arith.constant 2.000000e-01 : f32
    %132 = vector.broadcast %cst_77 : f32 to vector<128x256xf32>
    %133 = arith.mulf %132, %131 : vector<128x256xf32>
    %134 = arith.maximumf %131, %133 : vector<128x256xf32>
    %cst_78 = arith.constant -1.000000e+30 : f32
    %135 = vector.broadcast %cst_78 : f32 to vector<128x256xf32>
    %136 = arith.select %5, %134, %135 : vector<128x256xi1>, vector<128x256xf32>
    %c3_79 = arith.constant 3 : index
    %c0_80 = arith.constant 0 : index
    %c0_81 = arith.constant 0 : index
    %137 = vector.load %arg10[%c3_79, %c0_80, %c0_81] : memref<4x128x1xf32, #tpu.memory_space<vmem>>, vector<1x128x1xf32>
    %138 = vector.shape_cast %137 : vector<1x128x1xf32> to vector<128x1xf32>
    %cst_82 = arith.constant dense<0xFF800000> : vector<128xf32>
    %139 = vector.multi_reduction <maximumf>, %136, %cst_82 [1] : vector<128x256xf32> to vector<128xf32>
    %140 = vector.shape_cast %139 : vector<128xf32> to vector<128x1xf32>
    %141 = arith.maximumf %138, %140 : vector<128x1xf32>
    %142 = arith.subf %138, %141 : vector<128x1xf32>
    %143 = math.exp %142 : vector<128x1xf32>
    %144 = vector.broadcast %141 : vector<128x1xf32> to vector<128x256xf32>
    %145 = arith.subf %136, %144 : vector<128x256xf32>
    %146 = math.exp %145 : vector<128x256xf32>
    %c3_83 = arith.constant 3 : index
    %c0_84 = arith.constant 0 : index
    %c0_85 = arith.constant 0 : index
    %147 = vector.load %arg11[%c3_83, %c0_84, %c0_85] : memref<4x128x1xf32, #tpu.memory_space<vmem>>, vector<1x128x1xf32>
    %148 = vector.shape_cast %147 : vector<1x128x1xf32> to vector<128x1xf32>
    %149 = arith.mulf %143, %148 : vector<128x1xf32>
    %cst_86 = arith.constant dense<0.000000e+00> : vector<128xf32>
    %150 = vector.multi_reduction <add>, %146, %cst_86 [1] : vector<128x256xf32> to vector<128xf32>
    %151 = vector.shape_cast %150 : vector<128xf32> to vector<128x1xf32>
    %152 = arith.addf %149, %151 : vector<128x1xf32>
    %c3_87 = arith.constant 3 : index
    %c0_88 = arith.constant 0 : index
    %c0_89 = arith.constant 0 : index
    %153 = vector.load %arg11[%c3_87, %c0_88, %c0_89] : memref<4x128x1xf32, #tpu.memory_space<vmem>>, vector<1x128x1xf32>
    %154 = vector.shape_cast %153 : vector<1x128x1xf32> to vector<128x1xf32>
    %155 = vector.shape_cast %152 : vector<128x1xf32> to vector<1x128x1xf32>
    tpu.vector_store %arg11[%c3_87, %c0_88, %c0_89], %155 {strides = array<i32>} : memref<4x128x1xf32, #tpu.memory_space<vmem>>, vector<1x128x1xf32>,
    %c0_90 = arith.constant 0 : index
    %c24 = arith.constant 24 : index
    %156 = vector.load %arg12[%c0_90, %c24] : memref<128x32xf32, #tpu.memory_space<vmem>>, vector<128x8xf32>
    %157 = vector.broadcast %143 : vector<128x1xf32> to vector<128x8xf32>
    %158 = arith.mulf %157, %156 : vector<128x8xf32>
    %159 = arith.truncf %146 : vector<128x256xf32> to vector<128x256xbf16>
    %160 = vector.extract_strided_slice %6 {offsets = [0, 24], sizes = [256, 8], strides = [1, 1]} : vector<256x32xbf16> to vector<256x8xbf16>
    %cst_91 = arith.constant dense<0.000000e+00> : vector<128x8xf32>
    %161 = tpu.matmul %159, %160, %cst_91 {dimension_numbers = #tpu.dot_dimension_numbers<[1], [0], [0], [1], [0, 0, 1, 1], [], []>} : vector<128x256xbf16>, vector<256x8xbf16>, vector<128x8xf32> -> vector<128x8xf32>
    %162 = arith.addf %158, %161 : vector<128x8xf32>
    %c0_92 = arith.constant 0 : index
    %c24_93 = arith.constant 24 : index
    %163 = vector.load %arg12[%c0_92, %c24_93] : memref<128x32xf32, #tpu.memory_space<vmem>>, vector<128x8xf32>
    tpu.vector_store %arg12[%c0_92, %c24_93], %162 {strides = array<i32>} : memref<128x32xf32, #tpu.memory_space<vmem>>, vector<128x8xf32>,
    %c3_94 = arith.constant 3 : index
    %c0_95 = arith.constant 0 : index
    %c0_96 = arith.constant 0 : index
    %164 = vector.load %arg10[%c3_94, %c0_95, %c0_96] : memref<4x128x1xf32, #tpu.memory_space<vmem>>, vector<1x128x1xf32>
    %165 = vector.shape_cast %164 : vector<1x128x1xf32> to vector<128x1xf32>
    %166 = vector.shape_cast %141 : vector<128x1xf32> to vector<1x128x1xf32>
    tpu.vector_store %arg10[%c3_94, %c0_95, %c0_96], %166 {strides = array<i32>} : memref<4x128x1xf32, #tpu.memory_space<vmem>>, vector<1x128x1xf32>,
    %c0_i32_97 = arith.constant 0 : i32
    %167 = arith.cmpi eq, %arg1, %c0_i32_97 : i32
    %168 = arith.extui %167 : i1 to i32
    %c0_i32_98 = arith.constant 0 : i32
    %169 = arith.cmpi ne, %168, %c0_i32_98 : i32
    scf.if %169 {
      %c0_99 = arith.constant 0 : index
      %c0_100 = arith.constant 0 : index
      %c0_101 = arith.constant 0 : index
      %170 = vector.load %arg11[%c0_99, %c0_100, %c0_101] : memref<4x128x1xf32, #tpu.memory_space<vmem>>, vector<1x128x1xf32>
      %171 = vector.shape_cast %170 : vector<1x128x1xf32> to vector<128x1xf32>
      %cst_102 = arith.constant 1.000000e-30 : f32
      %172 = vector.broadcast %cst_102 : f32 to vector<128x1xf32>
      %173 = arith.maximumf %171, %172 : vector<128x1xf32>
      %174 = tpu.reciprocal %173 : vector<128x1xf32> -> vector<128x1xf32>
      %c0_103 = arith.constant 0 : index
      %c0_104 = arith.constant 0 : index
      %175 = vector.load %arg12[%c0_103, %c0_104] : memref<128x32xf32, #tpu.memory_space<vmem>>, vector<128x8xf32>
      %176 = vector.broadcast %174 : vector<128x1xf32> to vector<128x8xf32>
      %177 = arith.mulf %175, %176 : vector<128x8xf32>
      %c0_105 = arith.constant 0 : index
      %c0_106 = arith.constant 0 : index
      %178 = vector.load %arg12[%c0_105, %c0_106] : memref<128x32xf32, #tpu.memory_space<vmem>>, vector<128x8xf32>
      tpu.vector_store %arg12[%c0_105, %c0_106], %177 {strides = array<i32>} : memref<128x32xf32, #tpu.memory_space<vmem>>, vector<128x8xf32>,
      %c1_107 = arith.constant 1 : index
      %c0_108 = arith.constant 0 : index
      %c0_109 = arith.constant 0 : index
      %179 = vector.load %arg11[%c1_107, %c0_108, %c0_109] : memref<4x128x1xf32, #tpu.memory_space<vmem>>, vector<1x128x1xf32>
      %180 = vector.shape_cast %179 : vector<1x128x1xf32> to vector<128x1xf32>
      %cst_110 = arith.constant 1.000000e-30 : f32
      %181 = vector.broadcast %cst_110 : f32 to vector<128x1xf32>
      %182 = arith.maximumf %180, %181 : vector<128x1xf32>
      %183 = tpu.reciprocal %182 : vector<128x1xf32> -> vector<128x1xf32>
      %c0_111 = arith.constant 0 : index
      %c8_112 = arith.constant 8 : index
      %184 = vector.load %arg12[%c0_111, %c8_112] : memref<128x32xf32, #tpu.memory_space<vmem>>, vector<128x8xf32>
      %185 = vector.broadcast %183 : vector<128x1xf32> to vector<128x8xf32>
      %186 = arith.mulf %184, %185 : vector<128x8xf32>
      %c0_113 = arith.constant 0 : index
      %c8_114 = arith.constant 8 : index
      %187 = vector.load %arg12[%c0_113, %c8_114] : memref<128x32xf32, #tpu.memory_space<vmem>>, vector<128x8xf32>
      tpu.vector_store %arg12[%c0_113, %c8_114], %186 {strides = array<i32>} : memref<128x32xf32, #tpu.memory_space<vmem>>, vector<128x8xf32>,
      %c2_115 = arith.constant 2 : index
      %c0_116 = arith.constant 0 : index
      %c0_117 = arith.constant 0 : index
      %188 = vector.load %arg11[%c2_115, %c0_116, %c0_117] : memref<4x128x1xf32, #tpu.memory_space<vmem>>, vector<1x128x1xf32>
      %189 = vector.shape_cast %188 : vector<1x128x1xf32> to vector<128x1xf32>
      %cst_118 = arith.constant 1.000000e-30 : f32
      %190 = vector.broadcast %cst_118 : f32 to vector<128x1xf32>
      %191 = arith.maximumf %189, %190 : vector<128x1xf32>
      %192 = tpu.reciprocal %191 : vector<128x1xf32> -> vector<128x1xf32>
      %c0_119 = arith.constant 0 : index
      %c16_120 = arith.constant 16 : index
      %193 = vector.load %arg12[%c0_119, %c16_120] : memref<128x32xf32, #tpu.memory_space<vmem>>, vector<128x8xf32>
      %194 = vector.broadcast %192 : vector<128x1xf32> to vector<128x8xf32>
      %195 = arith.mulf %193, %194 : vector<128x8xf32>
      %c0_121 = arith.constant 0 : index
      %c16_122 = arith.constant 16 : index
      %196 = vector.load %arg12[%c0_121, %c16_122] : memref<128x32xf32, #tpu.memory_space<vmem>>, vector<128x8xf32>
      tpu.vector_store %arg12[%c0_121, %c16_122], %195 {strides = array<i32>} : memref<128x32xf32, #tpu.memory_space<vmem>>, vector<128x8xf32>,
      %c3_123 = arith.constant 3 : index
      %c0_124 = arith.constant 0 : index
      %c0_125 = arith.constant 0 : index
      %197 = vector.load %arg11[%c3_123, %c0_124, %c0_125] : memref<4x128x1xf32, #tpu.memory_space<vmem>>, vector<1x128x1xf32>
      %198 = vector.shape_cast %197 : vector<1x128x1xf32> to vector<128x1xf32>
      %cst_126 = arith.constant 1.000000e-30 : f32
      %199 = vector.broadcast %cst_126 : f32 to vector<128x1xf32>
      %200 = arith.maximumf %198, %199 : vector<128x1xf32>
      %201 = tpu.reciprocal %200 : vector<128x1xf32> -> vector<128x1xf32>
      %c0_127 = arith.constant 0 : index
      %c24_128 = arith.constant 24 : index
      %202 = vector.load %arg12[%c0_127, %c24_128] : memref<128x32xf32, #tpu.memory_space<vmem>>, vector<128x8xf32>
      %203 = vector.broadcast %201 : vector<128x1xf32> to vector<128x8xf32>
      %204 = arith.mulf %202, %203 : vector<128x8xf32>
      %c0_129 = arith.constant 0 : index
      %c24_130 = arith.constant 24 : index
      %205 = vector.load %arg12[%c0_129, %c24_130] : memref<128x32xf32, #tpu.memory_space<vmem>>, vector<128x8xf32>
      tpu.vector_store %arg12[%c0_129, %c24_130], %204 {strides = array<i32>} : memref<128x32xf32, #tpu.memory_space<vmem>>, vector<128x8xf32>,
      %c0_131 = arith.constant 0 : index
      %c0_132 = arith.constant 0 : index
      %206 = vector.load %arg12[%c0_131, %c0_132] : memref<128x32xf32, #tpu.memory_space<vmem>>, vector<128x32xf32>
      %c0_133 = arith.constant 0 : index
      %c0_134 = arith.constant 0 : index
      %207 = vector.load %arg2[%c0_133, %c0_134] : memref<128x16xf32, #tpu.memory_space<vmem>>, vector<128x16xf32>
      %c0_135 = arith.constant 0 : index
      %c0_136 = arith.constant 0 : index
      %208 = vector.load %arg7[%c0_135, %c0_136] : memref<16x32xf32, #tpu.memory_space<vmem>>, vector<16x32xf32>
      %cst_137 = arith.constant dense<0.000000e+00> : vector<128x32xf32>
      %209 = tpu.matmul %207, %208, %cst_137 {dimension_numbers = #tpu.dot_dimension_numbers<[1], [0], [0], [1], [0, 0, 1, 1], [], []>} : vector<128x16xf32>, vector<16x32xf32>, vector<128x32xf32> -> vector<128x32xf32>
      %210 = arith.addf %206, %209 : vector<128x32xf32>
      %cst_138 = arith.constant 0.999994993 : f32
      %211 = vector.broadcast %cst_138 : f32 to vector<128x32xf32>
      %212 = arith.mulf %210, %211 : vector<128x32xf32>
      %cst_139 = arith.constant 0.000000e+00 : f32
      %213 = vector.broadcast %cst_139 : f32 to vector<128x32xf32>
      %214 = arith.maximumf %212, %213 : vector<128x32xf32>
      %c0_140 = arith.constant 0 : index
      %c0_141 = arith.constant 0 : index
      %215 = vector.load %arg8[%c0_140, %c0_141] : memref<1x32xf32, #tpu.memory_space<vmem>>, vector<1x32xf32>
      %216 = vector.broadcast %215 : vector<1x32xf32> to vector<128x32xf32>
      %217 = arith.addf %214, %216 : vector<128x32xf32>
      %c0_142 = arith.constant 0 : index
      %c0_143 = arith.constant 0 : index
      %218 = vector.load %arg9[%c0_142, %c0_143] : memref<128x32xf32, #tpu.memory_space<vmem>>, vector<128x32xf32>
      tpu.vector_store %arg9[%c0_142, %c0_143], %217 {strides = array<i32>} : memref<128x32xf32, #tpu.memory_space<vmem>>, vector<128x32xf32>,
    } else {
    }
    return
  }
  func.func @transform_0(%arg0: i32, %arg1: i32) -> (i32, i32) {
    %c0_i32 = arith.constant 0 : i32
    %c0_i32_0 = arith.constant 0 : i32
    return %arg0, %c0_i32 : i32, i32
  }
  func.func @transform_1(%arg0: i32, %arg1: i32) -> (i32, i32) {
    %c0_i32 = arith.constant 0 : i32
    %c0_i32_0 = arith.constant 0 : i32
    return %arg1, %c0_i32 : i32, i32
  }
  func.func @transform_2(%arg0: i32, %arg1: i32) -> (i32, i32) {
    %c0_i32 = arith.constant 0 : i32
    %c0_i32_0 = arith.constant 0 : i32
    return %c0_i32, %arg1 : i32, i32
  }
  func.func @transform_3(%arg0: i32, %arg1: i32) -> (i32, i32) {
    %c0_i32 = arith.constant 0 : i32
    %c0_i32_0 = arith.constant 0 : i32
    return %arg0, %c0_i32 : i32, i32
  }
  func.func @transform_4(%arg0: i32, %arg1: i32) -> (i32, i32) {
    %c0_i32 = arith.constant 0 : i32
    return %arg0, %arg1 : i32, i32
  }
  func.func @transform_5(%arg0: i32, %arg1: i32) -> (i32, i32) {
    %c0_i32 = arith.constant 0 : i32
    %c0_i32_0 = arith.constant 0 : i32
    %c0_i32_1 = arith.constant 0 : i32
    return %c0_i32, %c0_i32_0 : i32, i32
  }
  func.func @transform_6(%arg0: i32, %arg1: i32) -> (i32, i32) {
    %c0_i32 = arith.constant 0 : i32
    %c0_i32_0 = arith.constant 0 : i32
    %c0_i32_1 = arith.constant 0 : i32
    return %c0_i32, %c0_i32_0 : i32, i32
  }
  func.func @transform_7(%arg0: i32, %arg1: i32) -> (i32, i32) {
    %c0_i32 = arith.constant 0 : i32
    %c0_i32_0 = arith.constant 0 : i32
    return %arg0, %c0_i32 : i32, i32
  }
}

</mosaic_0001>

<llo_original>
// kernel: tpu_custom_call.1
$region0: #{tpu_custom_call.1}
  #allocation0 [shape = 'u32[]', space=smem, size = 0x4, offset = 0x4, fixed_abs, tag = 'smem constant byte address 0x4 - core index']
  #allocation1 [shape = 'u32[144,128]{1,0:T(1,128)}', space=vmem, size = 0x12000, scoped, tag = 'internal scratch']
  #allocation2 [shape = 'f32[4,128,1]{2,1,0:T(8,128)}', space=vmem, size = 0x40000, scoped, tag = 'scratch operand']
  #allocation3 [shape = 'f32[4,128,1]{2,1,0:T(8,128)}', space=vmem, size = 0x40000, scoped, tag = 'scratch operand']
  #allocation4 [shape = 'f32[128,32]{1,0:T(8,128)}', space=vmem, size = 0x10000, scoped, tag = 'scratch operand']
  %s0 = inlined_call_operand.vmem [shape: f32[256,16], index: 0, kind: input, shape index: {}]
  %s1 = inlined_call_operand.vmem [shape: bf16[256,32], index: 1, kind: input, shape index: {}]
  %s2 = inlined_call_operand.vmem [shape: f32[4,256], index: 2, kind: input, shape index: {}]
  %s3 = inlined_call_operand.vmem [shape: f32[256,4], index: 3, kind: input, shape index: {}]
  %s4 = inlined_call_operand.vmem [shape: s8[256,256], index: 4, kind: input, shape index: {}]
  %s5 = inlined_call_operand.vmem [shape: f32[16,32], index: 5, kind: input, shape index: {}]
  %s6 = inlined_call_operand.vmem [shape: f32[1,32], index: 6, kind: input, shape index: {}]
  %s7 = inlined_call_operand.vmem [shape: f32[256,32], index: 7, kind: output, shape index: {}]
  %s8 = sld [smem:[#allocation0]]
  $region69: #{tpu_custom_call.1} parent=0
    _
  %s10 = ssub.s32 1, %s8
  %s11 = scalar_select 0, %s10, %s8
  loop: start=0, step=1, limit=4
  $region2: #{tpu_custom_call.1} parent=0 // loop_pre_header
    _
  $region3: #{tpu_custom_call.1} parent=0 // loop_header
    %s13 = sphi 0, %s17
    %p14 = scmp.ge.s32.totalorder %s13, 4
    %s20 = sphi 0, %s32
    %s21 = sphi 0, %s28
    %s22 = sphi 0, %s20
    %s23 = sphi 0, %s21
    %s24 = sphi 0, %s22
    %s25 = sphi 0, %s23
    %s35 = sphi 0, %s37
    %s38 = sphi 0, %s35
    %s39 = sphi 0, %s38
    %s55 = sphi 0, %s39
    %s61 = sphi 0, %s63
    %s64 = sphi 0, %s61
    %s65 = sphi 0, %s64
    %s81 = sphi 0, %s65
    %s87 = sphi 0, %s89
    %s90 = sphi 0, %s87
    %s91 = sphi 0, %s90
    %s107 = sphi 0, %s91
    %s113 = sphi 0, %s115
    %s116 = sphi 0, %s113
    %s117 = sphi 0, %s116
    %s133 = sphi 0, %s117
    %s141 = sphi 0, %s143
    %s144 = sphi 0, %s141
    %s145 = sphi 0, %s144
    %s161 = sphi 0, %s145
    %s165 = sphi 0, %s165
    %s167 = sphi 0, %s165
    %s168 = sphi 0, %s167
    %s182 = sphi 0, %s168
    %s186 = sphi 0, %s186
    %s188 = sphi 0, %s186
    %s189 = sphi 0, %s188
    %s203 = sphi 0, %s189
    %s209 = sphi 0, %s211
    %s212 = sphi 0, %s209
    %s213 = sphi 0, %s212
    %s229 = sphi 0, %s213
  $region4: #{tpu_custom_call.1} parent=0 // loop_header_branch
    %16 = sbr.rel (%p14) target = $region8
  $region5: #{tpu_custom_call.1} parent=0 // loop_body
    %s18 = ssub.s32 %s13, 1
    %s19 = ssub.s32 %s13, 2
    %s26 = sadd.s32 1, %s21
    %p27 = scmp.ge.s32.totalorder %s26, 1
    %s28 = scalar_select %p27, 0, %s26
    %s29 = sadd.s32 1, %s20
    %s30 = scalar_select %p27, %s29, %s20
    %p31 = scmp.ge.s32.totalorder %s30, 2
    %s32 = scalar_select %p31, 0, %s30
    %s33 = ssub.s32 %s20, %s32
    %p34 = scmp.eq.s32.totalorder %s33, 0
    %s36 = sadd.s32 %s35, 1
    %s37 = scalar_select %p34, %s35, %s36
    %p40 = pneg %p34
    %p41 = scmp.eq.s32.totalorder %s13, 1
    %p42 = por %p40, %p41
    %p43 = scmp.ne.s32.totalorder %s35, %s38
    %p44 = scmp.eq.s32.totalorder %s13, 0
    %p45 = por %p43, %p44
    %p46 = scmp.ne.s32.totalorder %s35, %s38
    %p47 = scmp.eq.s32.totalorder %s18, 1
    %p48 = por %p46, %p47
    %p49 = scmp.ne.s32.totalorder %s38, %s39
    %p50 = scmp.eq.s32.totalorder %s18, 0
    %p51 = por %p49, %p50
    %p52 = scmp.ne.s32.totalorder %s38, %s39
    %p53 = scmp.eq.s32.totalorder %s19, 1
    %p54 = por %p52, %p53
    %p56 = scmp.ne.s32.totalorder %s39, %s55
    %p57 = scmp.eq.s32.totalorder %s19, 0
    %p58 = por %p56, %p57
    %s59 = ssub.s32 %s21, %s28
    %p60 = scmp.eq.s32.totalorder %s59, 0
    %s62 = sadd.s32 %s61, 1
    %s63 = scalar_select %p60, %s61, %s62
    %p66 = pneg %p60
    %p67 = scmp.eq.s32.totalorder %s13, 1
    %p68 = por %p66, %p67
    %p69 = scmp.ne.s32.totalorder %s61, %s64
    %p70 = scmp.eq.s32.totalorder %s13, 0
    %p71 = por %p69, %p70
    %p72 = scmp.ne.s32.totalorder %s61, %s64
    %p73 = scmp.eq.s32.totalorder %s18, 1
    %p74 = por %p72, %p73
    %p75 = scmp.ne.s32.totalorder %s64, %s65
    %p76 = scmp.eq.s32.totalorder %s18, 0
    %p77 = por %p75, %p76
    %p78 = scmp.ne.s32.totalorder %s64, %s65
    %p79 = scmp.eq.s32.totalorder %s19, 1
    %p80 = por %p78, %p79
    %p82 = scmp.ne.s32.totalorder %s65, %s81
    %p83 = scmp.eq.s32.totalorder %s19, 0
    %p84 = por %p82, %p83
    %s85 = ssub.s32 %s21, %s28
    %p86 = scmp.eq.s32.totalorder %s85, 0
    %s88 = sadd.s32 %s87, 1
    %s89 = scalar_select %p86, %s87, %s88
    %p92 = pneg %p86
    %p93 = scmp.eq.s32.totalorder %s13, 1
    %p94 = por %p92, %p93
    %p95 = scmp.ne.s32.totalorder %s87, %s90
    %p96 = scmp.eq.s32.totalorder %s13, 0
    %p97 = por %p95, %p96
    %p98 = scmp.ne.s32.totalorder %s87, %s90
    %p99 = scmp.eq.s32.totalorder %s18, 1
    %p100 = por %p98, %p99
    %p101 = scmp.ne.s32.totalorder %s90, %s91
    %p102 = scmp.eq.s32.totalorder %s18, 0
    %p103 = por %p101, %p102
    %p104 = scmp.ne.s32.totalorder %s90, %s91
    %p105 = scmp.eq.s32.totalorder %s19, 1
    %p106 = por %p104, %p105
    %p108 = scmp.ne.s32.totalorder %s91, %s107
    %p109 = scmp.eq.s32.totalorder %s19, 0
    %p110 = por %p108, %p109
    %s111 = ssub.s32 %s20, %s32
    %p112 = scmp.eq.s32.totalorder %s111, 0
    %s114 = sadd.s32 %s113, 1
    %s115 = scalar_select %p112, %s113, %s114
    %p118 = pneg %p112
    %p119 = scmp.eq.s32.totalorder %s13, 1
    %p120 = por %p118, %p119
    %p121 = scmp.ne.s32.totalorder %s113, %s116
    %p122 = scmp.eq.s32.totalorder %s13, 0
    %p123 = por %p121, %p122
    %p124 = scmp.ne.s32.totalorder %s113, %s116
    %p125 = scmp.eq.s32.totalorder %s18, 1
    %p126 = por %p124, %p125
    %p127 = scmp.ne.s32.totalorder %s116, %s117
    %p128 = scmp.eq.s32.totalorder %s18, 0
    %p129 = por %p127, %p128
    %p130 = scmp.ne.s32.totalorder %s116, %s117
    %p131 = scmp.eq.s32.totalorder %s19, 1
    %p132 = por %p130, %p131
    %p134 = scmp.ne.s32.totalorder %s117, %s133
    %p135 = scmp.eq.s32.totalorder %s19, 0
    %p136 = por %p134, %p135
    %s137 = ssub.s32 %s20, %s32
    %s138 = ssub.s32 %s21, %s28
    %s139 = sor.u32 %s137, %s138
    %p140 = scmp.eq.s32.totalorder %s139, 0
    %s142 = sadd.s32 %s141, 1
    %s143 = scalar_select %p140, %s141, %s142
    %p146 = pneg %p140
    %p147 = scmp.eq.s32.totalorder %s13, 1
    %p148 = por %p146, %p147
    %p149 = scmp.ne.s32.totalorder %s141, %s144
    %p150 = scmp.eq.s32.totalorder %s13, 0
    %p151 = por %p149, %p150
    %p152 = scmp.ne.s32.totalorder %s141, %s144
    %p153 = scmp.eq.s32.totalorder %s18, 1
    %p154 = por %p152, %p153
    %p155 = scmp.ne.s32.totalorder %s144, %s145
    %p156 = scmp.eq.s32.totalorder %s18, 0
    %p157 = por %p155, %p156
    %p158 = scmp.ne.s32.totalorder %s144, %s145
    %p159 = scmp.eq.s32.totalorder %s19, 1
    %p160 = por %p158, %p159
    %p162 = scmp.ne.s32.totalorder %s145, %s161
    %p163 = scmp.eq.s32.totalorder %s19, 0
    %p164 = por %p162, %p163
    %s166 = sadd.s32 %s165, 1
    %p169 = scmp.eq.s32.totalorder %s13, 1
    %p170 = scmp.ne.s32.totalorder %s165, %s167
    %p171 = scmp.eq.s32.totalorder %s13, 0
    %p172 = por %p170, %p171
    %p173 = scmp.ne.s32.totalorder %s165, %s167
    %p174 = scmp.eq.s32.totalorder %s18, 1
    %p175 = por %p173, %p174
    %p176 = scmp.ne.s32.totalorder %s167, %s168
    %p177 = scmp.eq.s32.totalorder %s18, 0
    %p178 = por %p176, %p177
    %p179 = scmp.ne.s32.totalorder %s167, %s168
    %p180 = scmp.eq.s32.totalorder %s19, 1
    %p181 = por %p179, %p180
    %p183 = scmp.ne.s32.totalorder %s168, %s182
    %p184 = scmp.eq.s32.totalorder %s19, 0
    %p185 = por %p183, %p184
    %s187 = sadd.s32 %s186, 1
    %p190 = scmp.eq.s32.totalorder %s13, 1
    %p191 = scmp.ne.s32.totalorder %s186, %s188
    %p192 = scmp.eq.s32.totalorder %s13, 0
    %p193 = por %p191, %p192
    %p194 = scmp.ne.s32.totalorder %s186, %s188
    %p195 = scmp.eq.s32.totalorder %s18, 1
    %p196 = por %p194, %p195
    %p197 = scmp.ne.s32.totalorder %s188, %s189
    %p198 = scmp.eq.s32.totalorder %s18, 0
    %p199 = por %p197, %p198
    %p200 = scmp.ne.s32.totalorder %s188, %s189
    %p201 = scmp.eq.s32.totalorder %s19, 1
    %p202 = por %p200, %p201
    %p204 = scmp.ne.s32.totalorder %s189, %s203
    %p205 = scmp.eq.s32.totalorder %s19, 0
    %p206 = por %p204, %p205
    %s207 = ssub.s32 %s20, %s32
    %p208 = scmp.eq.s32.totalorder %s207, 0
    %s210 = sadd.s32 %s209, 1
    %s211 = scalar_select %p208, %s209, %s210
    %p214 = pneg %p208
    %p215 = scmp.eq.s32.totalorder %s13, 1
    %p216 = por %p214, %p215
    %p217 = scmp.ne.s32.totalorder %s209, %s212
    %p218 = scmp.eq.s32.totalorder %s13, 0
    %p219 = por %p217, %p218
    %p220 = scmp.ne.s32.totalorder %s209, %s212
    %p221 = scmp.eq.s32.totalorder %s18, 1
    %p222 = por %p220, %p221
    %p223 = scmp.ne.s32.totalorder %s212, %s213
    %p224 = scmp.eq.s32.totalorder %s18, 0
    %p225 = por %p223, %p224
    %p226 = scmp.ne.s32.totalorder %s212, %s213
    %p227 = scmp.eq.s32.totalorder %s19, 1
    %p228 = por %p226, %p227
    %p230 = scmp.ne.s32.totalorder %s213, %s229
    %p231 = scmp.eq.s32.totalorder %s19, 0
    %p232 = por %p230, %p231
    %p233 = scmp.le.s32.totalorder 1, %s13
    %p234 = scmp.lt.s32.totalorder %s13, 3
    %p235 = pnand %p233, %p234
    %p236 = pneg %p235
    // Predicated region
    $region9: #{tpu_custom_call.1} parent=5 // pred_check
      _
    $region10: #{tpu_custom_call.1} parent=5 // pred_check_branch
      %238 = sbr.rel (%p235) target = $region12
    $region11: #{tpu_custom_call.1} parent=5 // pred_region
      %s239 = ssub.s32 %s13, 1
      // Predicated region
      $region13: #{tpu_custom_call.1} parent=11 // pred_check
        %p240 = pneg %p77
      $region14: #{tpu_custom_call.1} parent=11 // pred_check_branch
        %242 = sbr.rel (%p240) target = $region16
      $region15: #{tpu_custom_call.1} parent=11 // pred_region
        %s243 = smul.u32 32, %s23
        %p244 = scmp.lt.s32.totalorder %s243, 31
        %s245 = scalar_select %p244, %s243, 31
        %s246 = smul.addr %s245, 4
        %s247 = scalar_lea.vmem %s1, %s246
        %s248 = smul.u32 32, %s23
      $region16: #{tpu_custom_call.1} parent=11 // pred_fallthru
        _
      // Predicated region
      $region17: #{tpu_custom_call.1} parent=11 // pred_check
        %p249 = pneg %p103
      $region18: #{tpu_custom_call.1} parent=11 // pred_check_branch
        %251 = sbr.rel (%p249) target = $region20
      $region19: #{tpu_custom_call.1} parent=11 // pred_region
        %s252 = smul.u32 2, %s23
        %p253 = scmp.lt.s32.totalorder %s252, 1
        %s254 = scalar_select %p253, %s252, 1
        %s255 = smul.addr %s254, 4
        %s256 = scalar_lea.vmem %s2, %s255
        %s257 = smul.u32 2, %s23
      $region20: #{tpu_custom_call.1} parent=11 // pred_fallthru
        _
      // Predicated region
      $region21: #{tpu_custom_call.1} parent=11 // pred_check
        %p258 = pneg %p178
      $region22: #{tpu_custom_call.1} parent=11 // pred_check_branch
        %260 = sbr.rel (%p258) target = $region24
      $region23: #{tpu_custom_call.1} parent=11 // pred_region
        _
      $region24: #{tpu_custom_call.1} parent=11 // pred_fallthru
        _
      // Predicated region
      $region25: #{tpu_custom_call.1} parent=11 // pred_check
        %p261 = pneg %p199
      $region26: #{tpu_custom_call.1} parent=11 // pred_check_branch
        %263 = sbr.rel (%p261) target = $region28
      $region27: #{tpu_custom_call.1} parent=11 // pred_region
        _
      $region28: #{tpu_custom_call.1} parent=11 // pred_fallthru
        _
    $region12: #{tpu_custom_call.1} parent=5 // pred_fallthru
      _
    %p264 = scmp.lt.s32.totalorder %s13, 2
    // Predicated region
    $region29: #{tpu_custom_call.1} parent=5 // pred_check
      %p265 = pneg %p264
    $region30: #{tpu_custom_call.1} parent=5 // pred_check_branch
      %267 = sbr.rel (%p265) target = $region32
    $region31: #{tpu_custom_call.1} parent=5 // pred_region
      // Predicated region
      $region33: #{tpu_custom_call.1} parent=31 // pred_check
        %p268 = pneg %p45
      $region34: #{tpu_custom_call.1} parent=31 // pred_check_branch
        %270 = sbr.rel (%p268) target = $region36
      $region35: #{tpu_custom_call.1} parent=31 // pred_region
        %s271 = smul.u32 16, %s20
        %p272 = scmp.lt.s32.totalorder %s271, 31
        %s273 = scalar_select %p272, %s271, 31
        %s274 = smul.addr %s273, 8
        %s275 = scalar_lea.vmem %s0, %s274
        %s276 = smul.u32 16, %s20
      $region36: #{tpu_custom_call.1} parent=31 // pred_fallthru
        _
      // Predicated region
      $region37: #{tpu_custom_call.1} parent=31 // pred_check
        %p277 = pneg %p123
      $region38: #{tpu_custom_call.1} parent=31 // pred_check_branch
        %279 = sbr.rel (%p277) target = $region40
      $region39: #{tpu_custom_call.1} parent=31 // pred_region
        %s280 = smul.u32 16, %s20
        %p281 = scmp.lt.s32.totalorder %s280, 31
        %s282 = scalar_select %p281, %s280, 31
        %s283 = smul.addr %s282, 8
        %s284 = scalar_lea.vmem %s3, %s283
        %s285 = smul.u32 16, %s20
      $region40: #{tpu_custom_call.1} parent=31 // pred_fallthru
        _
      // Predicated region
      $region41: #{tpu_custom_call.1} parent=31 // pred_check
        %p286 = pneg %p151
      $region42: #{tpu_custom_call.1} parent=31 // pred_check_branch
        %288 = sbr.rel (%p286) target = $region44
      $region43: #{tpu_custom_call.1} parent=31 // pred_region
        %s289 = smul.u32 4, %s20
        %s290 = smul.u32 2, %s21
        %p291 = scmp.lt.s32.totalorder %s289, 7
        %s292 = scalar_select %p291, %s289, 7
        %p293 = scmp.lt.s32.totalorder %s290, 1
        %s294 = scalar_select %p293, %s290, 1
        %s295 = smul.addr %s292, 2
        %s296 = sadd.s32 %s294, %s295
        %s297 = smul.addr %s296, 8
        %s298 = scalar_lea.vmem %s4, %s297
        %s299 = smul.u32 4, %s20
        %s300 = smul.u32 2, %s21
      $region44: #{tpu_custom_call.1} parent=31 // pred_fallthru
        _
    $region32: #{tpu_custom_call.1} parent=5 // pred_fallthru
      _
    %p301 = scmp.le.s32.totalorder 1, %s13
    %p302 = scmp.lt.s32.totalorder %s13, 3
    %p303 = pnand %p301, %p302
    %p304 = pneg %p303
    // Predicated region
    $region45: #{tpu_custom_call.1} parent=5 // pred_check
      _
    $region46: #{tpu_custom_call.1} parent=5 // pred_check_branch
      %306 = sbr.rel (%p303) target = $region48
    $region47: #{tpu_custom_call.1} parent=5 // pred_region
      %s307 = ssub.s32 %s13, 1
      %s308 = smul.u32 16, %s22
      %p309 = scmp.lt.s32.totalorder %s308, 31
      %s310 = scalar_select %p309, %s308, 31
      %s311 = smul.addr %s310, 8
      %s312 = scalar_lea.vmem %s0, %s311
      %p313 = pneg %p51
      %p314 = pneg %p48
      %s315 = smul.u32 32, %s23
      %p316 = scmp.lt.s32.totalorder %s315, 31
      %s317 = scalar_select %p316, %s315, 31
      %s318 = smul.addr %s317, 4
      %s319 = scalar_lea.vmem %s1, %s318
      %p320 = pneg %p77
      %p321 = pneg %p74
      %s322 = smul.u32 2, %s23
      %p323 = scmp.lt.s32.totalorder %s322, 1
      %s324 = scalar_select %p323, %s322, 1
      %s325 = smul.addr %s324, 4
      %s326 = scalar_lea.vmem %s2, %s325
      %p327 = pneg %p103
      %p328 = pneg %p100
      %s329 = smul.u32 16, %s22
      %p330 = scmp.lt.s32.totalorder %s329, 31
      %s331 = scalar_select %p330, %s329, 31
      %s332 = smul.addr %s331, 8
      %s333 = scalar_lea.vmem %s3, %s332
      %p334 = pneg %p129
      %p335 = pneg %p126
      %s336 = smul.u32 4, %s22
      %s337 = smul.u32 2, %s23
      %p338 = scmp.lt.s32.totalorder %s336, 7
      %s339 = scalar_select %p338, %s336, 7
      %p340 = scmp.lt.s32.totalorder %s337, 1
      %s341 = scalar_select %p340, %s337, 1
      %s342 = smul.addr %s339, 2
      %s343 = sadd.s32 %s341, %s342
      %s344 = smul.addr %s343, 8
      %s345 = scalar_lea.vmem %s4, %s344
      %p346 = pneg %p157
      %p347 = pneg %p154
      %p348 = pneg %p178
      %p349 = pneg %p175
      %p350 = pneg %p199
      %p351 = pneg %p196
      %p352 = pneg %p225
      %p353 = pneg %p222
      %s354 = smul.u32 16, %s22
      %p355 = scmp.lt.s32.totalorder %s354, 31
      %s356 = scalar_select %p355, %s354, 31
      %s357 = smul.addr %s356, 8
      %s358 = scalar_lea.vmem %s7, %s357
      %s359 = smul.u32 16, %s22
      %p360 = scmp.lt.s32.totalorder %s359, 31
      %s361 = scalar_select %p360, %s359, 31
      %s362 = smul.addr %s361, 8
      %s363 = scalar_lea.vmem %s0, %s362
      %s364 = smul.u32 16, %s22
      %s365 = smul.u32 32, %s23
      %p366 = scmp.lt.s32.totalorder %s365, 31
      %s367 = scalar_select %p366, %s365, 31
      %s368 = smul.addr %s367, 4
      %s369 = scalar_lea.vmem %s1, %s368
      %s370 = smul.u32 32, %s23
      %s371 = smul.u32 2, %s23
      %p372 = scmp.lt.s32.totalorder %s371, 1
      %s373 = scalar_select %p372, %s371, 1
      %s374 = smul.addr %s373, 4
      %s375 = scalar_lea.vmem %s2, %s374
      %s376 = smul.u32 2, %s23
      %s377 = smul.u32 16, %s22
      %p378 = scmp.lt.s32.totalorder %s377, 31
      %s379 = scalar_select %p378, %s377, 31
      %s380 = smul.addr %s379, 8
      %s381 = scalar_lea.vmem %s3, %s380
      %s382 = smul.u32 16, %s22
      %s383 = smul.u32 4, %s22
      %s384 = smul.u32 2, %s23
      %p385 = scmp.lt.s32.totalorder %s383, 7
      %s386 = scalar_select %p385, %s383, 7
      %p387 = scmp.lt.s32.totalorder %s384, 1
      %s388 = scalar_select %p387, %s384, 1
      %s389 = smul.addr %s386, 2
      %s390 = sadd.s32 %s388, %s389
      %s391 = smul.addr %s390, 8
      %s392 = scalar_lea.vmem %s4, %s391
      %s393 = smul.u32 4, %s22
      %s394 = smul.u32 2, %s23
      %s395 = smul.u32 16, %s22
      %p396 = scmp.lt.s32.totalorder %s395, 31
      %s397 = scalar_select %p396, %s395, 31
      %s398 = smul.addr %s397, 8
      %s399 = scalar_lea.vmem %s7, %s398
      %s400 = smul.u32 16, %s22
      %p404 = scmp.eq.s32.totalorder %s23, 0
      // Predicated region
      $region49: #{tpu_custom_call.1} parent=47 // pred_check
        %p405 = pneg %p404
      $region50: #{tpu_custom_call.1} parent=47 // pred_check_branch
        %407 = sbr.rel (%p405) target = $region52
      $region51: #{tpu_custom_call.1} parent=47 // pred_region
        %vm408 = vcmask 7168
        %409 = vst.msk [vmem:[#allocation2] sm:$0xff] %vm408, 0.0
        %410 = vst.msk [vmem:[#allocation2 + $0x8] sm:$0xff] %vm408, 0.0
        %411 = vst.msk [vmem:[#allocation2 + $0x10] sm:$0xff] %vm408, 0.0
        %412 = vst.msk [vmem:[#allocation2 + $0x18] sm:$0xff] %vm408, 0.0
        %413 = vst.msk [vmem:[#allocation2 + $0x20] sm:$0xff] %vm408, 0.0
        %414 = vst.msk [vmem:[#allocation2 + $0x28] sm:$0xff] %vm408, 0.0
        %415 = vst.msk [vmem:[#allocation2 + $0x30] sm:$0xff] %vm408, 0.0
        %416 = vst.msk [vmem:[#allocation2 + $0x38] sm:$0xff] %vm408, 0.0
        %417 = vst.msk [vmem:[#allocation2 + $0x40] sm:$0xff] %vm408, 0.0
        %418 = vst.msk [vmem:[#allocation2 + $0x48] sm:$0xff] %vm408, 0.0
        %419 = vst.msk [vmem:[#allocation2 + $0x50] sm:$0xff] %vm408, 0.0
        %420 = vst.msk [vmem:[#allocation2 + $0x58] sm:$0xff] %vm408, 0.0
        %421 = vst.msk [vmem:[#allocation2 + $0x60] sm:$0xff] %vm408, 0.0
        %422 = vst.msk [vmem:[#allocation2 + $0x68] sm:$0xff] %vm408, 0.0
        %423 = vst.msk [vmem:[#allocation2 + $0x70] sm:$0xff] %vm408, 0.0
        %424 = vst.msk [vmem:[#allocation2 + $0x78] sm:$0xff] %vm408, 0.0
        %425 = vst.msk [vmem:[#allocation2 + $0x80] sm:$0xff] %vm408, 0.0
        %426 = vst.msk [vmem:[#allocation2 + $0x88] sm:$0xff] %vm408, 0.0
        %427 = vst.msk [vmem:[#allocation2 + $0x90] sm:$0xff] %vm408, 0.0
        %428 = vst.msk [vmem:[#allocation2 + $0x98] sm:$0xff] %vm408, 0.0
        %429 = vst.msk [vmem:[#allocation2 + $0xa0] sm:$0xff] %vm408, 0.0
        %430 = vst.msk [vmem:[#allocation2 + $0xa8] sm:$0xff] %vm408, 0.0
        %431 = vst.msk [vmem:[#allocation2 + $0xb0] sm:$0xff] %vm408, 0.0
        %432 = vst.msk [vmem:[#allocation2 + $0xb8] sm:$0xff] %vm408, 0.0
        %433 = vst.msk [vmem:[#allocation2 + $0xc0] sm:$0xff] %vm408, 0.0
        %434 = vst.msk [vmem:[#allocation2 + $0xc8] sm:$0xff] %vm408, 0.0
        %435 = vst.msk [vmem:[#allocation2 + $0xd0] sm:$0xff] %vm408, 0.0
        %436 = vst.msk [vmem:[#allocation2 + $0xd8] sm:$0xff] %vm408, 0.0
        %437 = vst.msk [vmem:[#allocation2 + $0xe0] sm:$0xff] %vm408, 0.0
        %438 = vst.msk [vmem:[#allocation2 + $0xe8] sm:$0xff] %vm408, 0.0
        %439 = vst.msk [vmem:[#allocation2 + $0xf0] sm:$0xff] %vm408, 0.0
        %440 = vst.msk [vmem:[#allocation2 + $0xf8] sm:$0xff] %vm408, 0.0
        %441 = vst.msk [vmem:[#allocation2 + $0x100] sm:$0xff] %vm408, 0.0
        %442 = vst.msk [vmem:[#allocation2 + $0x108] sm:$0xff] %vm408, 0.0
        %443 = vst.msk [vmem:[#allocation2 + $0x110] sm:$0xff] %vm408, 0.0
        %444 = vst.msk [vmem:[#allocation2 + $0x118] sm:$0xff] %vm408, 0.0
        %445 = vst.msk [vmem:[#allocation2 + $0x120] sm:$0xff] %vm408, 0.0
        %446 = vst.msk [vmem:[#allocation2 + $0x128] sm:$0xff] %vm408, 0.0
        %447 = vst.msk [vmem:[#allocation2 + $0x130] sm:$0xff] %vm408, 0.0
        %448 = vst.msk [vmem:[#allocation2 + $0x138] sm:$0xff] %vm408, 0.0
        %449 = vst.msk [vmem:[#allocation2 + $0x140] sm:$0xff] %vm408, 0.0
        %450 = vst.msk [vmem:[#allocation2 + $0x148] sm:$0xff] %vm408, 0.0
        %451 = vst.msk [vmem:[#allocation2 + $0x150] sm:$0xff] %vm408, 0.0
        %452 = vst.msk [vmem:[#allocation2 + $0x158] sm:$0xff] %vm408, 0.0
        %453 = vst.msk [vmem:[#allocation2 + $0x160] sm:$0xff] %vm408, 0.0
        %454 = vst.msk [vmem:[#allocation2 + $0x168] sm:$0xff] %vm408, 0.0
        %455 = vst.msk [vmem:[#allocation2 + $0x170] sm:$0xff] %vm408, 0.0
        %456 = vst.msk [vmem:[#allocation2 + $0x178] sm:$0xff] %vm408, 0.0
        %457 = vst.msk [vmem:[#allocation2 + $0x180] sm:$0xff] %vm408, 0.0
        %458 = vst.msk [vmem:[#allocation2 + $0x188] sm:$0xff] %vm408, 0.0
        %459 = vst.msk [vmem:[#allocation2 + $0x190] sm:$0xff] %vm408, 0.0
        %460 = vst.msk [vmem:[#allocation2 + $0x198] sm:$0xff] %vm408, 0.0
        %461 = vst.msk [vmem:[#allocation2 + $0x1a0] sm:$0xff] %vm408, 0.0
        %462 = vst.msk [vmem:[#allocation2 + $0x1a8] sm:$0xff] %vm408, 0.0
        %463 = vst.msk [vmem:[#allocation2 + $0x1b0] sm:$0xff] %vm408, 0.0
        %464 = vst.msk [vmem:[#allocation2 + $0x1b8] sm:$0xff] %vm408, 0.0
        %465 = vst.msk [vmem:[#allocation2 + $0x1c0] sm:$0xff] %vm408, 0.0
        %466 = vst.msk [vmem:[#allocation2 + $0x1c8] sm:$0xff] %vm408, 0.0
        %467 = vst.msk [vmem:[#allocation2 + $0x1d0] sm:$0xff] %vm408, 0.0
        %468 = vst.msk [vmem:[#allocation2 + $0x1d8] sm:$0xff] %vm408, 0.0
        %469 = vst.msk [vmem:[#allocation2 + $0x1e0] sm:$0xff] %vm408, 0.0
        %470 = vst.msk [vmem:[#allocation2 + $0x1e8] sm:$0xff] %vm408, 0.0
        %471 = vst.msk [vmem:[#allocation2 + $0x1f0] sm:$0xff] %vm408, 0.0
        %472 = vst.msk [vmem:[#allocation2 + $0x1f8] sm:$0xff] %vm408, 0.0
        %473 = vst.msk [vmem:[#allocation3] sm:$0xff] %vm408, 0.0
        %474 = vst.msk [vmem:[#allocation3 + $0x8] sm:$0xff] %vm408, 0.0
        %475 = vst.msk [vmem:[#allocation3 + $0x10] sm:$0xff] %vm408, 0.0
        %476 = vst.msk [vmem:[#allocation3 + $0x18] sm:$0xff] %vm408, 0.0
        %477 = vst.msk [vmem:[#allocation3 + $0x20] sm:$0xff] %vm408, 0.0
        %478 = vst.msk [vmem:[#allocation3 + $0x28] sm:$0xff] %vm408, 0.0
        %479 = vst.msk [vmem:[#allocation3 + $0x30] sm:$0xff] %vm408, 0.0
        %480 = vst.msk [vmem:[#allocation3 + $0x38] sm:$0xff] %vm408, 0.0
        %481 = vst.msk [vmem:[#allocation3 + $0x40] sm:$0xff] %vm408, 0.0
        %482 = vst.msk [vmem:[#allocation3 + $0x48] sm:$0xff] %vm408, 0.0
        %483 = vst.msk [vmem:[#allocation3 + $0x50] sm:$0xff] %vm408, 0.0
        %484 = vst.msk [vmem:[#allocation3 + $0x58] sm:$0xff] %vm408, 0.0
        %485 = vst.msk [vmem:[#allocation3 + $0x60] sm:$0xff] %vm408, 0.0
        %486 = vst.msk [vmem:[#allocation3 + $0x68] sm:$0xff] %vm408, 0.0
        %487 = vst.msk [vmem:[#allocation3 + $0x70] sm:$0xff] %vm408, 0.0
        %488 = vst.msk [vmem:[#allocation3 + $0x78] sm:$0xff] %vm408, 0.0
        %489 = vst.msk [vmem:[#allocation3 + $0x80] sm:$0xff] %vm408, 0.0
        %490 = vst.msk [vmem:[#allocation3 + $0x88] sm:$0xff] %vm408, 0.0
        %491 = vst.msk [vmem:[#allocation3 + $0x90] sm:$0xff] %vm408, 0.0
        %492 = vst.msk [vmem:[#allocation3 + $0x98] sm:$0xff] %vm408, 0.0
        %493 = vst.msk [vmem:[#allocation3 + $0xa0] sm:$0xff] %vm408, 0.0
        %494 = vst.msk [vmem:[#allocation3 + $0xa8] sm:$0xff] %vm408, 0.0
        %495 = vst.msk [vmem:[#allocation3 + $0xb0] sm:$0xff] %vm408, 0.0
        %496 = vst.msk [vmem:[#allocation3 + $0xb8] sm:$0xff] %vm408, 0.0
        %497 = vst.msk [vmem:[#allocation3 + $0xc0] sm:$0xff] %vm408, 0.0
        %498 = vst.msk [vmem:[#allocation3 + $0xc8] sm:$0xff] %vm408, 0.0
        %499 = vst.msk [vmem:[#allocation3 + $0xd0] sm:$0xff] %vm408, 0.0
        %500 = vst.msk [vmem:[#allocation3 + $0xd8] sm:$0xff] %vm408, 0.0
        %501 = vst.msk [vmem:[#allocation3 + $0xe0] sm:$0xff] %vm408, 0.0
        %502 = vst.msk [vmem:[#allocation3 + $0xe8] sm:$0xff] %vm408, 0.0
        %503 = vst.msk [vmem:[#allocation3 + $0xf0] sm:$0xff] %vm408, 0.0
        %504 = vst.msk [vmem:[#allocation3 + $0xf8] sm:$0xff] %vm408, 0.0
        %505 = vst.msk [vmem:[#allocation3 + $0x100] sm:$0xff] %vm408, 0.0
        %506 = vst.msk [vmem:[#allocation3 + $0x108] sm:$0xff] %vm408, 0.0
        %507 = vst.msk [vmem:[#allocation3 + $0x110] sm:$0xff] %vm408, 0.0
        %508 = vst.msk [vmem:[#allocation3 + $0x118] sm:$0xff] %vm408, 0.0
        %509 = vst.msk [vmem:[#allocation3 + $0x120] sm:$0xff] %vm408, 0.0
        %510 = vst.msk [vmem:[#allocation3 + $0x128] sm:$0xff] %vm408, 0.0
        %511 = vst.msk [vmem:[#allocation3 + $0x130] sm:$0xff] %vm408, 0.0
        %512 = vst.msk [vmem:[#allocation3 + $0x138] sm:$0xff] %vm408, 0.0
        %513 = vst.msk [vmem:[#allocation3 + $0x140] sm:$0xff] %vm408, 0.0
        %514 = vst.msk [vmem:[#allocation3 + $0x148] sm:$0xff] %vm408, 0.0
        %515 = vst.msk [vmem:[#allocation3 + $0x150] sm:$0xff] %vm408, 0.0
        %516 = vst.msk [vmem:[#allocation3 + $0x158] sm:$0xff] %vm408, 0.0
        %517 = vst.msk [vmem:[#allocation3 + $0x160] sm:$0xff] %vm408, 0.0
        %518 = vst.msk [vmem:[#allocation3 + $0x168] sm:$0xff] %vm408, 0.0
        %519 = vst.msk [vmem:[#allocation3 + $0x170] sm:$0xff] %vm408, 0.0
        %520 = vst.msk [vmem:[#allocation3 + $0x178] sm:$0xff] %vm408, 0.0
        %521 = vst.msk [vmem:[#allocation3 + $0x180] sm:$0xff] %vm408, 0.0
        %522 = vst.msk [vmem:[#allocation3 + $0x188] sm:$0xff] %vm408, 0.0
        %523 = vst.msk [vmem:[#allocation3 + $0x190] sm:$0xff] %vm408, 0.0
        %524 = vst.msk [vmem:[#allocation3 + $0x198] sm:$0xff] %vm408, 0.0
        %525 = vst.msk [vmem:[#allocation3 + $0x1a0] sm:$0xff] %vm408, 0.0
        %526 = vst.msk [vmem:[#allocation3 + $0x1a8] sm:$0xff] %vm408, 0.0
        %527 = vst.msk [vmem:[#allocation3 + $0x1b0] sm:$0xff] %vm408, 0.0
        %528 = vst.msk [vmem:[#allocation3 + $0x1b8] sm:$0xff] %vm408, 0.0
        %529 = vst.msk [vmem:[#allocation3 + $0x1c0] sm:$0xff] %vm408, 0.0
        %530 = vst.msk [vmem:[#allocation3 + $0x1c8] sm:$0xff] %vm408, 0.0
        %531 = vst.msk [vmem:[#allocation3 + $0x1d0] sm:$0xff] %vm408, 0.0
        %532 = vst.msk [vmem:[#allocation3 + $0x1d8] sm:$0xff] %vm408, 0.0
        %533 = vst.msk [vmem:[#allocation3 + $0x1e0] sm:$0xff] %vm408, 0.0
        %534 = vst.msk [vmem:[#allocation3 + $0x1e8] sm:$0xff] %vm408, 0.0
        %535 = vst.msk [vmem:[#allocation3 + $0x1f0] sm:$0xff] %vm408, 0.0
        %536 = vst.msk [vmem:[#allocation3 + $0x1f8] sm:$0xff] %vm408, 0.0
        %vm537 = vcmask 261120
        %538 = vst.msk [vmem:[#allocation4] sm:$0xff] %vm537, 0.0
        %539 = vst.msk [vmem:[#allocation4 + $0x8] sm:$0xff] %vm537, 0.0
        %540 = vst.msk [vmem:[#allocation4 + $0x10] sm:$0xff] %vm537, 0.0
        %541 = vst.msk [vmem:[#allocation4 + $0x18] sm:$0xff] %vm537, 0.0
        %542 = vst.msk [vmem:[#allocation4 + $0x20] sm:$0xff] %vm537, 0.0
        %543 = vst.msk [vmem:[#allocation4 + $0x28] sm:$0xff] %vm537, 0.0
        %544 = vst.msk [vmem:[#allocation4 + $0x30] sm:$0xff] %vm537, 0.0
        %545 = vst.msk [vmem:[#allocation4 + $0x38] sm:$0xff] %vm537, 0.0
        %546 = vst.msk [vmem:[#allocation4 + $0x40] sm:$0xff] %vm537, 0.0
        %547 = vst.msk [vmem:[#allocation4 + $0x48] sm:$0xff] %vm537, 0.0
        %548 = vst.msk [vmem:[#allocation4 + $0x50] sm:$0xff] %vm537, 0.0
        %549 = vst.msk [vmem:[#allocation4 + $0x58] sm:$0xff] %vm537, 0.0
        %550 = vst.msk [vmem:[#allocation4 + $0x60] sm:$0xff] %vm537, 0.0
        %551 = vst.msk [vmem:[#allocation4 + $0x68] sm:$0xff] %vm537, 0.0
        %552 = vst.msk [vmem:[#allocation4 + $0x70] sm:$0xff] %vm537, 0.0
        %553 = vst.msk [vmem:[#allocation4 + $0x78] sm:$0xff] %vm537, 0.0
      $region52: #{tpu_custom_call.1} parent=47 // pred_fallthru
        _
      %v554 = vld [vmem:[%s392] sm:$0xff]
      %v555 = vld [vmem:[%s392 + $0x8] sm:$0xff]
      %v556 = vld [vmem:[%s392 + $0x10] sm:$0xff]
      %v557 = vld [vmem:[%s392 + $0x18] sm:$0xff]
      %v558 = vld [vmem:[%s392 + $0x20] sm:$0xff]
      %v559 = vld [vmem:[%s392 + $0x28] sm:$0xff]
      %v560 = vld [vmem:[%s392 + $0x30] sm:$0xff]
      %v561 = vld [vmem:[%s392 + $0x38] sm:$0xff]
      %vm562 = vnez %v554
      %vm563 = vnez %v555
      %vm564 = vnez %v556
      %vm565 = vnez %v557
      %vm566 = vnez %v558
      %vm567 = vnez %v559
      %vm568 = vnez %v560
      %vm569 = vnez %v561
      %v570 = vld [vmem:[%s369] sm:$0xf]
      %v571 = vld [vmem:[%s369 + $0x4] sm:$0xf]
      %v572 = vld [vmem:[%s369 + $0x8] sm:$0xf]
      %v573 = vld [vmem:[%s369 + $0xc] sm:$0xf]
      %v574 = vld [vmem:[%s369 + $0x10] sm:$0xf]
      %v575 = vld [vmem:[%s369 + $0x14] sm:$0xf]
      %v576 = vld [vmem:[%s369 + $0x18] sm:$0xf]
      %v577 = vld [vmem:[%s369 + $0x1c] sm:$0xf]
      %v578 = vld [vmem:[%s369 + $0x20] sm:$0xf]
      %v579 = vld [vmem:[%s369 + $0x24] sm:$0xf]
      %v580 = vld [vmem:[%s369 + $0x28] sm:$0xf]
      %v581 = vld [vmem:[%s369 + $0x2c] sm:$0xf]
      %v582 = vld [vmem:[%s369 + $0x30] sm:$0xf]
      %v583 = vld [vmem:[%s369 + $0x34] sm:$0xf]
      %v584 = vld [vmem:[%s369 + $0x38] sm:$0xf]
      %v585 = vld [vmem:[%s369 + $0x3c] sm:$0xf]
      %v586 = vld [vmem:[%s369 + $0x40] sm:$0xf]
      %v587 = vld [vmem:[%s369 + $0x44] sm:$0xf]
      %v588 = vld [vmem:[%s369 + $0x48] sm:$0xf]
      %v589 = vld [vmem:[%s369 + $0x4c] sm:$0xf]
      %v590 = vld [vmem:[%s369 + $0x50] sm:$0xf]
      %v591 = vld [vmem:[%s369 + $0x54] sm:$0xf]
      %v592 = vld [vmem:[%s369 + $0x58] sm:$0xf]
      %v593 = vld [vmem:[%s369 + $0x5c] sm:$0xf]
      %v594 = vld [vmem:[%s369 + $0x60] sm:$0xf]
      %v595 = vld [vmem:[%s369 + $0x64] sm:$0xf]
      %v596 = vld [vmem:[%s369 + $0x68] sm:$0xf]
      %v597 = vld [vmem:[%s369 + $0x6c] sm:$0xf]
      %v598 = vld [vmem:[%s369 + $0x70] sm:$0xf]
      %v599 = vld [vmem:[%s369 + $0x74] sm:$0xf]
      %v600 = vld [vmem:[%s369 + $0x78] sm:$0xf]
      %v601 = vld [vmem:[%s369 + $0x7c] sm:$0xf]
      %v602 = vld [vmem:[%s375] ss:$4 sm:$0x3]
      %v603 = vld [vmem:[%s381] sm:$0xff]
      %v604 = vld [vmem:[%s381 + $0x8] sm:$0xff]
      %v605 = vld [vmem:[%s381 + $0x10] sm:$0xff]
      %v606 = vld [vmem:[%s381 + $0x18] sm:$0xff]
      %v607 = vld [vmem:[%s381 + $0x20] sm:$0xff]
      %v608 = vld [vmem:[%s381 + $0x28] sm:$0xff]
      %v609 = vld [vmem:[%s381 + $0x30] sm:$0xff]
      %v610 = vld [vmem:[%s381 + $0x38] sm:$0xff]
      %v611 = vld [vmem:[%s381 + $0x40] sm:$0xff]
      %v612 = vld [vmem:[%s381 + $0x48] sm:$0xff]
      %v613 = vld [vmem:[%s381 + $0x50] sm:$0xff]
      %v614 = vld [vmem:[%s381 + $0x58] sm:$0xff]
      %v615 = vld [vmem:[%s381 + $0x60] sm:$0xff]
      %v616 = vld [vmem:[%s381 + $0x68] sm:$0xff]
      %v617 = vld [vmem:[%s381 + $0x70] sm:$0xff]
      %v618 = vld [vmem:[%s381 + $0x78] sm:$0xff]
      %620 = vset.pattern.permute.xlu0 0
      %621 = vperm.xlu0 %620, %v603
      %v622 = vpop.permute.xlu0 %621
      %625 = vset.pattern.permute.xlu0 0
      %626 = vperm.xlu0 %625, %v604
      %v627 = vpop.permute.xlu0 %626
      %630 = vset.pattern.permute.xlu0 0
      %631 = vperm.xlu0 %630, %v605
      %v632 = vpop.permute.xlu0 %631
      %635 = vset.pattern.permute.xlu0 0
      %636 = vperm.xlu0 %635, %v606
      %v637 = vpop.permute.xlu0 %636
      %640 = vset.pattern.permute.xlu0 0
      %641 = vperm.xlu0 %640, %v607
      %v642 = vpop.permute.xlu0 %641
      %645 = vset.pattern.permute.xlu0 0
      %646 = vperm.xlu0 %645, %v608
      %v647 = vpop.permute.xlu0 %646
      %650 = vset.pattern.permute.xlu0 0
      %651 = vperm.xlu0 %650, %v609
      %v652 = vpop.permute.xlu0 %651
      %655 = vset.pattern.permute.xlu0 0
      %656 = vperm.xlu0 %655, %v610
      %v657 = vpop.permute.xlu0 %656
      %660 = vset.pattern.permute.xlu0 0
      %661 = vperm.xlu0 %660, %v611
      %v662 = vpop.permute.xlu0 %661
      %665 = vset.pattern.permute.xlu0 0
      %666 = vperm.xlu0 %665, %v612
      %v667 = vpop.permute.xlu0 %666
      %670 = vset.pattern.permute.xlu0 0
      %671 = vperm.xlu0 %670, %v613
      %v672 = vpop.permute.xlu0 %671
      %675 = vset.pattern.permute.xlu0 0
      %676 = vperm.xlu0 %675, %v614
      %v677 = vpop.permute.xlu0 %676
      %680 = vset.pattern.permute.xlu0 0
      %681 = vperm.xlu0 %680, %v615
      %v682 = vpop.permute.xlu0 %681
      %685 = vset.pattern.permute.xlu0 0
      %686 = vperm.xlu0 %685, %v616
      %v687 = vpop.permute.xlu0 %686
      %690 = vset.pattern.permute.xlu0 0
      %691 = vperm.xlu0 %690, %v617
      %v692 = vpop.permute.xlu0 %691
      %695 = vset.pattern.permute.xlu0 0
      %696 = vperm.xlu0 %695, %v618
      %v697 = vpop.permute.xlu0 %696
      %v700 = vlaneseq
      %v701 = vshrl.u32 %v700, 7
      %v702 = vsub.s32 0, %v701
      %v703 = vrot.slane %v602, %v702
      %v704 = vlaneseq
      %v705 = vshrl.u32 %v704, 7
      %v706 = vsub.s32 1, %v705
      %v707 = vrot.slane %v602, %v706
      %v710 = vadd.f32 %v622, %v703
      %v711 = vadd.f32 %v622, %v707
      %v712 = vadd.f32 %v627, %v703
      %v713 = vadd.f32 %v627, %v707
      %v714 = vadd.f32 %v632, %v703
      %v715 = vadd.f32 %v632, %v707
      %v716 = vadd.f32 %v637, %v703
      %v717 = vadd.f32 %v637, %v707
      %v718 = vadd.f32 %v642, %v703
      %v719 = vadd.f32 %v642, %v707
      %v720 = vadd.f32 %v647, %v703
      %v721 = vadd.f32 %v647, %v707
      %v722 = vadd.f32 %v652, %v703
      %v723 = vadd.f32 %v652, %v707
      %v724 = vadd.f32 %v657, %v703
      %v725 = vadd.f32 %v657, %v707
      %v726 = vadd.f32 %v662, %v703
      %v727 = vadd.f32 %v662, %v707
      %v728 = vadd.f32 %v667, %v703
      %v729 = vadd.f32 %v667, %v707
      %v730 = vadd.f32 %v672, %v703
      %v731 = vadd.f32 %v672, %v707
      %v732 = vadd.f32 %v677, %v703
      %v733 = vadd.f32 %v677, %v707
      %v734 = vadd.f32 %v682, %v703
      %v735 = vadd.f32 %v682, %v707
      %v736 = vadd.f32 %v687, %v703
      %v737 = vadd.f32 %v687, %v707
      %v738 = vadd.f32 %v692, %v703
      %v739 = vadd.f32 %v692, %v707
      %v740 = vadd.f32 %v697, %v703
      %v741 = vadd.f32 %v697, %v707
      %v742 = vmul.f32 %v710, 0.2
      %v743 = vmul.f32 %v711, 0.2
      %v744 = vmul.f32 %v712, 0.2
      %v745 = vmul.f32 %v713, 0.2
      %v746 = vmul.f32 %v714, 0.2
      %v747 = vmul.f32 %v715, 0.2
      %v748 = vmul.f32 %v716, 0.2
      %v749 = vmul.f32 %v717, 0.2
      %v750 = vmul.f32 %v718, 0.2
      %v751 = vmul.f32 %v719, 0.2
      %v752 = vmul.f32 %v720, 0.2
      %v753 = vmul.f32 %v721, 0.2
      %v754 = vmul.f32 %v722, 0.2
      %v755 = vmul.f32 %v723, 0.2
      %v756 = vmul.f32 %v724, 0.2
      %v757 = vmul.f32 %v725, 0.2
      %v758 = vmul.f32 %v726, 0.2
      %v759 = vmul.f32 %v727, 0.2
      %v760 = vmul.f32 %v728, 0.2
      %v761 = vmul.f32 %v729, 0.2
      %v762 = vmul.f32 %v730, 0.2
      %v763 = vmul.f32 %v731, 0.2
      %v764 = vmul.f32 %v732, 0.2
      %v765 = vmul.f32 %v733, 0.2
      %v766 = vmul.f32 %v734, 0.2
      %v767 = vmul.f32 %v735, 0.2
      %v768 = vmul.f32 %v736, 0.2
      %v769 = vmul.f32 %v737, 0.2
      %v770 = vmul.f32 %v738, 0.2
      %v771 = vmul.f32 %v739, 0.2
      %v772 = vmul.f32 %v740, 0.2
      %v773 = vmul.f32 %v741, 0.2
      %v774 = vmax.f32 %v710, %v742
      %v775 = vmax.f32 %v711, %v743
      %v776 = vmax.f32 %v712, %v744
      %v777 = vmax.f32 %v713, %v745
      %v778 = vmax.f32 %v714, %v746
      %v779 = vmax.f32 %v715, %v747
      %v780 = vmax.f32 %v716, %v748
      %v781 = vmax.f32 %v717, %v749
      %v782 = vmax.f32 %v718, %v750
      %v783 = vmax.f32 %v719, %v751
      %v784 = vmax.f32 %v720, %v752
      %v785 = vmax.f32 %v721, %v753
      %v786 = vmax.f32 %v722, %v754
      %v787 = vmax.f32 %v723, %v755
      %v788 = vmax.f32 %v724, %v756
      %v789 = vmax.f32 %v725, %v757
      %v790 = vmax.f32 %v726, %v758
      %v791 = vmax.f32 %v727, %v759
      %v792 = vmax.f32 %v728, %v760
      %v793 = vmax.f32 %v729, %v761
      %v794 = vmax.f32 %v730, %v762
      %v795 = vmax.f32 %v731, %v763
      %v796 = vmax.f32 %v732, %v764
      %v797 = vmax.f32 %v733, %v765
      %v798 = vmax.f32 %v734, %v766
      %v799 = vmax.f32 %v735, %v767
      %v800 = vmax.f32 %v736, %v768
      %v801 = vmax.f32 %v737, %v769
      %v802 = vmax.f32 %v738, %v770
      %v803 = vmax.f32 %v739, %v771
      %v804 = vmax.f32 %v740, %v772
      %v805 = vmax.f32 %v741, %v773
      %v806 = vsel %vm562, 16843009, 0
      %v807 = vsel %vm563, 16843009, 0
      %v808 = vsel %vm564, 16843009, 0
      %v809 = vsel %vm565, 16843009, 0
      %v810 = vsel %vm566, 16843009, 0
      %v811 = vsel %vm567, 16843009, 0
      %v812 = vsel %vm568, 16843009, 0
      %v813 = vsel %vm569, 16843009, 0
      %v814 = vunpack.c.0.s8 %v806
      %v815 = vunpack.c.0.s8 %v807
      %v816 = vunpack.c.1.s8 %v806
      %v817 = vunpack.c.1.s8 %v807
      %v818 = vunpack.c.2.s8 %v806
      %v819 = vunpack.c.2.s8 %v807
      %v820 = vunpack.c.3.s8 %v806
      %v821 = vunpack.c.3.s8 %v807
      %v822 = vunpack.c.0.s8 %v808
      %v823 = vunpack.c.0.s8 %v809
      %v824 = vunpack.c.1.s8 %v808
      %v825 = vunpack.c.1.s8 %v809
      %v826 = vunpack.c.2.s8 %v808
      %v827 = vunpack.c.2.s8 %v809
      %v828 = vunpack.c.3.s8 %v808
      %v829 = vunpack.c.3.s8 %v809
      %v830 = vunpack.c.0.s8 %v810
      %v831 = vunpack.c.0.s8 %v811
      %v832 = vunpack.c.1.s8 %v810
      %v833 = vunpack.c.1.s8 %v811
      %v834 = vunpack.c.2.s8 %v810
      %v835 = vunpack.c.2.s8 %v811
      %v836 = vunpack.c.3.s8 %v810
      %v837 = vunpack.c.3.s8 %v811
      %v838 = vunpack.c.0.s8 %v812
      %v839 = vunpack.c.0.s8 %v813
      %v840 = vunpack.c.1.s8 %v812
      %v841 = vunpack.c.1.s8 %v813
      %v842 = vunpack.c.2.s8 %v812
      %v843 = vunpack.c.2.s8 %v813
      %v844 = vunpack.c.3.s8 %v812
      %v845 = vunpack.c.3.s8 %v813
      %v846 = vpack.c.b16 %v815, %v814
      %v847 = vpack.c.b8 %v846, %v846
      %v848 = vpack.c.b16 %v817, %v816
      %v849 = vpack.c.b8 %v848, %v848
      %v850 = vpack.c.b16 %v819, %v818
      %v851 = vpack.c.b8 %v850, %v850
      %v852 = vpack.c.b16 %v821, %v820
      %v853 = vpack.c.b8 %v852, %v852
      %v854 = vpack.c.b16 %v823, %v822
      %v855 = vpack.c.b8 %v854, %v854
      %v856 = vpack.c.b16 %v825, %v824
      %v857 = vpack.c.b8 %v856, %v856
      %v858 = vpack.c.b16 %v827, %v826
      %v859 = vpack.c.b8 %v858, %v858
      %v860 = vpack.c.b16 %v829, %v828
      %v861 = vpack.c.b8 %v860, %v860
      %v862 = vpack.c.b16 %v831, %v830
      %v863 = vpack.c.b8 %v862, %v862
      %v864 = vpack.c.b16 %v833, %v832
      %v865 = vpack.c.b8 %v864, %v864
      %v866 = vpack.c.b16 %v835, %v834
      %v867 = vpack.c.b8 %v866, %v866
      %v868 = vpack.c.b16 %v837, %v836
      %v869 = vpack.c.b8 %v868, %v868
      %v870 = vpack.c.b16 %v839, %v838
      %v871 = vpack.c.b8 %v870, %v870
      %v872 = vpack.c.b16 %v841, %v840
      %v873 = vpack.c.b8 %v872, %v872
      %v874 = vpack.c.b16 %v843, %v842
      %v875 = vpack.c.b8 %v874, %v874
      %v876 = vpack.c.b16 %v845, %v844
      %v877 = vpack.c.b8 %v876, %v876
      %vm878 = vnez %v847
      %vm879 = vnez %v849
      %vm880 = vnez %v851
      %vm881 = vnez %v853
      %vm882 = vnez %v855
      %vm883 = vnez %v857
      %vm884 = vnez %v859
      %vm885 = vnez %v861
      %vm886 = vnez %v863
      %vm887 = vnez %v865
      %vm888 = vnez %v867
      %vm889 = vnez %v869
      %vm890 = vnez %v871
      %vm891 = vnez %v873
      %vm892 = vnez %v875
      %vm893 = vnez %v877
      %v894 = vsel %vm878, 16843009, 0
      %v895 = vsel %vm879, 16843009, 0
      %v896 = vsel %vm880, 16843009, 0
      %v897 = vsel %vm881, 16843009, 0
      %v898 = vsel %vm882, 16843009, 0
      %v899 = vsel %vm883, 16843009, 0
      %v900 = vsel %vm884, 16843009, 0
      %v901 = vsel %vm885, 16843009, 0
      %v902 = vsel %vm886, 16843009, 0
      %v903 = vsel %vm887, 16843009, 0
      %v904 = vsel %vm888, 16843009, 0
      %v905 = vsel %vm889, 16843009, 0
      %v906 = vsel %vm890, 16843009, 0
      %v907 = vsel %vm891, 16843009, 0
      %v908 = vsel %vm892, 16843009, 0
      %v909 = vsel %vm893, 16843009, 0
      %v910 = vunpack.c.0.s8 %v894
      %v911 = vunpack.c.1.s8 %v894
      %v912 = vunpack.c.0.s8 %v895
      %v913 = vunpack.c.1.s8 %v895
      %v914 = vunpack.c.0.s8 %v896
      %v915 = vunpack.c.1.s8 %v896
      %v916 = vunpack.c.0.s8 %v897
      %v917 = vunpack.c.1.s8 %v897
      %v918 = vunpack.c.0.s8 %v898
      %v919 = vunpack.c.1.s8 %v898
      %v920 = vunpack.c.0.s8 %v899
      %v921 = vunpack.c.1.s8 %v899
      %v922 = vunpack.c.0.s8 %v900
      %v923 = vunpack.c.1.s8 %v900
      %v924 = vunpack.c.0.s8 %v901
      %v925 = vunpack.c.1.s8 %v901
      %v926 = vunpack.c.0.s8 %v902
      %v927 = vunpack.c.1.s8 %v902
      %v928 = vunpack.c.0.s8 %v903
      %v929 = vunpack.c.1.s8 %v903
      %v930 = vunpack.c.0.s8 %v904
      %v931 = vunpack.c.1.s8 %v904
      %v932 = vunpack.c.0.s8 %v905
      %v933 = vunpack.c.1.s8 %v905
      %v934 = vunpack.c.0.s8 %v906
      %v935 = vunpack.c.1.s8 %v906
      %v936 = vunpack.c.0.s8 %v907
      %v937 = vunpack.c.1.s8 %v907
      %v938 = vunpack.c.0.s8 %v908
      %v939 = vunpack.c.1.s8 %v908
      %v940 = vunpack.c.0.s8 %v909
      %v941 = vunpack.c.1.s8 %v909
      %vm942 = vcmp.ne.s32.totalorder %v910, 0
      %vm943 = vcmp.ne.s32.totalorder %v911, 0
      %vm944 = vcmp.ne.s32.totalorder %v912, 0
      %vm945 = vcmp.ne.s32.totalorder %v913, 0
      %vm946 = vcmp.ne.s32.totalorder %v914, 0
      %vm947 = vcmp.ne.s32.totalorder %v915, 0
      %vm948 = vcmp.ne.s32.totalorder %v916, 0
      %vm949 = vcmp.ne.s32.totalorder %v917, 0
      %vm950 = vcmp.ne.s32.totalorder %v918, 0
      %vm951 = vcmp.ne.s32.totalorder %v919, 0
      %vm952 = vcmp.ne.s32.totalorder %v920, 0
      %vm953 = vcmp.ne.s32.totalorder %v921, 0
      %vm954 = vcmp.ne.s32.totalorder %v922, 0
      %vm955 = vcmp.ne.s32.totalorder %v923, 0
      %vm956 = vcmp.ne.s32.totalorder %v924, 0
      %vm957 = vcmp.ne.s32.totalorder %v925, 0
      %vm958 = vcmp.ne.s32.totalorder %v926, 0
      %vm959 = vcmp.ne.s32.totalorder %v927, 0
      %vm960 = vcmp.ne.s32.totalorder %v928, 0
      %vm961 = vcmp.ne.s32.totalorder %v929, 0
      %vm962 = vcmp.ne.s32.totalorder %v930, 0
      %vm963 = vcmp.ne.s32.totalorder %v931, 0
      %vm964 = vcmp.ne.s32.totalorder %v932, 0
      %vm965 = vcmp.ne.s32.totalorder %v933, 0
      %vm966 = vcmp.ne.s32.totalorder %v934, 0
      %vm967 = vcmp.ne.s32.totalorder %v935, 0
      %vm968 = vcmp.ne.s32.totalorder %v936, 0
      %vm969 = vcmp.ne.s32.totalorder %v937, 0
      %vm970 = vcmp.ne.s32.totalorder %v938, 0
      %vm971 = vcmp.ne.s32.totalorder %v939, 0
      %vm972 = vcmp.ne.s32.totalorder %v940, 0
      %vm973 = vcmp.ne.s32.totalorder %v941, 0
      %v974 = vsel %vm942, %v774, -1e+30
      %v975 = vsel %vm943, %v775, -1e+30
      %v976 = vsel %vm944, %v776, -1e+30
      %v977 = vsel %vm945, %v777, -1e+30
      %v978 = vsel %vm946, %v778, -1e+30
      %v979 = vsel %vm947, %v779, -1e+30
      %v980 = vsel %vm948, %v780, -1e+30
      %v981 = vsel %vm949, %v781, -1e+30
      %v982 = vsel %vm950, %v782, -1e+30
      %v983 = vsel %vm951, %v783, -1e+30
      %v984 = vsel %vm952, %v784, -1e+30
      %v985 = vsel %vm953, %v785, -1e+30
      %v986 = vsel %vm954, %v786, -1e+30
      %v987 = vsel %vm955, %v787, -1e+30
      %v988 = vsel %vm956, %v788, -1e+30
      %v989 = vsel %vm957, %v789, -1e+30
      %v990 = vsel %vm958, %v790, -1e+30
      %v991 = vsel %vm959, %v791, -1e+30
      %v992 = vsel %vm960, %v792, -1e+30
      %v993 = vsel %vm961, %v793, -1e+30
      %v994 = vsel %vm962, %v794, -1e+30
      %v995 = vsel %vm963, %v795, -1e+30
      %v996 = vsel %vm964, %v796, -1e+30
      %v997 = vsel %vm965, %v797, -1e+30
      %v998 = vsel %vm966, %v798, -1e+30
      %v999 = vsel %vm967, %v799, -1e+30
      %v1000 = vsel %vm968, %v800, -1e+30
      %v1001 = vsel %vm969, %v801, -1e+30
      %v1002 = vsel %vm970, %v802, -1e+30
      %v1003 = vsel %vm971, %v803, -1e+30
      %v1004 = vsel %vm972, %v804, -1e+30
      %v1005 = vsel %vm973, %v805, -1e+30
      %v1006 = vld [vmem:[#allocation2] sm:$0xff]
      %v1007 = vld [vmem:[#allocation2 + $0x8] sm:$0xff]
      %v1008 = vld [vmem:[#allocation2 + $0x10] sm:$0xff]
      %v1009 = vld [vmem:[#allocation2 + $0x18] sm:$0xff]
      %v1010 = vld [vmem:[#allocation2 + $0x20] sm:$0xff]
      %v1011 = vld [vmem:[#allocation2 + $0x28] sm:$0xff]
      %v1012 = vld [vmem:[#allocation2 + $0x30] sm:$0xff]
      %v1013 = vld [vmem:[#allocation2 + $0x38] sm:$0xff]
      %v1014 = vld [vmem:[#allocation2 + $0x40] sm:$0xff]
      %v1015 = vld [vmem:[#allocation2 + $0x48] sm:$0xff]
      %v1016 = vld [vmem:[#allocation2 + $0x50] sm:$0xff]
      %v1017 = vld [vmem:[#allocation2 + $0x58] sm:$0xff]
      %v1018 = vld [vmem:[#allocation2 + $0x60] sm:$0xff]
      %v1019 = vld [vmem:[#allocation2 + $0x68] sm:$0xff]
      %v1020 = vld [vmem:[#allocation2 + $0x70] sm:$0xff]
      %v1021 = vld [vmem:[#allocation2 + $0x78] sm:$0xff]
      %v1022 = vmax.f32 %v974, %v975
      %1023 = vmax.xlane.f32.xlu0 %v1022
      %v1024 = vpop.xlane.xlu0 %1023
      %v1025 = vmax.f32 %v976, %v977
      %1026 = vmax.xlane.f32.xlu0 %v1025
      %v1027 = vpop.xlane.xlu0 %1026
      %v1028 = vmax.f32 %v978, %v979
      %1029 = vmax.xlane.f32.xlu0 %v1028
      %v1030 = vpop.xlane.xlu0 %1029
      %v1031 = vmax.f32 %v980, %v981
      %1032 = vmax.xlane.f32.xlu0 %v1031
      %v1033 = vpop.xlane.xlu0 %1032
      %v1034 = vmax.f32 %v982, %v983
      %1035 = vmax.xlane.f32.xlu0 %v1034
      %v1036 = vpop.xlane.xlu0 %1035
      %v1037 = vmax.f32 %v984, %v985
      %1038 = vmax.xlane.f32.xlu0 %v1037
      %v1039 = vpop.xlane.xlu0 %1038
      %v1040 = vmax.f32 %v986, %v987
      %1041 = vmax.xlane.f32.xlu0 %v1040
      %v1042 = vpop.xlane.xlu0 %1041
      %v1043 = vmax.f32 %v988, %v989
      %1044 = vmax.xlane.f32.xlu0 %v1043
      %v1045 = vpop.xlane.xlu0 %1044
      %v1046 = vmax.f32 %v990, %v991
      %1047 = vmax.xlane.f32.xlu0 %v1046
      %v1048 = vpop.xlane.xlu0 %1047
      %v1049 = vmax.f32 %v992, %v993
      %1050 = vmax.xlane.f32.xlu0 %v1049
      %v1051 = vpop.xlane.xlu0 %1050
      %v1052 = vmax.f32 %v994, %v995
      %1053 = vmax.xlane.f32.xlu0 %v1052
      %v1054 = vpop.xlane.xlu0 %1053
      %v1055 = vmax.f32 %v996, %v997
      %1056 = vmax.xlane.f32.xlu0 %v1055
      %v1057 = vpop.xlane.xlu0 %1056
      %v1058 = vmax.f32 %v998, %v999
      %1059 = vmax.xlane.f32.xlu0 %v1058
      %v1060 = vpop.xlane.xlu0 %1059
      %v1061 = vmax.f32 %v1000, %v1001
      %1062 = vmax.xlane.f32.xlu0 %v1061
      %v1063 = vpop.xlane.xlu0 %1062
      %v1064 = vmax.f32 %v1002, %v1003
      %1065 = vmax.xlane.f32.xlu0 %v1064
      %v1066 = vpop.xlane.xlu0 %1065
      %v1067 = vmax.f32 %v1004, %v1005
      %1068 = vmax.xlane.f32.xlu0 %v1067
      %v1069 = vpop.xlane.xlu0 %1068
      %v1070 = vmax.f32 %v1006, %v1024
      %v1071 = vmax.f32 %v1007, %v1027
      %v1072 = vmax.f32 %v1008, %v1030
      %v1073 = vmax.f32 %v1009, %v1033
      %v1074 = vmax.f32 %v1010, %v1036
      %v1075 = vmax.f32 %v1011, %v1039
      %v1076 = vmax.f32 %v1012, %v1042
      %v1077 = vmax.f32 %v1013, %v1045
      %v1078 = vmax.f32 %v1014, %v1048
      %v1079 = vmax.f32 %v1015, %v1051
      %v1080 = vmax.f32 %v1016, %v1054
      %v1081 = vmax.f32 %v1017, %v1057
      %v1082 = vmax.f32 %v1018, %v1060
      %v1083 = vmax.f32 %v1019, %v1063
      %v1084 = vmax.f32 %v1020, %v1066
      %v1085 = vmax.f32 %v1021, %v1069
      %v1086 = vsub.f32 %v1006, %v1070
      %v1087 = vsub.f32 %v1007, %v1071
      %v1088 = vsub.f32 %v1008, %v1072
      %v1089 = vsub.f32 %v1009, %v1073
      %v1090 = vsub.f32 %v1010, %v1074
      %v1091 = vsub.f32 %v1011, %v1075
      %v1092 = vsub.f32 %v1012, %v1076
      %v1093 = vsub.f32 %v1013, %v1077
      %v1094 = vsub.f32 %v1014, %v1078
      %v1095 = vsub.f32 %v1015, %v1079
      %v1096 = vsub.f32 %v1016, %v1080
      %v1097 = vsub.f32 %v1017, %v1081
      %v1098 = vsub.f32 %v1018, %v1082
      %v1099 = vsub.f32 %v1019, %v1083
      %v1100 = vsub.f32 %v1020, %v1084
      %v1101 = vsub.f32 %v1021, %v1085
      %v1102 = vmul.f32 %v1086, 1.442695
      %v1103 = vpow.pop %v1102
      %v1104 = vmul.f32 %v1087, 1.442695
      %v1105 = vpow.pop %v1104
      %v1106 = vmul.f32 %v1088, 1.442695
      %v1107 = vpow.pop %v1106
      %v1108 = vmul.f32 %v1089, 1.442695
      %v1109 = vpow.pop %v1108
      %v1110 = vmul.f32 %v1090, 1.442695
      %v1111 = vpow.pop %v1110
      %v1112 = vmul.f32 %v1091, 1.442695
      %v1113 = vpow.pop %v1112
      %v1114 = vmul.f32 %v1092, 1.442695
      %v1115 = vpow.pop %v1114
      %v1116 = vmul.f32 %v1093, 1.442695
      %v1117 = vpow.pop %v1116
      %v1118 = vmul.f32 %v1094, 1.442695
      %v1119 = vpow.pop %v1118
      %v1120 = vmul.f32 %v1095, 1.442695
      %v1121 = vpow.pop %v1120
      %v1122 = vmul.f32 %v1096, 1.442695
      %v1123 = vpow.pop %v1122
      %v1124 = vmul.f32 %v1097, 1.442695
      %v1125 = vpow.pop %v1124
      %v1126 = vmul.f32 %v1098, 1.442695
      %v1127 = vpow.pop %v1126
      %v1128 = vmul.f32 %v1099, 1.442695
      %v1129 = vpow.pop %v1128
      %v1130 = vmul.f32 %v1100, 1.442695
      %v1131 = vpow.pop %v1130
      %v1132 = vmul.f32 %v1101, 1.442695
      %v1133 = vpow.pop %v1132
      %1135 = vset.pattern.permute.xlu0 0
      %1136 = vperm.xlu0 %1135, %v1070
      %v1137 = vpop.permute.xlu0 %1136
      %1140 = vset.pattern.permute.xlu0 0
      %1141 = vperm.xlu0 %1140, %v1071
      %v1142 = vpop.permute.xlu0 %1141
      %1145 = vset.pattern.permute.xlu0 0
      %1146 = vperm.xlu0 %1145, %v1072
      %v1147 = vpop.permute.xlu0 %1146
      %1150 = vset.pattern.permute.xlu0 0
      %1151 = vperm.xlu0 %1150, %v1073
      %v1152 = vpop.permute.xlu0 %1151
      %1155 = vset.pattern.permute.xlu0 0
      %1156 = vperm.xlu0 %1155, %v1074
      %v1157 = vpop.permute.xlu0 %1156
      %1160 = vset.pattern.permute.xlu0 0
      %1161 = vperm.xlu0 %1160, %v1075
      %v1162 = vpop.permute.xlu0 %1161
      %1165 = vset.pattern.permute.xlu0 0
      %1166 = vperm.xlu0 %1165, %v1076
      %v1167 = vpop.permute.xlu0 %1166
      %1170 = vset.pattern.permute.xlu0 0
      %1171 = vperm.xlu0 %1170, %v1077
      %v1172 = vpop.permute.xlu0 %1171
      %1175 = vset.pattern.permute.xlu0 0
      %1176 = vperm.xlu0 %1175, %v1078
      %v1177 = vpop.permute.xlu0 %1176
      %1180 = vset.pattern.permute.xlu0 0
      %1181 = vperm.xlu0 %1180, %v1079
      %v1182 = vpop.permute.xlu0 %1181
      %1185 = vset.pattern.permute.xlu0 0
      %1186 = vperm.xlu0 %1185, %v1080
      %v1187 = vpop.permute.xlu0 %1186
      %1190 = vset.pattern.permute.xlu0 0
      %1191 = vperm.xlu0 %1190, %v1081
      %v1192 = vpop.permute.xlu0 %1191
      %1195 = vset.pattern.permute.xlu0 0
      %1196 = vperm.xlu0 %1195, %v1082
      %v1197 = vpop.permute.xlu0 %1196
      %1200 = vset.pattern.permute.xlu0 0
      %1201 = vperm.xlu0 %1200, %v1083
      %v1202 = vpop.permute.xlu0 %1201
      %1205 = vset.pattern.permute.xlu0 0
      %1206 = vperm.xlu0 %1205, %v1084
      %v1207 = vpop.permute.xlu0 %1206
      %1210 = vset.pattern.permute.xlu0 0
      %1211 = vperm.xlu0 %1210, %v1085
      %v1212 = vpop.permute.xlu0 %1211
      %v1214 = vsub.f32 %v974, %v1137
      %v1215 = vsub.f32 %v975, %v1137
      %v1216 = vsub.f32 %v976, %v1142
      %v1217 = vsub.f32 %v977, %v1142
      %v1218 = vsub.f32 %v978, %v1147
      %v1219 = vsub.f32 %v979, %v1147
      %v1220 = vsub.f32 %v980, %v1152
      %v1221 = vsub.f32 %v981, %v1152
      %v1222 = vsub.f32 %v982, %v1157
      %v1223 = vsub.f32 %v983, %v1157
      %v1224 = vsub.f32 %v984, %v1162
      %v1225 = vsub.f32 %v985, %v1162
      %v1226 = vsub.f32 %v986, %v1167
      %v1227 = vsub.f32 %v987, %v1167
      %v1228 = vsub.f32 %v988, %v1172
      %v1229 = vsub.f32 %v989, %v1172
      %v1230 = vsub.f32 %v990, %v1177
      %v1231 = vsub.f32 %v991, %v1177
      %v1232 = vsub.f32 %v992, %v1182
      %v1233 = vsub.f32 %v993, %v1182
      %v1234 = vsub.f32 %v994, %v1187
      %v1235 = vsub.f32 %v995, %v1187
      %v1236 = vsub.f32 %v996, %v1192
      %v1237 = vsub.f32 %v997, %v1192
      %v1238 = vsub.f32 %v998, %v1197
      %v1239 = vsub.f32 %v999, %v1197
      %v1240 = vsub.f32 %v1000, %v1202
      %v1241 = vsub.f32 %v1001, %v1202
      %v1242 = vsub.f32 %v1002, %v1207
      %v1243 = vsub.f32 %v1003, %v1207
      %v1244 = vsub.f32 %v1004, %v1212
      %v1245 = vsub.f32 %v1005, %v1212
      %v1246 = vmul.f32 %v1214, 1.442695
      %v1247 = vpow.pop %v1246
      %v1248 = vmul.f32 %v1215, 1.442695
      %v1249 = vpow.pop %v1248
      %v1250 = vmul.f32 %v1216, 1.442695
      %v1251 = vpow.pop %v1250
      %v1252 = vmul.f32 %v1217, 1.442695
      %v1253 = vpow.pop %v1252
      %v1254 = vmul.f32 %v1218, 1.442695
      %v1255 = vpow.pop %v1254
      %v1256 = vmul.f32 %v1219, 1.442695
      %v1257 = vpow.pop %v1256
      %v1258 = vmul.f32 %v1220, 1.442695
      %v1259 = vpow.pop %v1258
      %v1260 = vmul.f32 %v1221, 1.442695
      %v1261 = vpow.pop %v1260
      %v1262 = vmul.f32 %v1222, 1.442695
      %v1263 = vpow.pop %v1262
      %v1264 = vmul.f32 %v1223, 1.442695
      %v1265 = vpow.pop %v1264
      %v1266 = vmul.f32 %v1224, 1.442695
      %v1267 = vpow.pop %v1266
      %v1268 = vmul.f32 %v1225, 1.442695
      %v1269 = vpow.pop %v1268
      %v1270 = vmul.f32 %v1226, 1.442695
      %v1271 = vpow.pop %v1270
      %v1272 = vmul.f32 %v1227, 1.442695
      %v1273 = vpow.pop %v1272
      %v1274 = vmul.f32 %v1228, 1.442695
      %v1275 = vpow.pop %v1274
      %v1276 = vmul.f32 %v1229, 1.442695
      %v1277 = vpow.pop %v1276
      %v1278 = vmul.f32 %v1230, 1.442695
      %v1279 = vpow.pop %v1278
      %v1280 = vmul.f32 %v1231, 1.442695
      %v1281 = vpow.pop %v1280
      %v1282 = vmul.f32 %v1232, 1.442695
      %v1283 = vpow.pop %v1282
      %v1284 = vmul.f32 %v1233, 1.442695
      %v1285 = vpow.pop %v1284
      %v1286 = vmul.f32 %v1234, 1.442695
      %v1287 = vpow.pop %v1286
      %v1288 = vmul.f32 %v1235, 1.442695
      %v1289 = vpow.pop %v1288
      %v1290 = vmul.f32 %v1236, 1.442695
      %v1291 = vpow.pop %v1290
      %v1292 = vmul.f32 %v1237, 1.442695
      %v1293 = vpow.pop %v1292
      %v1294 = vmul.f32 %v1238, 1.442695
      %v1295 = vpow.pop %v1294
      %v1296 = vmul.f32 %v1239, 1.442695
      %v1297 = vpow.pop %v1296
      %v1298 = vmul.f32 %v1240, 1.442695
      %v1299 = vpow.pop %v1298
      %v1300 = vmul.f32 %v1241, 1.442695
      %v1301 = vpow.pop %v1300
      %v1302 = vmul.f32 %v1242, 1.442695
      %v1303 = vpow.pop %v1302
      %v1304 = vmul.f32 %v1243, 1.442695
      %v1305 = vpow.pop %v1304
      %v1306 = vmul.f32 %v1244, 1.442695
      %v1307 = vpow.pop %v1306
      %v1308 = vmul.f32 %v1245, 1.442695
      %v1309 = vpow.pop %v1308
      %v1310 = vld [vmem:[#allocation3] sm:$0xff]
      %v1311 = vld [vmem:[#allocation3 + $0x8] sm:$0xff]
      %v1312 = vld [vmem:[#allocation3 + $0x10] sm:$0xff]
      %v1313 = vld [vmem:[#allocation3 + $0x18] sm:$0xff]
      %v1314 = vld [vmem:[#allocation3 + $0x20] sm:$0xff]
      %v1315 = vld [vmem:[#allocation3 + $0x28] sm:$0xff]
      %v1316 = vld [vmem:[#allocation3 + $0x30] sm:$0xff]
      %v1317 = vld [vmem:[#allocation3 + $0x38] sm:$0xff]
      %v1318 = vld [vmem:[#allocation3 + $0x40] sm:$0xff]
      %v1319 = vld [vmem:[#allocation3 + $0x48] sm:$0xff]
      %v1320 = vld [vmem:[#allocation3 + $0x50] sm:$0xff]
      %v1321 = vld [vmem:[#allocation3 + $0x58] sm:$0xff]
      %v1322 = vld [vmem:[#allocation3 + $0x60] sm:$0xff]
      %v1323 = vld [vmem:[#allocation3 + $0x68] sm:$0xff]
      %v1324 = vld [vmem:[#allocation3 + $0x70] sm:$0xff]
      %v1325 = vld [vmem:[#allocation3 + $0x78] sm:$0xff]
      %v1326 = vmul.f32 %v1103, %v1310
      %v1327 = vmul.f32 %v1105, %v1311
      %v1328 = vmul.f32 %v1107, %v1312
      %v1329 = vmul.f32 %v1109, %v1313
      %v1330 = vmul.f32 %v1111, %v1314
      %v1331 = vmul.f32 %v1113, %v1315
      %v1332 = vmul.f32 %v1115, %v1316
      %v1333 = vmul.f32 %v1117, %v1317
      %v1334 = vmul.f32 %v1119, %v1318
      %v1335 = vmul.f32 %v1121, %v1319
      %v1336 = vmul.f32 %v1123, %v1320
      %v1337 = vmul.f32 %v1125, %v1321
      %v1338 = vmul.f32 %v1127, %v1322
      %v1339 = vmul.f32 %v1129, %v1323
      %v1340 = vmul.f32 %v1131, %v1324
      %v1341 = vmul.f32 %v1133, %v1325
      %v1342 = vadd.f32 %v1247, %v1249
      %1343 = vadd.xlane.f32.xlu0 %v1342
      %v1344 = vpop.xlane.xlu0 %1343
      %v1345 = vadd.f32 %v1251, %v1253
      %1346 = vadd.xlane.f32.xlu0 %v1345
      %v1347 = vpop.xlane.xlu0 %1346
      %v1348 = vadd.f32 %v1255, %v1257
      %1349 = vadd.xlane.f32.xlu0 %v1348
      %v1350 = vpop.xlane.xlu0 %1349
      %v1351 = vadd.f32 %v1259, %v1261
      %1352 = vadd.xlane.f32.xlu0 %v1351
      %v1353 = vpop.xlane.xlu0 %1352
      %v1354 = vadd.f32 %v1263, %v1265
      %1355 = vadd.xlane.f32.xlu0 %v1354
      %v1356 = vpop.xlane.xlu0 %1355
      %v1357 = vadd.f32 %v1267, %v1269
      %1358 = vadd.xlane.f32.xlu0 %v1357
      %v1359 = vpop.xlane.xlu0 %1358
      %v1360 = vadd.f32 %v1271, %v1273
      %1361 = vadd.xlane.f32.xlu0 %v1360
      %v1362 = vpop.xlane.xlu0 %1361
      %v1363 = vadd.f32 %v1275, %v1277
      %1364 = vadd.xlane.f32.xlu0 %v1363
      %v1365 = vpop.xlane.xlu0 %1364
      %v1366 = vadd.f32 %v1279, %v1281
      %1367 = vadd.xlane.f32.xlu0 %v1366
      %v1368 = vpop.xlane.xlu0 %1367
      %v1369 = vadd.f32 %v1283, %v1285
      %1370 = vadd.xlane.f32.xlu0 %v1369
      %v1371 = vpop.xlane.xlu0 %1370
      %v1372 = vadd.f32 %v1287, %v1289
      %1373 = vadd.xlane.f32.xlu0 %v1372
      %v1374 = vpop.xlane.xlu0 %1373
      %v1375 = vadd.f32 %v1291, %v1293
      %1376 = vadd.xlane.f32.xlu0 %v1375
      %v1377 = vpop.xlane.xlu0 %1376
      %v1378 = vadd.f32 %v1295, %v1297
      %1379 = vadd.xlane.f32.xlu0 %v1378
      %v1380 = vpop.xlane.xlu0 %1379
      %v1381 = vadd.f32 %v1299, %v1301
      %1382 = vadd.xlane.f32.xlu0 %v1381
      %v1383 = vpop.xlane.xlu0 %1382
      %v1384 = vadd.f32 %v1303, %v1305
      %1385 = vadd.xlane.f32.xlu0 %v1384
      %v1386 = vpop.xlane.xlu0 %1385
      %v1387 = vadd.f32 %v1307, %v1309
      %1388 = vadd.xlane.f32.xlu0 %v1387
      %v1389 = vpop.xlane.xlu0 %1388
      %v1390 = vadd.f32 %v1326, %v1344
      %v1391 = vadd.f32 %v1327, %v1347
      %v1392 = vadd.f32 %v1328, %v1350
      %v1393 = vadd.f32 %v1329, %v1353
      %v1394 = vadd.f32 %v1330, %v1356
      %v1395 = vadd.f32 %v1331, %v1359
      %v1396 = vadd.f32 %v1332, %v1362
      %v1397 = vadd.f32 %v1333, %v1365
      %v1398 = vadd.f32 %v1334, %v1368
      %v1399 = vadd.f32 %v1335, %v1371
      %v1400 = vadd.f32 %v1336, %v1374
      %v1401 = vadd.f32 %v1337, %v1377
      %v1402 = vadd.f32 %v1338, %v1380
      %v1403 = vadd.f32 %v1339, %v1383
      %v1404 = vadd.f32 %v1340, %v1386
      %v1405 = vadd.f32 %v1341, %v1389
      %vm1406 = vcmask 7168
      %1407 = vst.msk [vmem:[#allocation3] sm:$0xff] %vm1406, %v1390
      %1408 = vst.msk [vmem:[#allocation3 + $0x8] sm:$0xff] %vm1406, %v1391
      %1409 = vst.msk [vmem:[#allocation3 + $0x10] sm:$0xff] %vm1406, %v1392
      %1410 = vst.msk [vmem:[#allocation3 + $0x18] sm:$0xff] %vm1406, %v1393
      %1411 = vst.msk [vmem:[#allocation3 + $0x20] sm:$0xff] %vm1406, %v1394
      %1412 = vst.msk [vmem:[#allocation3 + $0x28] sm:$0xff] %vm1406, %v1395
      %1413 = vst.msk [vmem:[#allocation3 + $0x30] sm:$0xff] %vm1406, %v1396
      %1414 = vst.msk [vmem:[#allocation3 + $0x38] sm:$0xff] %vm1406, %v1397
      %1415 = vst.msk [vmem:[#allocation3 + $0x40] sm:$0xff] %vm1406, %v1398
      %1416 = vst.msk [vmem:[#allocation3 + $0x48] sm:$0xff] %vm1406, %v1399
      %1417 = vst.msk [vmem:[#allocation3 + $0x50] sm:$0xff] %vm1406, %v1400
      %1418 = vst.msk [vmem:[#allocation3 + $0x58] sm:$0xff] %vm1406, %v1401
      %1419 = vst.msk [vmem:[#allocation3 + $0x60] sm:$0xff] %vm1406, %v1402
      %1420 = vst.msk [vmem:[#allocation3 + $0x68] sm:$0xff] %vm1406, %v1403
      %1421 = vst.msk [vmem:[#allocation3 + $0x70] sm:$0xff] %vm1406, %v1404
      %1422 = vst.msk [vmem:[#allocation3 + $0x78] sm:$0xff] %vm1406, %v1405
      %v1423 = vld [vmem:[#allocation4] sm:$0xff]
      %v1424 = vld [vmem:[#allocation4 + $0x8] sm:$0xff]
      %v1425 = vld [vmem:[#allocation4 + $0x10] sm:$0xff]
      %v1426 = vld [vmem:[#allocation4 + $0x18] sm:$0xff]
      %v1427 = vld [vmem:[#allocation4 + $0x20] sm:$0xff]
      %v1428 = vld [vmem:[#allocation4 + $0x28] sm:$0xff]
      %v1429 = vld [vmem:[#allocation4 + $0x30] sm:$0xff]
      %v1430 = vld [vmem:[#allocation4 + $0x38] sm:$0xff]
      %v1431 = vld [vmem:[#allocation4 + $0x40] sm:$0xff]
      %v1432 = vld [vmem:[#allocation4 + $0x48] sm:$0xff]
      %v1433 = vld [vmem:[#allocation4 + $0x50] sm:$0xff]
      %v1434 = vld [vmem:[#allocation4 + $0x58] sm:$0xff]
      %v1435 = vld [vmem:[#allocation4 + $0x60] sm:$0xff]
      %v1436 = vld [vmem:[#allocation4 + $0x68] sm:$0xff]
      %v1437 = vld [vmem:[#allocation4 + $0x70] sm:$0xff]
      %v1438 = vld [vmem:[#allocation4 + $0x78] sm:$0xff]
      %1440 = vset.pattern.permute.xlu0 0
      %1441 = vperm.xlu0 %1440, %v1103
      %v1442 = vpop.permute.xlu0 %1441
      %1445 = vset.pattern.permute.xlu0 0
      %1446 = vperm.xlu0 %1445, %v1105
      %v1447 = vpop.permute.xlu0 %1446
      %1450 = vset.pattern.permute.xlu0 0
      %1451 = vperm.xlu0 %1450, %v1107
      %v1452 = vpop.permute.xlu0 %1451
      %1455 = vset.pattern.permute.xlu0 0
      %1456 = vperm.xlu0 %1455, %v1109
      %v1457 = vpop.permute.xlu0 %1456
      %1460 = vset.pattern.permute.xlu0 0
      %1461 = vperm.xlu0 %1460, %v1111
      %v1462 = vpop.permute.xlu0 %1461
      %1465 = vset.pattern.permute.xlu0 0
      %1466 = vperm.xlu0 %1465, %v1113
      %v1467 = vpop.permute.xlu0 %1466
      %1470 = vset.pattern.permute.xlu0 0
      %1471 = vperm.xlu0 %1470, %v1115
      %v1472 = vpop.permute.xlu0 %1471
      %1475 = vset.pattern.permute.xlu0 0
      %1476 = vperm.xlu0 %1475, %v1117
      %v1477 = vpop.permute.xlu0 %1476
      %1480 = vset.pattern.permute.xlu0 0
      %1481 = vperm.xlu0 %1480, %v1119
      %v1482 = vpop.permute.xlu0 %1481
      %1485 = vset.pattern.permute.xlu0 0
      %1486 = vperm.xlu0 %1485, %v1121
      %v1487 = vpop.permute.xlu0 %1486
      %1490 = vset.pattern.permute.xlu0 0
      %1491 = vperm.xlu0 %1490, %v1123
      %v1492 = vpop.permute.xlu0 %1491
      %1495 = vset.pattern.permute.xlu0 0
      %1496 = vperm.xlu0 %1495, %v1125
      %v1497 = vpop.permute.xlu0 %1496
      %1500 = vset.pattern.permute.xlu0 0
      %1501 = vperm.xlu0 %1500, %v1127
      %v1502 = vpop.permute.xlu0 %1501
      %1505 = vset.pattern.permute.xlu0 0
      %1506 = vperm.xlu0 %1505, %v1129
      %v1507 = vpop.permute.xlu0 %1506
      %1510 = vset.pattern.permute.xlu0 0
      %1511 = vperm.xlu0 %1510, %v1131
      %v1512 = vpop.permute.xlu0 %1511
      %1515 = vset.pattern.permute.xlu0 0
      %1516 = vperm.xlu0 %1515, %v1133
      %v1517 = vpop.permute.xlu0 %1516
      %v1519 = vmul.f32 %v1442, %v1423
      %v1520 = vmul.f32 %v1447, %v1424
      %v1521 = vmul.f32 %v1452, %v1425
      %v1522 = vmul.f32 %v1457, %v1426
      %v1523 = vmul.f32 %v1462, %v1427
      %v1524 = vmul.f32 %v1467, %v1428
      %v1525 = vmul.f32 %v1472, %v1429
      %v1526 = vmul.f32 %v1477, %v1430
      %v1527 = vmul.f32 %v1482, %v1431
      %v1528 = vmul.f32 %v1487, %v1432
      %v1529 = vmul.f32 %v1492, %v1433
      %v1530 = vmul.f32 %v1497, %v1434
      %v1531 = vmul.f32 %v1502, %v1435
      %v1532 = vmul.f32 %v1507, %v1436
      %v1533 = vmul.f32 %v1512, %v1437
      %v1534 = vmul.f32 %v1517, %v1438
      %v1535 = vpack.c.bf16 %v1251, %v1247
      %v1536 = vpack.c.bf16 %v1253, %v1249
      %v1537 = vpack.c.bf16 %v1259, %v1255
      %v1538 = vpack.c.bf16 %v1261, %v1257
      %v1539 = vpack.c.bf16 %v1267, %v1263
      %v1540 = vpack.c.bf16 %v1269, %v1265
      %v1541 = vpack.c.bf16 %v1275, %v1271
      %v1542 = vpack.c.bf16 %v1277, %v1273
      %v1543 = vpack.c.bf16 %v1283, %v1279
      %v1544 = vpack.c.bf16 %v1285, %v1281
      %v1545 = vpack.c.bf16 %v1291, %v1287
      %v1546 = vpack.c.bf16 %v1293, %v1289
      %v1547 = vpack.c.bf16 %v1299, %v1295
      %v1548 = vpack.c.bf16 %v1301, %v1297
      %v1549 = vpack.c.bf16 %v1307, %v1303
      %v1550 = vpack.c.bf16 %v1309, %v1305
      %v1583 = vunpack.c.l.b16 %v570
      %v1584 = vunpack.c.l.b16 %v571
      %v1585 = vunpack.c.l.b16 %v572
      %v1586 = vunpack.c.l.b16 %v573
      %v1587 = vunpack.c.l.b16 %v574
      %v1588 = vunpack.c.l.b16 %v575
      %v1589 = vunpack.c.l.b16 %v576
      %v1590 = vunpack.c.l.b16 %v577
      %v1591 = vunpack.c.l.b16 %v578
      %v1592 = vunpack.c.l.b16 %v579
      %v1593 = vunpack.c.l.b16 %v580
      %v1594 = vunpack.c.l.b16 %v581
      %v1595 = vunpack.c.l.b16 %v582
      %v1596 = vunpack.c.l.b16 %v583
      %v1597 = vunpack.c.l.b16 %v584
      %v1598 = vunpack.c.l.b16 %v585
      %v1599 = vunpack.c.l.b16 %v586
      %v1600 = vunpack.c.l.b16 %v587
      %v1601 = vunpack.c.l.b16 %v588
      %v1602 = vunpack.c.l.b16 %v589
      %v1603 = vunpack.c.l.b16 %v590
      %v1604 = vunpack.c.l.b16 %v591
      %v1605 = vunpack.c.l.b16 %v592
      %v1606 = vunpack.c.l.b16 %v593
      %v1607 = vunpack.c.l.b16 %v594
      %v1608 = vunpack.c.l.b16 %v595
      %v1609 = vunpack.c.l.b16 %v596
      %v1610 = vunpack.c.l.b16 %v597
      %v1611 = vunpack.c.l.b16 %v598
      %v1612 = vunpack.c.l.b16 %v599
      %v1613 = vunpack.c.l.b16 %v600
      %v1614 = vunpack.c.l.b16 %v601
      %v1615 = vpack.c.b16 %v1584, %v1583
      %v1616 = vpack.c.b16 %v1586, %v1585
      %v1617 = vpack.c.b16 %v1588, %v1587
      %v1618 = vpack.c.b16 %v1590, %v1589
      %v1619 = vpack.c.b16 %v1592, %v1591
      %v1620 = vpack.c.b16 %v1594, %v1593
      %v1621 = vpack.c.b16 %v1596, %v1595
      %v1622 = vpack.c.b16 %v1598, %v1597
      %v1623 = vpack.c.b16 %v1600, %v1599
      %v1624 = vpack.c.b16 %v1602, %v1601
      %v1625 = vpack.c.b16 %v1604, %v1603
      %v1626 = vpack.c.b16 %v1606, %v1605
      %v1627 = vpack.c.b16 %v1608, %v1607
      %v1628 = vpack.c.b16 %v1610, %v1609
      %v1629 = vpack.c.b16 %v1612, %v1611
      %v1630 = vpack.c.b16 %v1614, %v1613
      %1647 = vmatprep.subr.bf16.mxu0 0
      %1648 = vmatpush1.bf16.msra.mxu0 %v1615
      %1649 = vmatprep.subr.bf16.mxu0 0
      %1650 = vmatpush1.bf16.msra.mxu0 %v1616
      %1651 = vmatprep.subr.bf16.mxu0 0
      %1652 = vmatpush1.bf16.msra.mxu0 %v1617
      %1653 = vmatprep.subr.bf16.mxu0 0
      %1654 = vmatpush1.bf16.msra.mxu0 %v1618
      %1655 = vmatprep.subr.bf16.mxu0 0
      %1656 = vmatpush1.bf16.msra.mxu0 %v1619
      %1657 = vmatprep.subr.bf16.mxu0 0
      %1658 = vmatpush1.bf16.msra.mxu0 %v1620
      %1659 = vmatprep.subr.bf16.mxu0 0
      %1660 = vmatpush1.bf16.msra.mxu0 %v1621
      %1661 = vmatprep.subr.bf16.mxu0 0
      %1662 = vmatpush1.bf16.msra.mxu0 %v1622
      %1663 = vmatprep.subr.bf16.mxu0 0
      %1664 = vmatpush1.bf16.msra.mxu0 %v1623
      %1665 = vmatprep.subr.bf16.mxu0 0
      %1666 = vmatpush1.bf16.msra.mxu0 %v1624
      %1667 = vmatprep.subr.bf16.mxu0 0
      %1668 = vmatpush1.bf16.msra.mxu0 %v1625
      %1669 = vmatprep.subr.bf16.mxu0 0
      %1670 = vmatpush1.bf16.msra.mxu0 %v1626
      %1671 = vmatprep.subr.bf16.mxu0 0
      %1672 = vmatpush1.bf16.msra.mxu0 %v1627
      %1673 = vmatprep.subr.bf16.mxu0 0
      %1674 = vmatpush1.bf16.msra.mxu0 %v1628
      %1675 = vmatprep.subr.bf16.mxu0 0
      %1676 = vmatpush1.bf16.msra.mxu0 %v1629
      %1677 = vmatprep.subr.bf16.mxu0 0
      %1678 = vmatpush1.bf16.msra.mxu0 %v1630
      %1679 = vmatprep.mubr.bf16.mxu0 %v1536
      %1680 = vmatmul.mubr.bf16.gmra.mrb[0].mxu0 %v1535
      %v1681 = vpop.f32.mrb[0].mxu0
      %v1682 = vadd.f32 0.0, %v1681
      %v1683 = vpop.f32.mrb[0].mxu0
      %v1684 = vpop.f32.mrb[0].mxu0
      %v1685 = vadd.f32 0.0, %v1684
      %v1686 = vpop.f32.mrb[0].mxu0
      %1687 = vmatprep.mubr.bf16.mxu0 %v1538
      %1688 = vmatmul.mubr.bf16.gmra.mrb[0].mxu0 %v1537
      %v1689 = vpop.f32.mrb[0].mxu0
      %v1690 = vadd.f32 0.0, %v1689
      %v1691 = vpop.f32.mrb[0].mxu0
      %v1692 = vpop.f32.mrb[0].mxu0
      %v1693 = vadd.f32 0.0, %v1692
      %v1694 = vpop.f32.mrb[0].mxu0
      %1695 = vmatprep.mubr.bf16.mxu0 %v1540
      %1696 = vmatmul.mubr.bf16.gmra.mrb[0].mxu0 %v1539
      %v1697 = vpop.f32.mrb[0].mxu0
      %v1698 = vadd.f32 0.0, %v1697
      %v1699 = vpop.f32.mrb[0].mxu0
      %v1700 = vpop.f32.mrb[0].mxu0
      %v1701 = vadd.f32 0.0, %v1700
      %v1702 = vpop.f32.mrb[0].mxu0
      %1703 = vmatprep.mubr.bf16.mxu0 %v1542
      %1704 = vmatmul.mubr.bf16.gmra.mrb[0].mxu0 %v1541
      %v1705 = vpop.f32.mrb[0].mxu0
      %v1706 = vadd.f32 0.0, %v1705
      %v1707 = vpop.f32.mrb[0].mxu0
      %v1708 = vpop.f32.mrb[0].mxu0
      %v1709 = vadd.f32 0.0, %v1708
      %v1710 = vpop.f32.mrb[0].mxu0
      %1711 = vmatprep.mubr.bf16.mxu0 %v1544
      %1712 = vmatmul.mubr.bf16.gmra.mrb[0].mxu0 %v1543
      %v1713 = vpop.f32.mrb[0].mxu0
      %v1714 = vadd.f32 0.0, %v1713
      %v1715 = vpop.f32.mrb[0].mxu0
      %v1716 = vpop.f32.mrb[0].mxu0
      %v1717 = vadd.f32 0.0, %v1716
      %v1718 = vpop.f32.mrb[0].mxu0
      %1719 = vmatprep.mubr.bf16.mxu0 %v1546
      %1720 = vmatmul.mubr.bf16.gmra.mrb[0].mxu0 %v1545
      %v1721 = vpop.f32.mrb[0].mxu0
      %v1722 = vadd.f32 0.0, %v1721
      %v1723 = vpop.f32.mrb[0].mxu0
      %v1724 = vpop.f32.mrb[0].mxu0
      %v1725 = vadd.f32 0.0, %v1724
      %v1726 = vpop.f32.mrb[0].mxu0
      %1727 = vmatprep.mubr.bf16.mxu0 %v1548
      %1728 = vmatmul.mubr.bf16.gmra.mrb[0].mxu0 %v1547
      %v1729 = vpop.f32.mrb[0].mxu0
      %v1730 = vadd.f32 0.0, %v1729
      %v1731 = vpop.f32.mrb[0].mxu0
      %v1732 = vpop.f32.mrb[0].mxu0
      %v1733 = vadd.f32 0.0, %v1732
      %v1734 = vpop.f32.mrb[0].mxu0
      %1735 = vmatprep.mubr.bf16.mxu0 %v1550
      %1736 = vmatmul.mubr.bf16.gmra.mrb[0].mxu0 %v1549
      %v1737 = vpop.f32.mrb[0].mxu0
      %v1738 = vadd.f32 0.0, %v1737
      %v1739 = vpop.f32.mrb[0].mxu0
      %v1740 = vpop.f32.mrb[0].mxu0
      %v1741 = vadd.f32 0.0, %v1740
      %v1742 = vpop.f32.mrb[0].mxu0
      %1743 = vdwg.mxu0
      %v1744 = vadd.f32 %v1519, %v1682
      %v1745 = vadd.f32 %v1520, %v1685
      %v1746 = vadd.f32 %v1521, %v1690
      %v1747 = vadd.f32 %v1522, %v1693
      %v1748 = vadd.f32 %v1523, %v1698
      %v1749 = vadd.f32 %v1524, %v1701
      %v1750 = vadd.f32 %v1525, %v1706
      %v1751 = vadd.f32 %v1526, %v1709
      %v1752 = vadd.f32 %v1527, %v1714
      %v1753 = vadd.f32 %v1528, %v1717
      %v1754 = vadd.f32 %v1529, %v1722
      %v1755 = vadd.f32 %v1530, %v1725
      %v1756 = vadd.f32 %v1531, %v1730
      %v1757 = vadd.f32 %v1532, %v1733
      %v1758 = vadd.f32 %v1533, %v1738
      %v1759 = vadd.f32 %v1534, %v1741
      %vm1760 = vcmask 64512
      %1761 = vst.msk [vmem:[#allocation4] sm:$0xff] %vm1760, %v1744
      %1762 = vst.msk [vmem:[#allocation4 + $0x8] sm:$0xff] %vm1760, %v1745
      %1763 = vst.msk [vmem:[#allocation4 + $0x10] sm:$0xff] %vm1760, %v1746
      %1764 = vst.msk [vmem:[#allocation4 + $0x18] sm:$0xff] %vm1760, %v1747
      %1765 = vst.msk [vmem:[#allocation4 + $0x20] sm:$0xff] %vm1760, %v1748
      %1766 = vst.msk [vmem:[#allocation4 + $0x28] sm:$0xff] %vm1760, %v1749
      %1767 = vst.msk [vmem:[#allocation4 + $0x30] sm:$0xff] %vm1760, %v1750
      %1768 = vst.msk [vmem:[#allocation4 + $0x38] sm:$0xff] %vm1760, %v1751
      %1769 = vst.msk [vmem:[#allocation4 + $0x40] sm:$0xff] %vm1760, %v1752
      %1770 = vst.msk [vmem:[#allocation4 + $0x48] sm:$0xff] %vm1760, %v1753
      %1771 = vst.msk [vmem:[#allocation4 + $0x50] sm:$0xff] %vm1760, %v1754
      %1772 = vst.msk [vmem:[#allocation4 + $0x58] sm:$0xff] %vm1760, %v1755
      %1773 = vst.msk [vmem:[#allocation4 + $0x60] sm:$0xff] %vm1760, %v1756
      %1774 = vst.msk [vmem:[#allocation4 + $0x68] sm:$0xff] %vm1760, %v1757
      %1775 = vst.msk [vmem:[#allocation4 + $0x70] sm:$0xff] %vm1760, %v1758
      %1776 = vst.msk [vmem:[#allocation4 + $0x78] sm:$0xff] %vm1760, %v1759
      %1777 = vst.msk [vmem:[#allocation2] sm:$0xff] %vm1406, %v1070
      %1778 = vst.msk [vmem:[#allocation2 + $0x8] sm:$0xff] %vm1406, %v1071
      %1779 = vst.msk [vmem:[#allocation2 + $0x10] sm:$0xff] %vm1406, %v1072
      %1780 = vst.msk [vmem:[#allocation2 + $0x18] sm:$0xff] %vm1406, %v1073
      %1781 = vst.msk [vmem:[#allocation2 + $0x20] sm:$0xff] %vm1406, %v1074
      %1782 = vst.msk [vmem:[#allocation2 + $0x28] sm:$0xff] %vm1406, %v1075
      %1783 = vst.msk [vmem:[#allocation2 + $0x30] sm:$0xff] %vm1406, %v1076
      %1784 = vst.msk [vmem:[#allocation2 + $0x38] sm:$0xff] %vm1406, %v1077
      %1785 = vst.msk [vmem:[#allocation2 + $0x40] sm:$0xff] %vm1406, %v1078
      %1786 = vst.msk [vmem:[#allocation2 + $0x48] sm:$0xff] %vm1406, %v1079
      %1787 = vst.msk [vmem:[#allocation2 + $0x50] sm:$0xff] %vm1406, %v1080
      %1788 = vst.msk [vmem:[#allocation2 + $0x58] sm:$0xff] %vm1406, %v1081
      %1789 = vst.msk [vmem:[#allocation2 + $0x60] sm:$0xff] %vm1406, %v1082
      %1790 = vst.msk [vmem:[#allocation2 + $0x68] sm:$0xff] %vm1406, %v1083
      %1791 = vst.msk [vmem:[#allocation2 + $0x70] sm:$0xff] %vm1406, %v1084
      %1792 = vst.msk [vmem:[#allocation2 + $0x78] sm:$0xff] %vm1406, %v1085
      %s1793 = scalar_lea.vmem %s375, 1
      %v1794 = vld [vmem:[%s1793] ss:$4 sm:$0x3]
      %v1795 = vld [vmem:[%s381] sm:$0xff]
      %v1796 = vld [vmem:[%s381 + $0x8] sm:$0xff]
      %v1797 = vld [vmem:[%s381 + $0x10] sm:$0xff]
      %v1798 = vld [vmem:[%s381 + $0x18] sm:$0xff]
      %v1799 = vld [vmem:[%s381 + $0x20] sm:$0xff]
      %v1800 = vld [vmem:[%s381 + $0x28] sm:$0xff]
      %v1801 = vld [vmem:[%s381 + $0x30] sm:$0xff]
      %v1802 = vld [vmem:[%s381 + $0x38] sm:$0xff]
      %v1803 = vld [vmem:[%s381 + $0x40] sm:$0xff]
      %v1804 = vld [vmem:[%s381 + $0x48] sm:$0xff]
      %v1805 = vld [vmem:[%s381 + $0x50] sm:$0xff]
      %v1806 = vld [vmem:[%s381 + $0x58] sm:$0xff]
      %v1807 = vld [vmem:[%s381 + $0x60] sm:$0xff]
      %v1808 = vld [vmem:[%s381 + $0x68] sm:$0xff]
      %v1809 = vld [vmem:[%s381 + $0x70] sm:$0xff]
      %v1810 = vld [vmem:[%s381 + $0x78] sm:$0xff]
      %1812 = vset.pattern.permute.xlu0 1
      %1813 = vperm.xlu0 %1812, %v1795
      %v1814 = vpop.permute.xlu0 %1813
      %1817 = vset.pattern.permute.xlu0 1
      %1818 = vperm.xlu0 %1817, %v1796
      %v1819 = vpop.permute.xlu0 %1818
      %1822 = vset.pattern.permute.xlu0 1
      %1823 = vperm.xlu0 %1822, %v1797
      %v1824 = vpop.permute.xlu0 %1823
      %1827 = vset.pattern.permute.xlu0 1
      %1828 = vperm.xlu0 %1827, %v1798
      %v1829 = vpop.permute.xlu0 %1828
      %1832 = vset.pattern.permute.xlu0 1
      %1833 = vperm.xlu0 %1832, %v1799
      %v1834 = vpop.permute.xlu0 %1833
      %1837 = vset.pattern.permute.xlu0 1
      %1838 = vperm.xlu0 %1837, %v1800
      %v1839 = vpop.permute.xlu0 %1838
      %1842 = vset.pattern.permute.xlu0 1
      %1843 = vperm.xlu0 %1842, %v1801
      %v1844 = vpop.permute.xlu0 %1843
      %1847 = vset.pattern.permute.xlu0 1
      %1848 = vperm.xlu0 %1847, %v1802
      %v1849 = vpop.permute.xlu0 %1848
      %1852 = vset.pattern.permute.xlu0 1
      %1853 = vperm.xlu0 %1852, %v1803
      %v1854 = vpop.permute.xlu0 %1853
      %1857 = vset.pattern.permute.xlu0 1
      %1858 = vperm.xlu0 %1857, %v1804
      %v1859 = vpop.permute.xlu0 %1858
      %1862 = vset.pattern.permute.xlu0 1
      %1863 = vperm.xlu0 %1862, %v1805
      %v1864 = vpop.permute.xlu0 %1863
      %1867 = vset.pattern.permute.xlu0 1
      %1868 = vperm.xlu0 %1867, %v1806
      %v1869 = vpop.permute.xlu0 %1868
      %1872 = vset.pattern.permute.xlu0 1
      %1873 = vperm.xlu0 %1872, %v1807
      %v1874 = vpop.permute.xlu0 %1873
      %1877 = vset.pattern.permute.xlu0 1
      %1878 = vperm.xlu0 %1877, %v1808
      %v1879 = vpop.permute.xlu0 %1878
      %1882 = vset.pattern.permute.xlu0 1
      %1883 = vperm.xlu0 %1882, %v1809
      %v1884 = vpop.permute.xlu0 %1883
      %1887 = vset.pattern.permute.xlu0 1
      %1888 = vperm.xlu0 %1887, %v1810
      %v1889 = vpop.permute.xlu0 %1888
      %v1892 = vlaneseq
      %v1893 = vshrl.u32 %v1892, 7
      %v1894 = vsub.s32 0, %v1893
      %v1895 = vrot.slane %v1794, %v1894
      %v1896 = vlaneseq
      %v1897 = vshrl.u32 %v1896, 7
      %v1898 = vsub.s32 1, %v1897
      %v1899 = vrot.slane %v1794, %v1898
      %v1902 = vadd.f32 %v1814, %v1895
      %v1903 = vadd.f32 %v1814, %v1899
      %v1904 = vadd.f32 %v1819, %v1895
      %v1905 = vadd.f32 %v1819, %v1899
      %v1906 = vadd.f32 %v1824, %v1895
      %v1907 = vadd.f32 %v1824, %v1899
      %v1908 = vadd.f32 %v1829, %v1895
      %v1909 = vadd.f32 %v1829, %v1899
      %v1910 = vadd.f32 %v1834, %v1895
      %v1911 = vadd.f32 %v1834, %v1899
      %v1912 = vadd.f32 %v1839, %v1895
      %v1913 = vadd.f32 %v1839, %v1899
      %v1914 = vadd.f32 %v1844, %v1895
      %v1915 = vadd.f32 %v1844, %v1899
      %v1916 = vadd.f32 %v1849, %v1895
      %v1917 = vadd.f32 %v1849, %v1899
      %v1918 = vadd.f32 %v1854, %v1895
      %v1919 = vadd.f32 %v1854, %v1899
      %v1920 = vadd.f32 %v1859, %v1895
      %v1921 = vadd.f32 %v1859, %v1899
      %v1922 = vadd.f32 %v1864, %v1895
      %v1923 = vadd.f32 %v1864, %v1899
      %v1924 = vadd.f32 %v1869, %v1895
      %v1925 = vadd.f32 %v1869, %v1899
      %v1926 = vadd.f32 %v1874, %v1895
      %v1927 = vadd.f32 %v1874, %v1899
      %v1928 = vadd.f32 %v1879, %v1895
      %v1929 = vadd.f32 %v1879, %v1899
      %v1930 = vadd.f32 %v1884, %v1895
      %v1931 = vadd.f32 %v1884, %v1899
      %v1932 = vadd.f32 %v1889, %v1895
      %v1933 = vadd.f32 %v1889, %v1899
      %v1934 = vmul.f32 %v1902, 0.2
      %v1935 = vmul.f32 %v1903, 0.2
      %v1936 = vmul.f32 %v1904, 0.2
      %v1937 = vmul.f32 %v1905, 0.2
      %v1938 = vmul.f32 %v1906, 0.2
      %v1939 = vmul.f32 %v1907, 0.2
      %v1940 = vmul.f32 %v1908, 0.2
      %v1941 = vmul.f32 %v1909, 0.2
      %v1942 = vmul.f32 %v1910, 0.2
      %v1943 = vmul.f32 %v1911, 0.2
      %v1944 = vmul.f32 %v1912, 0.2
      %v1945 = vmul.f32 %v1913, 0.2
      %v1946 = vmul.f32 %v1914, 0.2
      %v1947 = vmul.f32 %v1915, 0.2
      %v1948 = vmul.f32 %v1916, 0.2
      %v1949 = vmul.f32 %v1917, 0.2
      %v1950 = vmul.f32 %v1918, 0.2
      %v1951 = vmul.f32 %v1919, 0.2
      %v1952 = vmul.f32 %v1920, 0.2
      %v1953 = vmul.f32 %v1921, 0.2
      %v1954 = vmul.f32 %v1922, 0.2
      %v1955 = vmul.f32 %v1923, 0.2
      %v1956 = vmul.f32 %v1924, 0.2
      %v1957 = vmul.f32 %v1925, 0.2
      %v1958 = vmul.f32 %v1926, 0.2
      %v1959 = vmul.f32 %v1927, 0.2
      %v1960 = vmul.f32 %v1928, 0.2
      %v1961 = vmul.f32 %v1929, 0.2
      %v1962 = vmul.f32 %v1930, 0.2
      %v1963 = vmul.f32 %v1931, 0.2
      %v1964 = vmul.f32 %v1932, 0.2
      %v1965 = vmul.f32 %v1933, 0.2
      %v1966 = vmax.f32 %v1902, %v1934
      %v1967 = vmax.f32 %v1903, %v1935
      %v1968 = vmax.f32 %v1904, %v1936
      %v1969 = vmax.f32 %v1905, %v1937
      %v1970 = vmax.f32 %v1906, %v1938
      %v1971 = vmax.f32 %v1907, %v1939
      %v1972 = vmax.f32 %v1908, %v1940
      %v1973 = vmax.f32 %v1909, %v1941
      %v1974 = vmax.f32 %v1910, %v1942
      %v1975 = vmax.f32 %v1911, %v1943
      %v1976 = vmax.f32 %v1912, %v1944
      %v1977 = vmax.f32 %v1913, %v1945
      %v1978 = vmax.f32 %v1914, %v1946
      %v1979 = vmax.f32 %v1915, %v1947
      %v1980 = vmax.f32 %v1916, %v1948
      %v1981 = vmax.f32 %v1917, %v1949
      %v1982 = vmax.f32 %v1918, %v1950
      %v1983 = vmax.f32 %v1919, %v1951
      %v1984 = vmax.f32 %v1920, %v1952
      %v1985 = vmax.f32 %v1921, %v1953
      %v1986 = vmax.f32 %v1922, %v1954
      %v1987 = vmax.f32 %v1923, %v1955
      %v1988 = vmax.f32 %v1924, %v1956
      %v1989 = vmax.f32 %v1925, %v1957
      %v1990 = vmax.f32 %v1926, %v1958
      %v1991 = vmax.f32 %v1927, %v1959
      %v1992 = vmax.f32 %v1928, %v1960
      %v1993 = vmax.f32 %v1929, %v1961
      %v1994 = vmax.f32 %v1930, %v1962
      %v1995 = vmax.f32 %v1931, %v1963
      %v1996 = vmax.f32 %v1932, %v1964
      %v1997 = vmax.f32 %v1933, %v1965
      %v1998 = vsel %vm942, %v1966, -1e+30
      %v1999 = vsel %vm943, %v1967, -1e+30
      %v2000 = vsel %vm944, %v1968, -1e+30
      %v2001 = vsel %vm945, %v1969, -1e+30
      %v2002 = vsel %vm946, %v1970, -1e+30
      %v2003 = vsel %vm947, %v1971, -1e+30
      %v2004 = vsel %vm948, %v1972, -1e+30
      %v2005 = vsel %vm949, %v1973, -1e+30
      %v2006 = vsel %vm950, %v1974, -1e+30
      %v2007 = vsel %vm951, %v1975, -1e+30
      %v2008 = vsel %vm952, %v1976, -1e+30
      %v2009 = vsel %vm953, %v1977, -1e+30
      %v2010 = vsel %vm954, %v1978, -1e+30
      %v2011 = vsel %vm955, %v1979, -1e+30
      %v2012 = vsel %vm956, %v1980, -1e+30
      %v2013 = vsel %vm957, %v1981, -1e+30
      %v2014 = vsel %vm958, %v1982, -1e+30
      %v2015 = vsel %vm959, %v1983, -1e+30
      %v2016 = vsel %vm960, %v1984, -1e+30
      %v2017 = vsel %vm961, %v1985, -1e+30
      %v2018 = vsel %vm962, %v1986, -1e+30
      %v2019 = vsel %vm963, %v1987, -1e+30
      %v2020 = vsel %vm964, %v1988, -1e+30
      %v2021 = vsel %vm965, %v1989, -1e+30
      %v2022 = vsel %vm966, %v1990, -1e+30
      %v2023 = vsel %vm967, %v1991, -1e+30
      %v2024 = vsel %vm968, %v1992, -1e+30
      %v2025 = vsel %vm969, %v1993, -1e+30
      %v2026 = vsel %vm970, %v1994, -1e+30
      %v2027 = vsel %vm971, %v1995, -1e+30
      %v2028 = vsel %vm972, %v1996, -1e+30
      %v2029 = vsel %vm973, %v1997, -1e+30
      %s2030 = scalar_lea.vmem [#allocation2], 128
      %v2031 = vld [vmem:[%s2030] sm:$0xff]
      %v2032 = vld [vmem:[%s2030 + $0x8] sm:$0xff]
      %v2033 = vld [vmem:[%s2030 + $0x10] sm:$0xff]
      %v2034 = vld [vmem:[%s2030 + $0x18] sm:$0xff]
      %v2035 = vld [vmem:[%s2030 + $0x20] sm:$0xff]
      %v2036 = vld [vmem:[%s2030 + $0x28] sm:$0xff]
      %v2037 = vld [vmem:[%s2030 + $0x30] sm:$0xff]
      %v2038 = vld [vmem:[%s2030 + $0x38] sm:$0xff]
      %v2039 = vld [vmem:[%s2030 + $0x40] sm:$0xff]
      %v2040 = vld [vmem:[%s2030 + $0x48] sm:$0xff]
      %v2041 = vld [vmem:[%s2030 + $0x50] sm:$0xff]
      %v2042 = vld [vmem:[%s2030 + $0x58] sm:$0xff]
      %v2043 = vld [vmem:[%s2030 + $0x60] sm:$0xff]
      %v2044 = vld [vmem:[%s2030 + $0x68] sm:$0xff]
      %v2045 = vld [vmem:[%s2030 + $0x70] sm:$0xff]
      %v2046 = vld [vmem:[%s2030 + $0x78] sm:$0xff]
      %v2047 = vmax.f32 %v1998, %v1999
      %2048 = vmax.xlane.f32.xlu0 %v2047
      %v2049 = vpop.xlane.xlu0 %2048
      %v2050 = vmax.f32 %v2000, %v2001
      %2051 = vmax.xlane.f32.xlu0 %v2050
      %v2052 = vpop.xlane.xlu0 %2051
      %v2053 = vmax.f32 %v2002, %v2003
      %2054 = vmax.xlane.f32.xlu0 %v2053
      %v2055 = vpop.xlane.xlu0 %2054
      %v2056 = vmax.f32 %v2004, %v2005
      %2057 = vmax.xlane.f32.xlu0 %v2056
      %v2058 = vpop.xlane.xlu0 %2057
      %v2059 = vmax.f32 %v2006, %v2007
      %2060 = vmax.xlane.f32.xlu0 %v2059
      %v2061 = vpop.xlane.xlu0 %2060
      %v2062 = vmax.f32 %v2008, %v2009
      %2063 = vmax.xlane.f32.xlu0 %v2062
      %v2064 = vpop.xlane.xlu0 %2063
      %v2065 = vmax.f32 %v2010, %v2011
      %2066 = vmax.xlane.f32.xlu0 %v2065
      %v2067 = vpop.xlane.xlu0 %2066
      %v2068 = vmax.f32 %v2012, %v2013
      %2069 = vmax.xlane.f32.xlu0 %v2068
      %v2070 = vpop.xlane.xlu0 %2069
      %v2071 = vmax.f32 %v2014, %v2015
      %2072 = vmax.xlane.f32.xlu0 %v2071
      %v2073 = vpop.xlane.xlu0 %2072
      %v2074 = vmax.f32 %v2016, %v2017
      %2075 = vmax.xlane.f32.xlu0 %v2074
      %v2076 = vpop.xlane.xlu0 %2075
      %v2077 = vmax.f32 %v2018, %v2019
      %2078 = vmax.xlane.f32.xlu0 %v2077
      %v2079 = vpop.xlane.xlu0 %2078
      %v2080 = vmax.f32 %v2020, %v2021
      %2081 = vmax.xlane.f32.xlu0 %v2080
      %v2082 = vpop.xlane.xlu0 %2081
      %v2083 = vmax.f32 %v2022, %v2023
      %2084 = vmax.xlane.f32.xlu0 %v2083
      %v2085 = vpop.xlane.xlu0 %2084
      %v2086 = vmax.f32 %v2024, %v2025
      %2087 = vmax.xlane.f32.xlu0 %v2086
      %v2088 = vpop.xlane.xlu0 %2087
      %v2089 = vmax.f32 %v2026, %v2027
      %2090 = vmax.xlane.f32.xlu0 %v2089
      %v2091 = vpop.xlane.xlu0 %2090
      %v2092 = vmax.f32 %v2028, %v2029
      %2093 = vmax.xlane.f32.xlu0 %v2092
      %v2094 = vpop.xlane.xlu0 %2093
      %v2095 = vmax.f32 %v2031, %v2049
      %v2096 = vmax.f32 %v2032, %v2052
      %v2097 = vmax.f32 %v2033, %v2055
      %v2098 = vmax.f32 %v2034, %v2058
      %v2099 = vmax.f32 %v2035, %v2061
      %v2100 = vmax.f32 %v2036, %v2064
      %v2101 = vmax.f32 %v2037, %v2067
      %v2102 = vmax.f32 %v2038, %v2070
      %v2103 = vmax.f32 %v2039, %v2073
      %v2104 = vmax.f32 %v2040, %v2076
      %v2105 = vmax.f32 %v2041, %v2079
      %v2106 = vmax.f32 %v2042, %v2082
      %v2107 = vmax.f32 %v2043, %v2085
      %v2108 = vmax.f32 %v2044, %v2088
      %v2109 = vmax.f32 %v2045, %v2091
      %v2110 = vmax.f32 %v2046, %v2094
      %v2111 = vsub.f32 %v2031, %v2095
      %v2112 = vsub.f32 %v2032, %v2096
      %v2113 = vsub.f32 %v2033, %v2097
      %v2114 = vsub.f32 %v2034, %v2098
      %v2115 = vsub.f32 %v2035, %v2099
      %v2116 = vsub.f32 %v2036, %v2100
      %v2117 = vsub.f32 %v2037, %v2101
      %v2118 = vsub.f32 %v2038, %v2102
      %v2119 = vsub.f32 %v2039, %v2103
      %v2120 = vsub.f32 %v2040, %v2104
      %v2121 = vsub.f32 %v2041, %v2105
      %v2122 = vsub.f32 %v2042, %v2106
      %v2123 = vsub.f32 %v2043, %v2107
      %v2124 = vsub.f32 %v2044, %v2108
      %v2125 = vsub.f32 %v2045, %v2109
      %v2126 = vsub.f32 %v2046, %v2110
      %v2127 = vmul.f32 %v2111, 1.442695
      %v2128 = vpow.pop %v2127
      %v2129 = vmul.f32 %v2112, 1.442695
      %v2130 = vpow.pop %v2129
      %v2131 = vmul.f32 %v2113, 1.442695
      %v2132 = vpow.pop %v2131
      %v2133 = vmul.f32 %v2114, 1.442695
      %v2134 = vpow.pop %v2133
      %v2135 = vmul.f32 %v2115, 1.442695
      %v2136 = vpow.pop %v2135
      %v2137 = vmul.f32 %v2116, 1.442695
      %v2138 = vpow.pop %v2137
      %v2139 = vmul.f32 %v2117, 1.442695
      %v2140 = vpow.pop %v2139
      %v2141 = vmul.f32 %v2118, 1.442695
      %v2142 = vpow.pop %v2141
      %v2143 = vmul.f32 %v2119, 1.442695
      %v2144 = vpow.pop %v2143
      %v2145 = vmul.f32 %v2120, 1.442695
      %v2146 = vpow.pop %v2145
      %v2147 = vmul.f32 %v2121, 1.442695
      %v2148 = vpow.pop %v2147
      %v2149 = vmul.f32 %v2122, 1.442695
      %v2150 = vpow.pop %v2149
      %v2151 = vmul.f32 %v2123, 1.442695
      %v2152 = vpow.pop %v2151
      %v2153 = vmul.f32 %v2124, 1.442695
      %v2154 = vpow.pop %v2153
      %v2155 = vmul.f32 %v2125, 1.442695
      %v2156 = vpow.pop %v2155
      %v2157 = vmul.f32 %v2126, 1.442695
      %v2158 = vpow.pop %v2157
      %2160 = vset.pattern.permute.xlu0 0
      %2161 = vperm.xlu0 %2160, %v2095
      %v2162 = vpop.permute.xlu0 %2161
      %2165 = vset.pattern.permute.xlu0 0
      %2166 = vperm.xlu0 %2165, %v2096
      %v2167 = vpop.permute.xlu0 %2166
      %2170 = vset.pattern.permute.xlu0 0
      %2171 = vperm.xlu0 %2170, %v2097
      %v2172 = vpop.permute.xlu0 %2171
      %2175 = vset.pattern.permute.xlu0 0
      %2176 = vperm.xlu0 %2175, %v2098
      %v2177 = vpop.permute.xlu0 %2176
      %2180 = vset.pattern.permute.xlu0 0
      %2181 = vperm.xlu0 %2180, %v2099
      %v2182 = vpop.permute.xlu0 %2181
      %2185 = vset.pattern.permute.xlu0 0
      %2186 = vperm.xlu0 %2185, %v2100
      %v2187 = vpop.permute.xlu0 %2186
      %2190 = vset.pattern.permute.xlu0 0
      %2191 = vperm.xlu0 %2190, %v2101
      %v2192 = vpop.permute.xlu0 %2191
      %2195 = vset.pattern.permute.xlu0 0
      %2196 = vperm.xlu0 %2195, %v2102
      %v2197 = vpop.permute.xlu0 %2196
      %2200 = vset.pattern.permute.xlu0 0
      %2201 = vperm.xlu0 %2200, %v2103
      %v2202 = vpop.permute.xlu0 %2201
      %2205 = vset.pattern.permute.xlu0 0
      %2206 = vperm.xlu0 %2205, %v2104
      %v2207 = vpop.permute.xlu0 %2206
      %2210 = vset.pattern.permute.xlu0 0
      %2211 = vperm.xlu0 %2210, %v2105
      %v2212 = vpop.permute.xlu0 %2211
      %2215 = vset.pattern.permute.xlu0 0
      %2216 = vperm.xlu0 %2215, %v2106
      %v2217 = vpop.permute.xlu0 %2216
      %2220 = vset.pattern.permute.xlu0 0
      %2221 = vperm.xlu0 %2220, %v2107
      %v2222 = vpop.permute.xlu0 %2221
      %2225 = vset.pattern.permute.xlu0 0
      %2226 = vperm.xlu0 %2225, %v2108
      %v2227 = vpop.permute.xlu0 %2226
      %2230 = vset.pattern.permute.xlu0 0
      %2231 = vperm.xlu0 %2230, %v2109
      %v2232 = vpop.permute.xlu0 %2231
      %2235 = vset.pattern.permute.xlu0 0
      %2236 = vperm.xlu0 %2235, %v2110
      %v2237 = vpop.permute.xlu0 %2236
      %v2239 = vsub.f32 %v1998, %v2162
      %v2240 = vsub.f32 %v1999, %v2162
      %v2241 = vsub.f32 %v2000, %v2167
      %v2242 = vsub.f32 %v2001, %v2167
      %v2243 = vsub.f32 %v2002, %v2172
      %v2244 = vsub.f32 %v2003, %v2172
      %v2245 = vsub.f32 %v2004, %v2177
      %v2246 = vsub.f32 %v2005, %v2177
      %v2247 = vsub.f32 %v2006, %v2182
      %v2248 = vsub.f32 %v2007, %v2182
      %v2249 = vsub.f32 %v2008, %v2187
      %v2250 = vsub.f32 %v2009, %v2187
      %v2251 = vsub.f32 %v2010, %v2192
      %v2252 = vsub.f32 %v2011, %v2192
      %v2253 = vsub.f32 %v2012, %v2197
      %v2254 = vsub.f32 %v2013, %v2197
      %v2255 = vsub.f32 %v2014, %v2202
      %v2256 = vsub.f32 %v2015, %v2202
      %v2257 = vsub.f32 %v2016, %v2207
      %v2258 = vsub.f32 %v2017, %v2207
      %v2259 = vsub.f32 %v2018, %v2212
      %v2260 = vsub.f32 %v2019, %v2212
      %v2261 = vsub.f32 %v2020, %v2217
      %v2262 = vsub.f32 %v2021, %v2217
      %v2263 = vsub.f32 %v2022, %v2222
      %v2264 = vsub.f32 %v2023, %v2222
      %v2265 = vsub.f32 %v2024, %v2227
      %v2266 = vsub.f32 %v2025, %v2227
      %v2267 = vsub.f32 %v2026, %v2232
      %v2268 = vsub.f32 %v2027, %v2232
      %v2269 = vsub.f32 %v2028, %v2237
      %v2270 = vsub.f32 %v2029, %v2237
      %v2271 = vmul.f32 %v2239, 1.442695
      %v2272 = vpow.pop %v2271
      %v2273 = vmul.f32 %v2240, 1.442695
      %v2274 = vpow.pop %v2273
      %v2275 = vmul.f32 %v2241, 1.442695
      %v2276 = vpow.pop %v2275
      %v2277 = vmul.f32 %v2242, 1.442695
      %v2278 = vpow.pop %v2277
      %v2279 = vmul.f32 %v2243, 1.442695
      %v2280 = vpow.pop %v2279
      %v2281 = vmul.f32 %v2244, 1.442695
      %v2282 = vpow.pop %v2281
      %v2283 = vmul.f32 %v2245, 1.442695
      %v2284 = vpow.pop %v2283
      %v2285 = vmul.f32 %v2246, 1.442695
      %v2286 = vpow.pop %v2285
      %v2287 = vmul.f32 %v2247, 1.442695
      %v2288 = vpow.pop %v2287
      %v2289 = vmul.f32 %v2248, 1.442695
      %v2290 = vpow.pop %v2289
      %v2291 = vmul.f32 %v2249, 1.442695
      %v2292 = vpow.pop %v2291
      %v2293 = vmul.f32 %v2250, 1.442695
      %v2294 = vpow.pop %v2293
      %v2295 = vmul.f32 %v2251, 1.442695
      %v2296 = vpow.pop %v2295
      %v2297 = vmul.f32 %v2252, 1.442695
      %v2298 = vpow.pop %v2297
      %v2299 = vmul.f32 %v2253, 1.442695
      %v2300 = vpow.pop %v2299
      %v2301 = vmul.f32 %v2254, 1.442695
      %v2302 = vpow.pop %v2301
      %v2303 = vmul.f32 %v2255, 1.442695
      %v2304 = vpow.pop %v2303
      %v2305 = vmul.f32 %v2256, 1.442695
      %v2306 = vpow.pop %v2305
      %v2307 = vmul.f32 %v2257, 1.442695
      %v2308 = vpow.pop %v2307
      %v2309 = vmul.f32 %v2258, 1.442695
      %v2310 = vpow.pop %v2309
      %v2311 = vmul.f32 %v2259, 1.442695
      %v2312 = vpow.pop %v2311
      %v2313 = vmul.f32 %v2260, 1.442695
      %v2314 = vpow.pop %v2313
      %v2315 = vmul.f32 %v2261, 1.442695
      %v2316 = vpow.pop %v2315
      %v2317 = vmul.f32 %v2262, 1.442695
      %v2318 = vpow.pop %v2317
      %v2319 = vmul.f32 %v2263, 1.442695
      %v2320 = vpow.pop %v2319
      %v2321 = vmul.f32 %v2264, 1.442695
      %v2322 = vpow.pop %v2321
      %v2323 = vmul.f32 %v2265, 1.442695
      %v2324 = vpow.pop %v2323
      %v2325 = vmul.f32 %v2266, 1.442695
      %v2326 = vpow.pop %v2325
      %v2327 = vmul.f32 %v2267, 1.442695
      %v2328 = vpow.pop %v2327
      %v2329 = vmul.f32 %v2268, 1.442695
      %v2330 = vpow.pop %v2329
      %v2331 = vmul.f32 %v2269, 1.442695
      %v2332 = vpow.pop %v2331
      %v2333 = vmul.f32 %v2270, 1.442695
      %v2334 = vpow.pop %v2333
      %s2335 = scalar_lea.vmem [#allocation3], 128
      %v2336 = vld [vmem:[%s2335] sm:$0xff]
      %v2337 = vld [vmem:[%s2335 + $0x8] sm:$0xff]
      %v2338 = vld [vmem:[%s2335 + $0x10] sm:$0xff]
      %v2339 = vld [vmem:[%s2335 + $0x18] sm:$0xff]
      %v2340 = vld [vmem:[%s2335 + $0x20] sm:$0xff]
      %v2341 = vld [vmem:[%s2335 + $0x28] sm:$0xff]
      %v2342 = vld [vmem:[%s2335 + $0x30] sm:$0xff]
      %v2343 = vld [vmem:[%s2335 + $0x38] sm:$0xff]
      %v2344 = vld [vmem:[%s2335 + $0x40] sm:$0xff]
      %v2345 = vld [vmem:[%s2335 + $0x48] sm:$0xff]
      %v2346 = vld [vmem:[%s2335 + $0x50] sm:$0xff]
      %v2347 = vld [vmem:[%s2335 + $0x58] sm:$0xff]
      %v2348 = vld [vmem:[%s2335 + $0x60] sm:$0xff]
      %v2349 = vld [vmem:[%s2335 + $0x68] sm:$0xff]
      %v2350 = vld [vmem:[%s2335 + $0x70] sm:$0xff]
      %v2351 = vld [vmem:[%s2335 + $0x78] sm:$0xff]
      %v2352 = vmul.f32 %v2128, %v2336
      %v2353 = vmul.f32 %v2130, %v2337
      %v2354 = vmul.f32 %v2132, %v2338
      %v2355 = vmul.f32 %v2134, %v2339
      %v2356 = vmul.f32 %v2136, %v2340
      %v2357 = vmul.f32 %v2138, %v2341
      %v2358 = vmul.f32 %v2140, %v2342
      %v2359 = vmul.f32 %v2142, %v2343
      %v2360 = vmul.f32 %v2144, %v2344
      %v2361 = vmul.f32 %v2146, %v2345
      %v2362 = vmul.f32 %v2148, %v2346
      %v2363 = vmul.f32 %v2150, %v2347
      %v2364 = vmul.f32 %v2152, %v2348
      %v2365 = vmul.f32 %v2154, %v2349
      %v2366 = vmul.f32 %v2156, %v2350
      %v2367 = vmul.f32 %v2158, %v2351
      %v2368 = vadd.f32 %v2272, %v2274
      %2369 = vadd.xlane.f32.xlu0 %v2368
      %v2370 = vpop.xlane.xlu0 %2369
      %v2371 = vadd.f32 %v2276, %v2278
      %2372 = vadd.xlane.f32.xlu0 %v2371
      %v2373 = vpop.xlane.xlu0 %2372
      %v2374 = vadd.f32 %v2280, %v2282
      %2375 = vadd.xlane.f32.xlu0 %v2374
      %v2376 = vpop.xlane.xlu0 %2375
      %v2377 = vadd.f32 %v2284, %v2286
      %2378 = vadd.xlane.f32.xlu0 %v2377
      %v2379 = vpop.xlane.xlu0 %2378
      %v2380 = vadd.f32 %v2288, %v2290
      %2381 = vadd.xlane.f32.xlu0 %v2380
      %v2382 = vpop.xlane.xlu0 %2381
      %v2383 = vadd.f32 %v2292, %v2294
      %2384 = vadd.xlane.f32.xlu0 %v2383
      %v2385 = vpop.xlane.xlu0 %2384
      %v2386 = vadd.f32 %v2296, %v2298
      %2387 = vadd.xlane.f32.xlu0 %v2386
      %v2388 = vpop.xlane.xlu0 %2387
      %v2389 = vadd.f32 %v2300, %v2302
      %2390 = vadd.xlane.f32.xlu0 %v2389
      %v2391 = vpop.xlane.xlu0 %2390
      %v2392 = vadd.f32 %v2304, %v2306
      %2393 = vadd.xlane.f32.xlu0 %v2392
      %v2394 = vpop.xlane.xlu0 %2393
      %v2395 = vadd.f32 %v2308, %v2310
      %2396 = vadd.xlane.f32.xlu0 %v2395
      %v2397 = vpop.xlane.xlu0 %2396
      %v2398 = vadd.f32 %v2312, %v2314
      %2399 = vadd.xlane.f32.xlu0 %v2398
      %v2400 = vpop.xlane.xlu0 %2399
      %v2401 = vadd.f32 %v2316, %v2318
      %2402 = vadd.xlane.f32.xlu0 %v2401
      %v2403 = vpop.xlane.xlu0 %2402
      %v2404 = vadd.f32 %v2320, %v2322
      %2405 = vadd.xlane.f32.xlu0 %v2404
      %v2406 = vpop.xlane.xlu0 %2405
      %v2407 = vadd.f32 %v2324, %v2326
      %2408 = vadd.xlane.f32.xlu0 %v2407
      %v2409 = vpop.xlane.xlu0 %2408
      %v2410 = vadd.f32 %v2328, %v2330
      %2411 = vadd.xlane.f32.xlu0 %v2410
      %v2412 = vpop.xlane.xlu0 %2411
      %v2413 = vadd.f32 %v2332, %v2334
      %2414 = vadd.xlane.f32.xlu0 %v2413
      %v2415 = vpop.xlane.xlu0 %2414
      %v2416 = vadd.f32 %v2352, %v2370
      %v2417 = vadd.f32 %v2353, %v2373
      %v2418 = vadd.f32 %v2354, %v2376
      %v2419 = vadd.f32 %v2355, %v2379
      %v2420 = vadd.f32 %v2356, %v2382
      %v2421 = vadd.f32 %v2357, %v2385
      %v2422 = vadd.f32 %v2358, %v2388
      %v2423 = vadd.f32 %v2359, %v2391
      %v2424 = vadd.f32 %v2360, %v2394
      %v2425 = vadd.f32 %v2361, %v2397
      %v2426 = vadd.f32 %v2362, %v2400
      %v2427 = vadd.f32 %v2363, %v2403
      %v2428 = vadd.f32 %v2364, %v2406
      %v2429 = vadd.f32 %v2365, %v2409
      %v2430 = vadd.f32 %v2366, %v2412
      %v2431 = vadd.f32 %v2367, %v2415
      %2432 = vst.msk [vmem:[%s2335] sm:$0xff] %vm1406, %v2416
      %2433 = vst.msk [vmem:[%s2335 + $0x8] sm:$0xff] %vm1406, %v2417
      %2434 = vst.msk [vmem:[%s2335 + $0x10] sm:$0xff] %vm1406, %v2418
      %2435 = vst.msk [vmem:[%s2335 + $0x18] sm:$0xff] %vm1406, %v2419
      %2436 = vst.msk [vmem:[%s2335 + $0x20] sm:$0xff] %vm1406, %v2420
      %2437 = vst.msk [vmem:[%s2335 + $0x28] sm:$0xff] %vm1406, %v2421
      %2438 = vst.msk [vmem:[%s2335 + $0x30] sm:$0xff] %vm1406, %v2422
      %2439 = vst.msk [vmem:[%s2335 + $0x38] sm:$0xff] %vm1406, %v2423
      %2440 = vst.msk [vmem:[%s2335 + $0x40] sm:$0xff] %vm1406, %v2424
      %2441 = vst.msk [vmem:[%s2335 + $0x48] sm:$0xff] %vm1406, %v2425
      %2442 = vst.msk [vmem:[%s2335 + $0x50] sm:$0xff] %vm1406, %v2426
      %2443 = vst.msk [vmem:[%s2335 + $0x58] sm:$0xff] %vm1406, %v2427
      %2444 = vst.msk [vmem:[%s2335 + $0x60] sm:$0xff] %vm1406, %v2428
      %2445 = vst.msk [vmem:[%s2335 + $0x68] sm:$0xff] %vm1406, %v2429
      %2446 = vst.msk [vmem:[%s2335 + $0x70] sm:$0xff] %vm1406, %v2430
      %2447 = vst.msk [vmem:[%s2335 + $0x78] sm:$0xff] %vm1406, %v2431
      %v2448 = vld [vmem:[#allocation4] sm:$0xff]
      %v2449 = vld [vmem:[#allocation4 + $0x8] sm:$0xff]
      %v2450 = vld [vmem:[#allocation4 + $0x10] sm:$0xff]
      %v2451 = vld [vmem:[#allocation4 + $0x18] sm:$0xff]
      %v2452 = vld [vmem:[#allocation4 + $0x20] sm:$0xff]
      %v2453 = vld [vmem:[#allocation4 + $0x28] sm:$0xff]
      %v2454 = vld [vmem:[#allocation4 + $0x30] sm:$0xff]
      %v2455 = vld [vmem:[#allocation4 + $0x38] sm:$0xff]
      %v2456 = vld [vmem:[#allocation4 + $0x40] sm:$0xff]
      %v2457 = vld [vmem:[#allocation4 + $0x48] sm:$0xff]
      %v2458 = vld [vmem:[#allocation4 + $0x50] sm:$0xff]
      %v2459 = vld [vmem:[#allocation4 + $0x58] sm:$0xff]
      %v2460 = vld [vmem:[#allocation4 + $0x60] sm:$0xff]
      %v2461 = vld [vmem:[#allocation4 + $0x68] sm:$0xff]
      %v2462 = vld [vmem:[#allocation4 + $0x70] sm:$0xff]
      %v2463 = vld [vmem:[#allocation4 + $0x78] sm:$0xff]
      %2465 = vset.pattern.permute.xlu0 0
      %2466 = vperm.xlu0 %2465, %v2128
      %v2467 = vpop.permute.xlu0 %2466
      %2470 = vset.pattern.permute.xlu0 0
      %2471 = vperm.xlu0 %2470, %v2130
      %v2472 = vpop.permute.xlu0 %2471
      %2475 = vset.pattern.permute.xlu0 0
      %2476 = vperm.xlu0 %2475, %v2132
      %v2477 = vpop.permute.xlu0 %2476
      %2480 = vset.pattern.permute.xlu0 0
      %2481 = vperm.xlu0 %2480, %v2134
      %v2482 = vpop.permute.xlu0 %2481
      %2485 = vset.pattern.permute.xlu0 0
      %2486 = vperm.xlu0 %2485, %v2136
      %v2487 = vpop.permute.xlu0 %2486
      %2490 = vset.pattern.permute.xlu0 0
      %2491 = vperm.xlu0 %2490, %v2138
      %v2492 = vpop.permute.xlu0 %2491
      %2495 = vset.pattern.permute.xlu0 0
      %2496 = vperm.xlu0 %2495, %v2140
      %v2497 = vpop.permute.xlu0 %2496
      %2500 = vset.pattern.permute.xlu0 0
      %2501 = vperm.xlu0 %2500, %v2142
      %v2502 = vpop.permute.xlu0 %2501
      %2505 = vset.pattern.permute.xlu0 0
      %2506 = vperm.xlu0 %2505, %v2144
      %v2507 = vpop.permute.xlu0 %2506
      %2510 = vset.pattern.permute.xlu0 0
      %2511 = vperm.xlu0 %2510, %v2146
      %v2512 = vpop.permute.xlu0 %2511
      %2515 = vset.pattern.permute.xlu0 0
      %2516 = vperm.xlu0 %2515, %v2148
      %v2517 = vpop.permute.xlu0 %2516
      %2520 = vset.pattern.permute.xlu0 0
      %2521 = vperm.xlu0 %2520, %v2150
      %v2522 = vpop.permute.xlu0 %2521
      %2525 = vset.pattern.permute.xlu0 0
      %2526 = vperm.xlu0 %2525, %v2152
      %v2527 = vpop.permute.xlu0 %2526
      %2530 = vset.pattern.permute.xlu0 0
      %2531 = vperm.xlu0 %2530, %v2154
      %v2532 = vpop.permute.xlu0 %2531
      %2535 = vset.pattern.permute.xlu0 0
      %2536 = vperm.xlu0 %2535, %v2156
      %v2537 = vpop.permute.xlu0 %2536
      %2540 = vset.pattern.permute.xlu0 0
      %2541 = vperm.xlu0 %2540, %v2158
      %v2542 = vpop.permute.xlu0 %2541
      %v2544 = vmul.f32 %v2467, %v2448
      %v2545 = vmul.f32 %v2472, %v2449
      %v2546 = vmul.f32 %v2477, %v2450
      %v2547 = vmul.f32 %v2482, %v2451
      %v2548 = vmul.f32 %v2487, %v2452
      %v2549 = vmul.f32 %v2492, %v2453
      %v2550 = vmul.f32 %v2497, %v2454
      %v2551 = vmul.f32 %v2502, %v2455
      %v2552 = vmul.f32 %v2507, %v2456
      %v2553 = vmul.f32 %v2512, %v2457
      %v2554 = vmul.f32 %v2517, %v2458
      %v2555 = vmul.f32 %v2522, %v2459
      %v2556 = vmul.f32 %v2527, %v2460
      %v2557 = vmul.f32 %v2532, %v2461
      %v2558 = vmul.f32 %v2537, %v2462
      %v2559 = vmul.f32 %v2542, %v2463
      %v2560 = vpack.c.bf16 %v2276, %v2272
      %v2561 = vpack.c.bf16 %v2278, %v2274
      %v2562 = vpack.c.bf16 %v2284, %v2280
      %v2563 = vpack.c.bf16 %v2286, %v2282
      %v2564 = vpack.c.bf16 %v2292, %v2288
      %v2565 = vpack.c.bf16 %v2294, %v2290
      %v2566 = vpack.c.bf16 %v2300, %v2296
      %v2567 = vpack.c.bf16 %v2302, %v2298
      %v2568 = vpack.c.bf16 %v2308, %v2304
      %v2569 = vpack.c.bf16 %v2310, %v2306
      %v2570 = vpack.c.bf16 %v2316, %v2312
      %v2571 = vpack.c.bf16 %v2318, %v2314
      %v2572 = vpack.c.bf16 %v2324, %v2320
      %v2573 = vpack.c.bf16 %v2326, %v2322
      %v2574 = vpack.c.bf16 %v2332, %v2328
      %v2575 = vpack.c.bf16 %v2334, %v2330
      %2576 = vrot.lane.b32.xlu0 %v1615, 120
      %v2577 = vpop.permute.xlu0 %2576
      %2578 = vrot.lane.b32.xlu0 %v1616, 120
      %v2579 = vpop.permute.xlu0 %2578
      %2580 = vrot.lane.b32.xlu0 %v1617, 120
      %v2581 = vpop.permute.xlu0 %2580
      %2582 = vrot.lane.b32.xlu0 %v1618, 120
      %v2583 = vpop.permute.xlu0 %2582
      %2584 = vrot.lane.b32.xlu0 %v1619, 120
      %v2585 = vpop.permute.xlu0 %2584
      %2586 = vrot.lane.b32.xlu0 %v1620, 120
      %v2587 = vpop.permute.xlu0 %2586
      %2588 = vrot.lane.b32.xlu0 %v1621, 120
      %v2589 = vpop.permute.xlu0 %2588
      %2590 = vrot.lane.b32.xlu0 %v1622, 120
      %v2591 = vpop.permute.xlu0 %2590
      %2592 = vrot.lane.b32.xlu0 %v1623, 120
      %v2593 = vpop.permute.xlu0 %2592
      %2594 = vrot.lane.b32.xlu0 %v1624, 120
      %v2595 = vpop.permute.xlu0 %2594
      %2596 = vrot.lane.b32.xlu0 %v1625, 120
      %v2597 = vpop.permute.xlu0 %2596
      %2598 = vrot.lane.b32.xlu0 %v1626, 120
      %v2599 = vpop.permute.xlu0 %2598
      %2600 = vrot.lane.b32.xlu0 %v1627, 120
      %v2601 = vpop.permute.xlu0 %2600
      %2602 = vrot.lane.b32.xlu0 %v1628, 120
      %v2603 = vpop.permute.xlu0 %2602
      %2604 = vrot.lane.b32.xlu0 %v1629, 120
      %v2605 = vpop.permute.xlu0 %2604
      %2606 = vrot.lane.b32.xlu0 %v1630, 120
      %v2607 = vpop.permute.xlu0 %2606
      %2624 = vmatprep.subr.bf16.mxu0 0
      %2625 = vmatpush1.bf16.msra.mxu0 %v2577
      %2626 = vmatprep.subr.bf16.mxu0 0
      %2627 = vmatpush1.bf16.msra.mxu0 %v2579
      %2628 = vmatprep.subr.bf16.mxu0 0
      %2629 = vmatpush1.bf16.msra.mxu0 %v2581
      %2630 = vmatprep.subr.bf16.mxu0 0
      %2631 = vmatpush1.bf16.msra.mxu0 %v2583
      %2632 = vmatprep.subr.bf16.mxu0 0
      %2633 = vmatpush1.bf16.msra.mxu0 %v2585
      %2634 = vmatprep.subr.bf16.mxu0 0
      %2635 = vmatpush1.bf16.msra.mxu0 %v2587
      %2636 = vmatprep.subr.bf16.mxu0 0
      %2637 = vmatpush1.bf16.msra.mxu0 %v2589
      %2638 = vmatprep.subr.bf16.mxu0 0
      %2639 = vmatpush1.bf16.msra.mxu0 %v2591
      %2640 = vmatprep.subr.bf16.mxu0 0
      %2641 = vmatpush1.bf16.msra.mxu0 %v2593
      %2642 = vmatprep.subr.bf16.mxu0 0
      %2643 = vmatpush1.bf16.msra.mxu0 %v2595
      %2644 = vmatprep.subr.bf16.mxu0 0
      %2645 = vmatpush1.bf16.msra.mxu0 %v2597
      %2646 = vmatprep.subr.bf16.mxu0 0
      %2647 = vmatpush1.bf16.msra.mxu0 %v2599
      %2648 = vmatprep.subr.bf16.mxu0 0
      %2649 = vmatpush1.bf16.msra.mxu0 %v2601
      %2650 = vmatprep.subr.bf16.mxu0 0
      %2651 = vmatpush1.bf16.msra.mxu0 %v2603
      %2652 = vmatprep.subr.bf16.mxu0 0
      %2653 = vmatpush1.bf16.msra.mxu0 %v2605
      %2654 = vmatprep.subr.bf16.mxu0 0
      %2655 = vmatpush1.bf16.msra.mxu0 %v2607
      %2656 = vmatprep.mubr.bf16.mxu0 %v2561
      %2657 = vmatmul.mubr.bf16.gmra.mrb[0].mxu0 %v2560
      %v2658 = vpop.f32.mrb[0].mxu0
      %v2659 = vadd.f32 0.0, %v2658
      %v2660 = vpop.f32.mrb[0].mxu0
      %v2661 = vpop.f32.mrb[0].mxu0
      %v2662 = vadd.f32 0.0, %v2661
      %v2663 = vpop.f32.mrb[0].mxu0
      %2664 = vmatprep.mubr.bf16.mxu0 %v2563
      %2665 = vmatmul.mubr.bf16.gmra.mrb[0].mxu0 %v2562
      %v2666 = vpop.f32.mrb[0].mxu0
      %v2667 = vadd.f32 0.0, %v2666
      %v2668 = vpop.f32.mrb[0].mxu0
      %v2669 = vpop.f32.mrb[0].mxu0
      %v2670 = vadd.f32 0.0, %v2669
      %v2671 = vpop.f32.mrb[0].mxu0
      %2672 = vmatprep.mubr.bf16.mxu0 %v2565
      %2673 = vmatmul.mubr.bf16.gmra.mrb[0].mxu0 %v2564
      %v2674 = vpop.f32.mrb[0].mxu0
      %v2675 = vadd.f32 0.0, %v2674
      %v2676 = vpop.f32.mrb[0].mxu0
      %v2677 = vpop.f32.mrb[0].mxu0
      %v2678 = vadd.f32 0.0, %v2677
      %v2679 = vpop.f32.mrb[0].mxu0
      %2680 = vmatprep.mubr.bf16.mxu0 %v2567
      %2681 = vmatmul.mubr.bf16.gmra.mrb[0].mxu0 %v2566
      %v2682 = vpop.f32.mrb[0].mxu0
      %v2683 = vadd.f32 0.0, %v2682
      %v2684 = vpop.f32.mrb[0].mxu0
      %v2685 = vpop.f32.mrb[0].mxu0
      %v2686 = vadd.f32 0.0, %v2685
      %v2687 = vpop.f32.mrb[0].mxu0
      %2688 = vmatprep.mubr.bf16.mxu0 %v2569
      %2689 = vmatmul.mubr.bf16.gmra.mrb[0].mxu0 %v2568
      %v2690 = vpop.f32.mrb[0].mxu0
      %v2691 = vadd.f32 0.0, %v2690
      %v2692 = vpop.f32.mrb[0].mxu0
      %v2693 = vpop.f32.mrb[0].mxu0
      %v2694 = vadd.f32 0.0, %v2693
      %v2695 = vpop.f32.mrb[0].mxu0
      %2696 = vmatprep.mubr.bf16.mxu0 %v2571
      %2697 = vmatmul.mubr.bf16.gmra.mrb[0].mxu0 %v2570
      %v2698 = vpop.f32.mrb[0].mxu0
      %v2699 = vadd.f32 0.0, %v2698
      %v2700 = vpop.f32.mrb[0].mxu0
      %v2701 = vpop.f32.mrb[0].mxu0
      %v2702 = vadd.f32 0.0, %v2701
      %v2703 = vpop.f32.mrb[0].mxu0
      %2704 = vmatprep.mubr.bf16.mxu0 %v2573
      %2705 = vmatmul.mubr.bf16.gmra.mrb[0].mxu0 %v2572
      %v2706 = vpop.f32.mrb[0].mxu0
      %v2707 = vadd.f32 0.0, %v2706
      %v2708 = vpop.f32.mrb[0].mxu0
      %v2709 = vpop.f32.mrb[0].mxu0
      %v2710 = vadd.f32 0.0, %v2709
      %v2711 = vpop.f32.mrb[0].mxu0
      %2712 = vmatprep.mubr.bf16.mxu0 %v2575
      %2713 = vmatmul.mubr.bf16.gmra.mrb[0].mxu0 %v2574
      %v2714 = vpop.f32.mrb[0].mxu0
      %v2715 = vadd.f32 0.0, %v2714
      %v2716 = vpop.f32.mrb[0].mxu0
      %v2717 = vpop.f32.mrb[0].mxu0
      %v2718 = vadd.f32 0.0, %v2717
      %v2719 = vpop.f32.mrb[0].mxu0
      %2720 = vdwg.mxu0
      %2737 = vrot.lane.b32.xlu0 %v2659, 8
      %v2738 = vpop.permute.xlu0 %2737
      %2739 = vrot.lane.b32.xlu0 %v2662, 8
      %v2740 = vpop.permute.xlu0 %2739
      %2741 = vrot.lane.b32.xlu0 %v2667, 8
      %v2742 = vpop.permute.xlu0 %2741
      %2743 = vrot.lane.b32.xlu0 %v2670, 8
      %v2744 = vpop.permute.xlu0 %2743
      %2745 = vrot.lane.b32.xlu0 %v2675, 8
      %v2746 = vpop.permute.xlu0 %2745
      %2747 = vrot.lane.b32.xlu0 %v2678, 8
      %v2748 = vpop.permute.xlu0 %2747
      %2749 = vrot.lane.b32.xlu0 %v2683, 8
      %v2750 = vpop.permute.xlu0 %2749
      %2751 = vrot.lane.b32.xlu0 %v2686, 8
      %v2752 = vpop.permute.xlu0 %2751
      %2753 = vrot.lane.b32.xlu0 %v2691, 8
      %v2754 = vpop.permute.xlu0 %2753
      %2755 = vrot.lane.b32.xlu0 %v2694, 8
      %v2756 = vpop.permute.xlu0 %2755
      %2757 = vrot.lane.b32.xlu0 %v2699, 8
      %v2758 = vpop.permute.xlu0 %2757
      %2759 = vrot.lane.b32.xlu0 %v2702, 8
      %v2760 = vpop.permute.xlu0 %2759
      %2761 = vrot.lane.b32.xlu0 %v2707, 8
      %v2762 = vpop.permute.xlu0 %2761
      %2763 = vrot.lane.b32.xlu0 %v2710, 8
      %v2764 = vpop.permute.xlu0 %2763
      %2765 = vrot.lane.b32.xlu0 %v2715, 8
      %v2766 = vpop.permute.xlu0 %2765
      %2767 = vrot.lane.b32.xlu0 %v2718, 8
      %v2768 = vpop.permute.xlu0 %2767
      %v2785 = vadd.f32 %v2544, %v2738
      %v2786 = vadd.f32 %v2545, %v2740
      %v2787 = vadd.f32 %v2546, %v2742
      %v2788 = vadd.f32 %v2547, %v2744
      %v2789 = vadd.f32 %v2548, %v2746
      %v2790 = vadd.f32 %v2549, %v2748
      %v2791 = vadd.f32 %v2550, %v2750
      %v2792 = vadd.f32 %v2551, %v2752
      %v2793 = vadd.f32 %v2552, %v2754
      %v2794 = vadd.f32 %v2553, %v2756
      %v2795 = vadd.f32 %v2554, %v2758
      %v2796 = vadd.f32 %v2555, %v2760
      %v2797 = vadd.f32 %v2556, %v2762
      %v2798 = vadd.f32 %v2557, %v2764
      %v2799 = vadd.f32 %v2558, %v2766
      %v2800 = vadd.f32 %v2559, %v2768
      %vm2801 = vcmask 130112
      %2802 = vst.msk [vmem:[#allocation4] sm:$0xff] %vm2801, %v2785
      %2803 = vst.msk [vmem:[#allocation4 + $0x8] sm:$0xff] %vm2801, %v2786
      %2804 = vst.msk [vmem:[#allocation4 + $0x10] sm:$0xff] %vm2801, %v2787
      %2805 = vst.msk [vmem:[#allocation4 + $0x18] sm:$0xff] %vm2801, %v2788
      %2806 = vst.msk [vmem:[#allocation4 + $0x20] sm:$0xff] %vm2801, %v2789
      %2807 = vst.msk [vmem:[#allocation4 + $0x28] sm:$0xff] %vm2801, %v2790
      %2808 = vst.msk [vmem:[#allocation4 + $0x30] sm:$0xff] %vm2801, %v2791
      %2809 = vst.msk [vmem:[#allocation4 + $0x38] sm:$0xff] %vm2801, %v2792
      %2810 = vst.msk [vmem:[#allocation4 + $0x40] sm:$0xff] %vm2801, %v2793
      %2811 = vst.msk [vmem:[#allocation4 + $0x48] sm:$0xff] %vm2801, %v2794
      %2812 = vst.msk [vmem:[#allocation4 + $0x50] sm:$0xff] %vm2801, %v2795
      %2813 = vst.msk [vmem:[#allocation4 + $0x58] sm:$0xff] %vm2801, %v2796
      %2814 = vst.msk [vmem:[#allocation4 + $0x60] sm:$0xff] %vm2801, %v2797
      %2815 = vst.msk [vmem:[#allocation4 + $0x68] sm:$0xff] %vm2801, %v2798
      %2816 = vst.msk [vmem:[#allocation4 + $0x70] sm:$0xff] %vm2801, %v2799
      %2817 = vst.msk [vmem:[#allocation4 + $0x78] sm:$0xff] %vm2801, %v2800
      %2818 = vst.msk [vmem:[%s2030] sm:$0xff] %vm1406, %v2095
      %2819 = vst.msk [vmem:[%s2030 + $0x8] sm:$0xff] %vm1406, %v2096
      %2820 = vst.msk [vmem:[%s2030 + $0x10] sm:$0xff] %vm1406, %v2097
      %2821 = vst.msk [vmem:[%s2030 + $0x18] sm:$0xff] %vm1406, %v2098
      %2822 = vst.msk [vmem:[%s2030 + $0x20] sm:$0xff] %vm1406, %v2099
      %2823 = vst.msk [vmem:[%s2030 + $0x28] sm:$0xff] %vm1406, %v2100
      %2824 = vst.msk [vmem:[%s2030 + $0x30] sm:$0xff] %vm1406, %v2101
      %2825 = vst.msk [vmem:[%s2030 + $0x38] sm:$0xff] %vm1406, %v2102
      %2826 = vst.msk [vmem:[%s2030 + $0x40] sm:$0xff] %vm1406, %v2103
      %2827 = vst.msk [vmem:[%s2030 + $0x48] sm:$0xff] %vm1406, %v2104
      %2828 = vst.msk [vmem:[%s2030 + $0x50] sm:$0xff] %vm1406, %v2105
      %2829 = vst.msk [vmem:[%s2030 + $0x58] sm:$0xff] %vm1406, %v2106
      %2830 = vst.msk [vmem:[%s2030 + $0x60] sm:$0xff] %vm1406, %v2107
      %2831 = vst.msk [vmem:[%s2030 + $0x68] sm:$0xff] %vm1406, %v2108
      %2832 = vst.msk [vmem:[%s2030 + $0x70] sm:$0xff] %vm1406, %v2109
      %2833 = vst.msk [vmem:[%s2030 + $0x78] sm:$0xff] %vm1406, %v2110
      %s2834 = scalar_lea.vmem %s375, 2
      %v2835 = vld [vmem:[%s2834] ss:$4 sm:$0x3]
      %v2836 = vld [vmem:[%s381] sm:$0xff]
      %v2837 = vld [vmem:[%s381 + $0x8] sm:$0xff]
      %v2838 = vld [vmem:[%s381 + $0x10] sm:$0xff]
      %v2839 = vld [vmem:[%s381 + $0x18] sm:$0xff]
      %v2840 = vld [vmem:[%s381 + $0x20] sm:$0xff]
      %v2841 = vld [vmem:[%s381 + $0x28] sm:$0xff]
      %v2842 = vld [vmem:[%s381 + $0x30] sm:$0xff]
      %v2843 = vld [vmem:[%s381 + $0x38] sm:$0xff]
      %v2844 = vld [vmem:[%s381 + $0x40] sm:$0xff]
      %v2845 = vld [vmem:[%s381 + $0x48] sm:$0xff]
      %v2846 = vld [vmem:[%s381 + $0x50] sm:$0xff]
      %v2847 = vld [vmem:[%s381 + $0x58] sm:$0xff]
      %v2848 = vld [vmem:[%s381 + $0x60] sm:$0xff]
      %v2849 = vld [vmem:[%s381 + $0x68] sm:$0xff]
      %v2850 = vld [vmem:[%s381 + $0x70] sm:$0xff]
      %v2851 = vld [vmem:[%s381 + $0x78] sm:$0xff]
      %2853 = vset.pattern.permute.xlu0 2
      %2854 = vperm.xlu0 %2853, %v2836
      %v2855 = vpop.permute.xlu0 %2854
      %2858 = vset.pattern.permute.xlu0 2
      %2859 = vperm.xlu0 %2858, %v2837
      %v2860 = vpop.permute.xlu0 %2859
      %2863 = vset.pattern.permute.xlu0 2
      %2864 = vperm.xlu0 %2863, %v2838
      %v2865 = vpop.permute.xlu0 %2864
      %2868 = vset.pattern.permute.xlu0 2
      %2869 = vperm.xlu0 %2868, %v2839
      %v2870 = vpop.permute.xlu0 %2869
      %2873 = vset.pattern.permute.xlu0 2
      %2874 = vperm.xlu0 %2873, %v2840
      %v2875 = vpop.permute.xlu0 %2874
      %2878 = vset.pattern.permute.xlu0 2
      %2879 = vperm.xlu0 %2878, %v2841
      %v2880 = vpop.permute.xlu0 %2879
      %2883 = vset.pattern.permute.xlu0 2
      %2884 = vperm.xlu0 %2883, %v2842
      %v2885 = vpop.permute.xlu0 %2884
      %2888 = vset.pattern.permute.xlu0 2
      %2889 = vperm.xlu0 %2888, %v2843
      %v2890 = vpop.permute.xlu0 %2889
      %2893 = vset.pattern.permute.xlu0 2
      %2894 = vperm.xlu0 %2893, %v2844
      %v2895 = vpop.permute.xlu0 %2894
      %2898 = vset.pattern.permute.xlu0 2
      %2899 = vperm.xlu0 %2898, %v2845
      %v2900 = vpop.permute.xlu0 %2899
      %2903 = vset.pattern.permute.xlu0 2
      %2904 = vperm.xlu0 %2903, %v2846
      %v2905 = vpop.permute.xlu0 %2904
      %2908 = vset.pattern.permute.xlu0 2
      %2909 = vperm.xlu0 %2908, %v2847
      %v2910 = vpop.permute.xlu0 %2909
      %2913 = vset.pattern.permute.xlu0 2
      %2914 = vperm.xlu0 %2913, %v2848
      %v2915 = vpop.permute.xlu0 %2914
      %2918 = vset.pattern.permute.xlu0 2
      %2919 = vperm.xlu0 %2918, %v2849
      %v2920 = vpop.permute.xlu0 %2919
      %2923 = vset.pattern.permute.xlu0 2
      %2924 = vperm.xlu0 %2923, %v2850
      %v2925 = vpop.permute.xlu0 %2924
      %2928 = vset.pattern.permute.xlu0 2
      %2929 = vperm.xlu0 %2928, %v2851
      %v2930 = vpop.permute.xlu0 %2929
      %v2933 = vlaneseq
      %v2934 = vshrl.u32 %v2933, 7
      %v2935 = vsub.s32 0, %v2934
      %v2936 = vrot.slane %v2835, %v2935
      %v2937 = vlaneseq
      %v2938 = vshrl.u32 %v2937, 7
      %v2939 = vsub.s32 1, %v2938
      %v2940 = vrot.slane %v2835, %v2939
      %v2943 = vadd.f32 %v2855, %v2936
      %v2944 = vadd.f32 %v2855, %v2940
      %v2945 = vadd.f32 %v2860, %v2936
      %v2946 = vadd.f32 %v2860, %v2940
      %v2947 = vadd.f32 %v2865, %v2936
      %v2948 = vadd.f32 %v2865, %v2940
      %v2949 = vadd.f32 %v2870, %v2936
      %v2950 = vadd.f32 %v2870, %v2940
      %v2951 = vadd.f32 %v2875, %v2936
      %v2952 = vadd.f32 %v2875, %v2940
      %v2953 = vadd.f32 %v2880, %v2936
      %v2954 = vadd.f32 %v2880, %v2940
      %v2955 = vadd.f32 %v2885, %v2936
      %v2956 = vadd.f32 %v2885, %v2940
      %v2957 = vadd.f32 %v2890, %v2936
      %v2958 = vadd.f32 %v2890, %v2940
      %v2959 = vadd.f32 %v2895, %v2936
      %v2960 = vadd.f32 %v2895, %v2940
      %v2961 = vadd.f32 %v2900, %v2936
      %v2962 = vadd.f32 %v2900, %v2940
      %v2963 = vadd.f32 %v2905, %v2936
      %v2964 = vadd.f32 %v2905, %v2940
      %v2965 = vadd.f32 %v2910, %v2936
      %v2966 = vadd.f32 %v2910, %v2940
      %v2967 = vadd.f32 %v2915, %v2936
      %v2968 = vadd.f32 %v2915, %v2940
      %v2969 = vadd.f32 %v2920, %v2936
      %v2970 = vadd.f32 %v2920, %v2940
      %v2971 = vadd.f32 %v2925, %v2936
      %v2972 = vadd.f32 %v2925, %v2940
      %v2973 = vadd.f32 %v2930, %v2936
      %v2974 = vadd.f32 %v2930, %v2940
      %v2975 = vmul.f32 %v2943, 0.2
      %v2976 = vmul.f32 %v2944, 0.2
      %v2977 = vmul.f32 %v2945, 0.2
      %v2978 = vmul.f32 %v2946, 0.2
      %v2979 = vmul.f32 %v2947, 0.2
      %v2980 = vmul.f32 %v2948, 0.2
      %v2981 = vmul.f32 %v2949, 0.2
      %v2982 = vmul.f32 %v2950, 0.2
      %v2983 = vmul.f32 %v2951, 0.2
      %v2984 = vmul.f32 %v2952, 0.2
      %v2985 = vmul.f32 %v2953, 0.2
      %v2986 = vmul.f32 %v2954, 0.2
      %v2987 = vmul.f32 %v2955, 0.2
      %v2988 = vmul.f32 %v2956, 0.2
      %v2989 = vmul.f32 %v2957, 0.2
      %v2990 = vmul.f32 %v2958, 0.2
      %v2991 = vmul.f32 %v2959, 0.2
      %v2992 = vmul.f32 %v2960, 0.2
      %v2993 = vmul.f32 %v2961, 0.2
      %v2994 = vmul.f32 %v2962, 0.2
      %v2995 = vmul.f32 %v2963, 0.2
      %v2996 = vmul.f32 %v2964, 0.2
      %v2997 = vmul.f32 %v2965, 0.2
      %v2998 = vmul.f32 %v2966, 0.2
      %v2999 = vmul.f32 %v2967, 0.2
      %v3000 = vmul.f32 %v2968, 0.2
      %v3001 = vmul.f32 %v2969, 0.2
      %v3002 = vmul.f32 %v2970, 0.2
      %v3003 = vmul.f32 %v2971, 0.2
      %v3004 = vmul.f32 %v2972, 0.2
      %v3005 = vmul.f32 %v2973, 0.2
      %v3006 = vmul.f32 %v2974, 0.2
      %v3007 = vmax.f32 %v2943, %v2975
      %v3008 = vmax.f32 %v2944, %v2976
      %v3009 = vmax.f32 %v2945, %v2977
      %v3010 = vmax.f32 %v2946, %v2978
      %v3011 = vmax.f32 %v2947, %v2979
      %v3012 = vmax.f32 %v2948, %v2980
      %v3013 = vmax.f32 %v2949, %v2981
      %v3014 = vmax.f32 %v2950, %v2982
      %v3015 = vmax.f32 %v2951, %v2983
      %v3016 = vmax.f32 %v2952, %v2984
      %v3017 = vmax.f32 %v2953, %v2985
      %v3018 = vmax.f32 %v2954, %v2986
      %v3019 = vmax.f32 %v2955, %v2987
      %v3020 = vmax.f32 %v2956, %v2988
      %v3021 = vmax.f32 %v2957, %v2989
      %v3022 = vmax.f32 %v2958, %v2990
      %v3023 = vmax.f32 %v2959, %v2991
      %v3024 = vmax.f32 %v2960, %v2992
      %v3025 = vmax.f32 %v2961, %v2993
      %v3026 = vmax.f32 %v2962, %v2994
      %v3027 = vmax.f32 %v2963, %v2995
      %v3028 = vmax.f32 %v2964, %v2996
      %v3029 = vmax.f32 %v2965, %v2997
      %v3030 = vmax.f32 %v2966, %v2998
      %v3031 = vmax.f32 %v2967, %v2999
      %v3032 = vmax.f32 %v2968, %v3000
      %v3033 = vmax.f32 %v2969, %v3001
      %v3034 = vmax.f32 %v2970, %v3002
      %v3035 = vmax.f32 %v2971, %v3003
      %v3036 = vmax.f32 %v2972, %v3004
      %v3037 = vmax.f32 %v2973, %v3005
      %v3038 = vmax.f32 %v2974, %v3006
      %v3039 = vsel %vm942, %v3007, -1e+30
      %v3040 = vsel %vm943, %v3008, -1e+30
      %v3041 = vsel %vm944, %v3009, -1e+30
      %v3042 = vsel %vm945, %v3010, -1e+30
      %v3043 = vsel %vm946, %v3011, -1e+30
      %v3044 = vsel %vm947, %v3012, -1e+30
      %v3045 = vsel %vm948, %v3013, -1e+30
      %v3046 = vsel %vm949, %v3014, -1e+30
      %v3047 = vsel %vm950, %v3015, -1e+30
      %v3048 = vsel %vm951, %v3016, -1e+30
      %v3049 = vsel %vm952, %v3017, -1e+30
      %v3050 = vsel %vm953, %v3018, -1e+30
      %v3051 = vsel %vm954, %v3019, -1e+30
      %v3052 = vsel %vm955, %v3020, -1e+30
      %v3053 = vsel %vm956, %v3021, -1e+30
      %v3054 = vsel %vm957, %v3022, -1e+30
      %v3055 = vsel %vm958, %v3023, -1e+30
      %v3056 = vsel %vm959, %v3024, -1e+30
      %v3057 = vsel %vm960, %v3025, -1e+30
      %v3058 = vsel %vm961, %v3026, -1e+30
      %v3059 = vsel %vm962, %v3027, -1e+30
      %v3060 = vsel %vm963, %v3028, -1e+30
      %v3061 = vsel %vm964, %v3029, -1e+30
      %v3062 = vsel %vm965, %v3030, -1e+30
      %v3063 = vsel %vm966, %v3031, -1e+30
      %v3064 = vsel %vm967, %v3032, -1e+30
      %v3065 = vsel %vm968, %v3033, -1e+30
      %v3066 = vsel %vm969, %v3034, -1e+30
      %v3067 = vsel %vm970, %v3035, -1e+30
      %v3068 = vsel %vm971, %v3036, -1e+30
      %v3069 = vsel %vm972, %v3037, -1e+30
      %v3070 = vsel %vm973, %v3038, -1e+30
      %s3071 = scalar_lea.vmem [#allocation2], 256
      %v3072 = vld [vmem:[%s3071] sm:$0xff]
      %v3073 = vld [vmem:[%s3071 + $0x8] sm:$0xff]
      %v3074 = vld [vmem:[%s3071 + $0x10] sm:$0xff]
      %v3075 = vld [vmem:[%s3071 + $0x18] sm:$0xff]
      %v3076 = vld [vmem:[%s3071 + $0x20] sm:$0xff]
      %v3077 = vld [vmem:[%s3071 + $0x28] sm:$0xff]
      %v3078 = vld [vmem:[%s3071 + $0x30] sm:$0xff]
      %v3079 = vld [vmem:[%s3071 + $0x38] sm:$0xff]
      %v3080 = vld [vmem:[%s3071 + $0x40] sm:$0xff]
      %v3081 = vld [vmem:[%s3071 + $0x48] sm:$0xff]
      %v3082 = vld [vmem:[%s3071 + $0x50] sm:$0xff]
      %v3083 = vld [vmem:[%s3071 + $0x58] sm:$0xff]
      %v3084 = vld [vmem:[%s3071 + $0x60] sm:$0xff]
      %v3085 = vld [vmem:[%s3071 + $0x68] sm:$0xff]
      %v3086 = vld [vmem:[%s3071 + $0x70] sm:$0xff]
      %v3087 = vld [vmem:[%s3071 + $0x78] sm:$0xff]
      %v3088 = vmax.f32 %v3039, %v3040
      %3089 = vmax.xlane.f32.xlu0 %v3088
      %v3090 = vpop.xlane.xlu0 %3089
      %v3091 = vmax.f32 %v3041, %v3042
      %3092 = vmax.xlane.f32.xlu0 %v3091
      %v3093 = vpop.xlane.xlu0 %3092
      %v3094 = vmax.f32 %v3043, %v3044
      %3095 = vmax.xlane.f32.xlu0 %v3094
      %v3096 = vpop.xlane.xlu0 %3095
      %v3097 = vmax.f32 %v3045, %v3046
      %3098 = vmax.xlane.f32.xlu0 %v3097
      %v3099 = vpop.xlane.xlu0 %3098
      %v3100 = vmax.f32 %v3047, %v3048
      %3101 = vmax.xlane.f32.xlu0 %v3100
      %v3102 = vpop.xlane.xlu0 %3101
      %v3103 = vmax.f32 %v3049, %v3050
      %3104 = vmax.xlane.f32.xlu0 %v3103
      %v3105 = vpop.xlane.xlu0 %3104
      %v3106 = vmax.f32 %v3051, %v3052
      %3107 = vmax.xlane.f32.xlu0 %v3106
      %v3108 = vpop.xlane.xlu0 %3107
      %v3109 = vmax.f32 %v3053, %v3054
      %3110 = vmax.xlane.f32.xlu0 %v3109
      %v3111 = vpop.xlane.xlu0 %3110
      %v3112 = vmax.f32 %v3055, %v3056
      %3113 = vmax.xlane.f32.xlu0 %v3112
      %v3114 = vpop.xlane.xlu0 %3113
      %v3115 = vmax.f32 %v3057, %v3058
      %3116 = vmax.xlane.f32.xlu0 %v3115
      %v3117 = vpop.xlane.xlu0 %3116
      %v3118 = vmax.f32 %v3059, %v3060
      %3119 = vmax.xlane.f32.xlu0 %v3118
      %v3120 = vpop.xlane.xlu0 %3119
      %v3121 = vmax.f32 %v3061, %v3062
      %3122 = vmax.xlane.f32.xlu0 %v3121
      %v3123 = vpop.xlane.xlu0 %3122
      %v3124 = vmax.f32 %v3063, %v3064
      %3125 = vmax.xlane.f32.xlu0 %v3124
      %v3126 = vpop.xlane.xlu0 %3125
      %v3127 = vmax.f32 %v3065, %v3066
      %3128 = vmax.xlane.f32.xlu0 %v3127
      %v3129 = vpop.xlane.xlu0 %3128
      %v3130 = vmax.f32 %v3067, %v3068
      %3131 = vmax.xlane.f32.xlu0 %v3130
      %v3132 = vpop.xlane.xlu0 %3131
      %v3133 = vmax.f32 %v3069, %v3070
      %3134 = vmax.xlane.f32.xlu0 %v3133
      %v3135 = vpop.xlane.xlu0 %3134
      %v3136 = vmax.f32 %v3072, %v3090
      %v3137 = vmax.f32 %v3073, %v3093
      %v3138 = vmax.f32 %v3074, %v3096
      %v3139 = vmax.f32 %v3075, %v3099
      %v3140 = vmax.f32 %v3076, %v3102
      %v3141 = vmax.f32 %v3077, %v3105
      %v3142 = vmax.f32 %v3078, %v3108
      %v3143 = vmax.f32 %v3079, %v3111
      %v3144 = vmax.f32 %v3080, %v3114
      %v3145 = vmax.f32 %v3081, %v3117
      %v3146 = vmax.f32 %v3082, %v3120
      %v3147 = vmax.f32 %v3083, %v3123
      %v3148 = vmax.f32 %v3084, %v3126
      %v3149 = vmax.f32 %v3085, %v3129
      %v3150 = vmax.f32 %v3086, %v3132
      %v3151 = vmax.f32 %v3087, %v3135
      %v3152 = vsub.f32 %v3072, %v3136
      %v3153 = vsub.f32 %v3073, %v3137
      %v3154 = vsub.f32 %v3074, %v3138
      %v3155 = vsub.f32 %v3075, %v3139
      %v3156 = vsub.f32 %v3076, %v3140
      %v3157 = vsub.f32 %v3077, %v3141
      %v3158 = vsub.f32 %v3078, %v3142
      %v3159 = vsub.f32 %v3079, %v3143
      %v3160 = vsub.f32 %v3080, %v3144
      %v3161 = vsub.f32 %v3081, %v3145
      %v3162 = vsub.f32 %v3082, %v3146
      %v3163 = vsub.f32 %v3083, %v3147
      %v3164 = vsub.f32 %v3084, %v3148
      %v3165 = vsub.f32 %v3085, %v3149
      %v3166 = vsub.f32 %v3086, %v3150
      %v3167 = vsub.f32 %v3087, %v3151
      %v3168 = vmul.f32 %v3152, 1.442695
      %v3169 = vpow.pop %v3168
      %v3170 = vmul.f32 %v3153, 1.442695
      %v3171 = vpow.pop %v3170
      %v3172 = vmul.f32 %v3154, 1.442695
      %v3173 = vpow.pop %v3172
      %v3174 = vmul.f32 %v3155, 1.442695
      %v3175 = vpow.pop %v3174
      %v3176 = vmul.f32 %v3156, 1.442695
      %v3177 = vpow.pop %v3176
      %v3178 = vmul.f32 %v3157, 1.442695
      %v3179 = vpow.pop %v3178
      %v3180 = vmul.f32 %v3158, 1.442695
      %v3181 = vpow.pop %v3180
      %v3182 = vmul.f32 %v3159, 1.442695
      %v3183 = vpow.pop %v3182
      %v3184 = vmul.f32 %v3160, 1.442695
      %v3185 = vpow.pop %v3184
      %v3186 = vmul.f32 %v3161, 1.442695
      %v3187 = vpow.pop %v3186
      %v3188 = vmul.f32 %v3162, 1.442695
      %v3189 = vpow.pop %v3188
      %v3190 = vmul.f32 %v3163, 1.442695
      %v3191 = vpow.pop %v3190
      %v3192 = vmul.f32 %v3164, 1.442695
      %v3193 = vpow.pop %v3192
      %v3194 = vmul.f32 %v3165, 1.442695
      %v3195 = vpow.pop %v3194
      %v3196 = vmul.f32 %v3166, 1.442695
      %v3197 = vpow.pop %v3196
      %v3198 = vmul.f32 %v3167, 1.442695
      %v3199 = vpow.pop %v3198
      %3201 = vset.pattern.permute.xlu0 0
      %3202 = vperm.xlu0 %3201, %v3136
      %v3203 = vpop.permute.xlu0 %3202
      %3206 = vset.pattern.permute.xlu0 0
      %3207 = vperm.xlu0 %3206, %v3137
      %v3208 = vpop.permute.xlu0 %3207
      %3211 = vset.pattern.permute.xlu0 0
      %3212 = vperm.xlu0 %3211, %v3138
      %v3213 = vpop.permute.xlu0 %3212
      %3216 = vset.pattern.permute.xlu0 0
      %3217 = vperm.xlu0 %3216, %v3139
      %v3218 = vpop.permute.xlu0 %3217
      %3221 = vset.pattern.permute.xlu0 0
      %3222 = vperm.xlu0 %3221, %v3140
      %v3223 = vpop.permute.xlu0 %3222
      %3226 = vset.pattern.permute.xlu0 0
      %3227 = vperm.xlu0 %3226, %v3141
      %v3228 = vpop.permute.xlu0 %3227
      %3231 = vset.pattern.permute.xlu0 0
      %3232 = vperm.xlu0 %3231, %v3142
      %v3233 = vpop.permute.xlu0 %3232
      %3236 = vset.pattern.permute.xlu0 0
      %3237 = vperm.xlu0 %3236, %v3143
      %v3238 = vpop.permute.xlu0 %3237
      %3241 = vset.pattern.permute.xlu0 0
      %3242 = vperm.xlu0 %3241, %v3144
      %v3243 = vpop.permute.xlu0 %3242
      %3246 = vset.pattern.permute.xlu0 0
      %3247 = vperm.xlu0 %3246, %v3145
      %v3248 = vpop.permute.xlu0 %3247
      %3251 = vset.pattern.permute.xlu0 0
      %3252 = vperm.xlu0 %3251, %v3146
      %v3253 = vpop.permute.xlu0 %3252
      %3256 = vset.pattern.permute.xlu0 0
      %3257 = vperm.xlu0 %3256, %v3147
      %v3258 = vpop.permute.xlu0 %3257
      %3261 = vset.pattern.permute.xlu0 0
      %3262 = vperm.xlu0 %3261, %v3148
      %v3263 = vpop.permute.xlu0 %3262
      %3266 = vset.pattern.permute.xlu0 0
      %3267 = vperm.xlu0 %3266, %v3149
      %v3268 = vpop.permute.xlu0 %3267
      %3271 = vset.pattern.permute.xlu0 0
      %3272 = vperm.xlu0 %3271, %v3150
      %v3273 = vpop.permute.xlu0 %3272
      %3276 = vset.pattern.permute.xlu0 0
      %3277 = vperm.xlu0 %3276, %v3151
      %v3278 = vpop.permute.xlu0 %3277
      %v3280 = vsub.f32 %v3039, %v3203
      %v3281 = vsub.f32 %v3040, %v3203
      %v3282 = vsub.f32 %v3041, %v3208
      %v3283 = vsub.f32 %v3042, %v3208
      %v3284 = vsub.f32 %v3043, %v3213
      %v3285 = vsub.f32 %v3044, %v3213
      %v3286 = vsub.f32 %v3045, %v3218
      %v3287 = vsub.f32 %v3046, %v3218
      %v3288 = vsub.f32 %v3047, %v3223
      %v3289 = vsub.f32 %v3048, %v3223
      %v3290 = vsub.f32 %v3049, %v3228
      %v3291 = vsub.f32 %v3050, %v3228
      %v3292 = vsub.f32 %v3051, %v3233
      %v3293 = vsub.f32 %v3052, %v3233
      %v3294 = vsub.f32 %v3053, %v3238
      %v3295 = vsub.f32 %v3054, %v3238
      %v3296 = vsub.f32 %v3055, %v3243
      %v3297 = vsub.f32 %v3056, %v3243
      %v3298 = vsub.f32 %v3057, %v3248
      %v3299 = vsub.f32 %v3058, %v3248
      %v3300 = vsub.f32 %v3059, %v3253
      %v3301 = vsub.f32 %v3060, %v3253
      %v3302 = vsub.f32 %v3061, %v3258
      %v3303 = vsub.f32 %v3062, %v3258
      %v3304 = vsub.f32 %v3063, %v3263
      %v3305 = vsub.f32 %v3064, %v3263
      %v3306 = vsub.f32 %v3065, %v3268
      %v3307 = vsub.f32 %v3066, %v3268
      %v3308 = vsub.f32 %v3067, %v3273
      %v3309 = vsub.f32 %v3068, %v3273
      %v3310 = vsub.f32 %v3069, %v3278
      %v3311 = vsub.f32 %v3070, %v3278
      %v3312 = vmul.f32 %v3280, 1.442695
      %v3313 = vpow.pop %v3312
      %v3314 = vmul.f32 %v3281, 1.442695
      %v3315 = vpow.pop %v3314
      %v3316 = vmul.f32 %v3282, 1.442695
      %v3317 = vpow.pop %v3316
      %v3318 = vmul.f32 %v3283, 1.442695
      %v3319 = vpow.pop %v3318
      %v3320 = vmul.f32 %v3284, 1.442695
      %v3321 = vpow.pop %v3320
      %v3322 = vmul.f32 %v3285, 1.442695
      %v3323 = vpow.pop %v3322
      %v3324 = vmul.f32 %v3286, 1.442695
      %v3325 = vpow.pop %v3324
      %v3326 = vmul.f32 %v3287, 1.442695
      %v3327 = vpow.pop %v3326
      %v3328 = vmul.f32 %v3288, 1.442695
      %v3329 = vpow.pop %v3328
      %v3330 = vmul.f32 %v3289, 1.442695
      %v3331 = vpow.pop %v3330
      %v3332 = vmul.f32 %v3290, 1.442695
      %v3333 = vpow.pop %v3332
      %v3334 = vmul.f32 %v3291, 1.442695
      %v3335 = vpow.pop %v3334
      %v3336 = vmul.f32 %v3292, 1.442695
      %v3337 = vpow.pop %v3336
      %v3338 = vmul.f32 %v3293, 1.442695
      %v3339 = vpow.pop %v3338
      %v3340 = vmul.f32 %v3294, 1.442695
      %v3341 = vpow.pop %v3340
      %v3342 = vmul.f32 %v3295, 1.442695
      %v3343 = vpow.pop %v3342
      %v3344 = vmul.f32 %v3296, 1.442695
      %v3345 = vpow.pop %v3344
      %v3346 = vmul.f32 %v3297, 1.442695
      %v3347 = vpow.pop %v3346
      %v3348 = vmul.f32 %v3298, 1.442695
      %v3349 = vpow.pop %v3348
      %v3350 = vmul.f32 %v3299, 1.442695
      %v3351 = vpow.pop %v3350
      %v3352 = vmul.f32 %v3300, 1.442695
      %v3353 = vpow.pop %v3352
      %v3354 = vmul.f32 %v3301, 1.442695
      %v3355 = vpow.pop %v3354
      %v3356 = vmul.f32 %v3302, 1.442695
      %v3357 = vpow.pop %v3356
      %v3358 = vmul.f32 %v3303, 1.442695
      %v3359 = vpow.pop %v3358
      %v3360 = vmul.f32 %v3304, 1.442695
      %v3361 = vpow.pop %v3360
      %v3362 = vmul.f32 %v3305, 1.442695
      %v3363 = vpow.pop %v3362
      %v3364 = vmul.f32 %v3306, 1.442695
      %v3365 = vpow.pop %v3364
      %v3366 = vmul.f32 %v3307, 1.442695
      %v3367 = vpow.pop %v3366
      %v3368 = vmul.f32 %v3308, 1.442695
      %v3369 = vpow.pop %v3368
      %v3370 = vmul.f32 %v3309, 1.442695
      %v3371 = vpow.pop %v3370
      %v3372 = vmul.f32 %v3310, 1.442695
      %v3373 = vpow.pop %v3372
      %v3374 = vmul.f32 %v3311, 1.442695
      %v3375 = vpow.pop %v3374
      %s3376 = scalar_lea.vmem [#allocation3], 256
      %v3377 = vld [vmem:[%s3376] sm:$0xff]
      %v3378 = vld [vmem:[%s3376 + $0x8] sm:$0xff]
      %v3379 = vld [vmem:[%s3376 + $0x10] sm:$0xff]
      %v3380 = vld [vmem:[%s3376 + $0x18] sm:$0xff]
      %v3381 = vld [vmem:[%s3376 + $0x20] sm:$0xff]
      %v3382 = vld [vmem:[%s3376 + $0x28] sm:$0xff]
      %v3383 = vld [vmem:[%s3376 + $0x30] sm:$0xff]
      %v3384 = vld [vmem:[%s3376 + $0x38] sm:$0xff]
      %v3385 = vld [vmem:[%s3376 + $0x40] sm:$0xff]
      %v3386 = vld [vmem:[%s3376 + $0x48] sm:$0xff]
      %v3387 = vld [vmem:[%s3376 + $0x50] sm:$0xff]
      %v3388 = vld [vmem:[%s3376 + $0x58] sm:$0xff]
      %v3389 = vld [vmem:[%s3376 + $0x60] sm:$0xff]
      %v3390 = vld [vmem:[%s3376 + $0x68] sm:$0xff]
      %v3391 = vld [vmem:[%s3376 + $0x70] sm:$0xff]
      %v3392 = vld [vmem:[%s3376 + $0x78] sm:$0xff]
      %v3393 = vmul.f32 %v3169, %v3377
      %v3394 = vmul.f32 %v3171, %v3378
      %v3395 = vmul.f32 %v3173, %v3379
      %v3396 = vmul.f32 %v3175, %v3380
      %v3397 = vmul.f32 %v3177, %v3381
      %v3398 = vmul.f32 %v3179, %v3382
      %v3399 = vmul.f32 %v3181, %v3383
      %v3400 = vmul.f32 %v3183, %v3384
      %v3401 = vmul.f32 %v3185, %v3385
      %v3402 = vmul.f32 %v3187, %v3386
      %v3403 = vmul.f32 %v3189, %v3387
      %v3404 = vmul.f32 %v3191, %v3388
      %v3405 = vmul.f32 %v3193, %v3389
      %v3406 = vmul.f32 %v3195, %v3390
      %v3407 = vmul.f32 %v3197, %v3391
      %v3408 = vmul.f32 %v3199, %v3392
      %v3409 = vadd.f32 %v3313, %v3315
      %3410 = vadd.xlane.f32.xlu0 %v3409
      %v3411 = vpop.xlane.xlu0 %3410
      %v3412 = vadd.f32 %v3317, %v3319
      %3413 = vadd.xlane.f32.xlu0 %v3412
      %v3414 = vpop.xlane.xlu0 %3413
      %v3415 = vadd.f32 %v3321, %v3323
      %3416 = vadd.xlane.f32.xlu0 %v3415
      %v3417 = vpop.xlane.xlu0 %3416
      %v3418 = vadd.f32 %v3325, %v3327
      %3419 = vadd.xlane.f32.xlu0 %v3418
      %v3420 = vpop.xlane.xlu0 %3419
      %v3421 = vadd.f32 %v3329, %v3331
      %3422 = vadd.xlane.f32.xlu0 %v3421
      %v3423 = vpop.xlane.xlu0 %3422
      %v3424 = vadd.f32 %v3333, %v3335
      %3425 = vadd.xlane.f32.xlu0 %v3424
      %v3426 = vpop.xlane.xlu0 %3425
      %v3427 = vadd.f32 %v3337, %v3339
      %3428 = vadd.xlane.f32.xlu0 %v3427
      %v3429 = vpop.xlane.xlu0 %3428
      %v3430 = vadd.f32 %v3341, %v3343
      %3431 = vadd.xlane.f32.xlu0 %v3430
      %v3432 = vpop.xlane.xlu0 %3431
      %v3433 = vadd.f32 %v3345, %v3347
      %3434 = vadd.xlane.f32.xlu0 %v3433
      %v3435 = vpop.xlane.xlu0 %3434
      %v3436 = vadd.f32 %v3349, %v3351
      %3437 = vadd.xlane.f32.xlu0 %v3436
      %v3438 = vpop.xlane.xlu0 %3437
      %v3439 = vadd.f32 %v3353, %v3355
      %3440 = vadd.xlane.f32.xlu0 %v3439
      %v3441 = vpop.xlane.xlu0 %3440
      %v3442 = vadd.f32 %v3357, %v3359
      %3443 = vadd.xlane.f32.xlu0 %v3442
      %v3444 = vpop.xlane.xlu0 %3443
      %v3445 = vadd.f32 %v3361, %v3363
      %3446 = vadd.xlane.f32.xlu0 %v3445
      %v3447 = vpop.xlane.xlu0 %3446
      %v3448 = vadd.f32 %v3365, %v3367
      %3449 = vadd.xlane.f32.xlu0 %v3448
      %v3450 = vpop.xlane.xlu0 %3449
      %v3451 = vadd.f32 %v3369, %v3371
      %3452 = vadd.xlane.f32.xlu0 %v3451
      %v3453 = vpop.xlane.xlu0 %3452
      %v3454 = vadd.f32 %v3373, %v3375
      %3455 = vadd.xlane.f32.xlu0 %v3454
      %v3456 = vpop.xlane.xlu0 %3455
      %v3457 = vadd.f32 %v3393, %v3411
      %v3458 = vadd.f32 %v3394, %v3414
      %v3459 = vadd.f32 %v3395, %v3417
      %v3460 = vadd.f32 %v3396, %v3420
      %v3461 = vadd.f32 %v3397, %v3423
      %v3462 = vadd.f32 %v3398, %v3426
      %v3463 = vadd.f32 %v3399, %v3429
      %v3464 = vadd.f32 %v3400, %v3432
      %v3465 = vadd.f32 %v3401, %v3435
      %v3466 = vadd.f32 %v3402, %v3438
      %v3467 = vadd.f32 %v3403, %v3441
      %v3468 = vadd.f32 %v3404, %v3444
      %v3469 = vadd.f32 %v3405, %v3447
      %v3470 = vadd.f32 %v3406, %v3450
      %v3471 = vadd.f32 %v3407, %v3453
      %v3472 = vadd.f32 %v3408, %v3456
      %3473 = vst.msk [vmem:[%s3376] sm:$0xff] %vm1406, %v3457
      %3474 = vst.msk [vmem:[%s3376 + $0x8] sm:$0xff] %vm1406, %v3458
      %3475 = vst.msk [vmem:[%s3376 + $0x10] sm:$0xff] %vm1406, %v3459
      %3476 = vst.msk [vmem:[%s3376 + $0x18] sm:$0xff] %vm1406, %v3460
      %3477 = vst.msk [vmem:[%s3376 + $0x20] sm:$0xff] %vm1406, %v3461
      %3478 = vst.msk [vmem:[%s3376 + $0x28] sm:$0xff] %vm1406, %v3462
      %3479 = vst.msk [vmem:[%s3376 + $0x30] sm:$0xff] %vm1406, %v3463
      %3480 = vst.msk [vmem:[%s3376 + $0x38] sm:$0xff] %vm1406, %v3464
      %3481 = vst.msk [vmem:[%s3376 + $0x40] sm:$0xff] %vm1406, %v3465
      %3482 = vst.msk [vmem:[%s3376 + $0x48] sm:$0xff] %vm1406, %v3466
      %3483 = vst.msk [vmem:[%s3376 + $0x50] sm:$0xff] %vm1406, %v3467
      %3484 = vst.msk [vmem:[%s3376 + $0x58] sm:$0xff] %vm1406, %v3468
      %3485 = vst.msk [vmem:[%s3376 + $0x60] sm:$0xff] %vm1406, %v3469
      %3486 = vst.msk [vmem:[%s3376 + $0x68] sm:$0xff] %vm1406, %v3470
      %3487 = vst.msk [vmem:[%s3376 + $0x70] sm:$0xff] %vm1406, %v3471
      %3488 = vst.msk [vmem:[%s3376 + $0x78] sm:$0xff] %vm1406, %v3472
      %v3489 = vld [vmem:[#allocation4] sm:$0xff]
      %v3490 = vld [vmem:[#allocation4 + $0x8] sm:$0xff]
      %v3491 = vld [vmem:[#allocation4 + $0x10] sm:$0xff]
      %v3492 = vld [vmem:[#allocation4 + $0x18] sm:$0xff]
      %v3493 = vld [vmem:[#allocation4 + $0x20] sm:$0xff]
      %v3494 = vld [vmem:[#allocation4 + $0x28] sm:$0xff]
      %v3495 = vld [vmem:[#allocation4 + $0x30] sm:$0xff]
      %v3496 = vld [vmem:[#allocation4 + $0x38] sm:$0xff]
      %v3497 = vld [vmem:[#allocation4 + $0x40] sm:$0xff]
      %v3498 = vld [vmem:[#allocation4 + $0x48] sm:$0xff]
      %v3499 = vld [vmem:[#allocation4 + $0x50] sm:$0xff]
      %v3500 = vld [vmem:[#allocation4 + $0x58] sm:$0xff]
      %v3501 = vld [vmem:[#allocation4 + $0x60] sm:$0xff]
      %v3502 = vld [vmem:[#allocation4 + $0x68] sm:$0xff]
      %v3503 = vld [vmem:[#allocation4 + $0x70] sm:$0xff]
      %v3504 = vld [vmem:[#allocation4 + $0x78] sm:$0xff]
      %3506 = vset.pattern.permute.xlu0 0
      %3507 = vperm.xlu0 %3506, %v3169
      %v3508 = vpop.permute.xlu0 %3507
      %3511 = vset.pattern.permute.xlu0 0
      %3512 = vperm.xlu0 %3511, %v3171
      %v3513 = vpop.permute.xlu0 %3512
      %3516 = vset.pattern.permute.xlu0 0
      %3517 = vperm.xlu0 %3516, %v3173
      %v3518 = vpop.permute.xlu0 %3517
      %3521 = vset.pattern.permute.xlu0 0
      %3522 = vperm.xlu0 %3521, %v3175
      %v3523 = vpop.permute.xlu0 %3522
      %3526 = vset.pattern.permute.xlu0 0
      %3527 = vperm.xlu0 %3526, %v3177
      %v3528 = vpop.permute.xlu0 %3527
      %3531 = vset.pattern.permute.xlu0 0
      %3532 = vperm.xlu0 %3531, %v3179
      %v3533 = vpop.permute.xlu0 %3532
      %3536 = vset.pattern.permute.xlu0 0
      %3537 = vperm.xlu0 %3536, %v3181
      %v3538 = vpop.permute.xlu0 %3537
      %3541 = vset.pattern.permute.xlu0 0
      %3542 = vperm.xlu0 %3541, %v3183
      %v3543 = vpop.permute.xlu0 %3542
      %3546 = vset.pattern.permute.xlu0 0
      %3547 = vperm.xlu0 %3546, %v3185
      %v3548 = vpop.permute.xlu0 %3547
      %3551 = vset.pattern.permute.xlu0 0
      %3552 = vperm.xlu0 %3551, %v3187
      %v3553 = vpop.permute.xlu0 %3552
      %3556 = vset.pattern.permute.xlu0 0
      %3557 = vperm.xlu0 %3556, %v3189
      %v3558 = vpop.permute.xlu0 %3557
      %3561 = vset.pattern.permute.xlu0 0
      %3562 = vperm.xlu0 %3561, %v3191
      %v3563 = vpop.permute.xlu0 %3562
      %3566 = vset.pattern.permute.xlu0 0
      %3567 = vperm.xlu0 %3566, %v3193
      %v3568 = vpop.permute.xlu0 %3567
      %3571 = vset.pattern.permute.xlu0 0
      %3572 = vperm.xlu0 %3571, %v3195
      %v3573 = vpop.permute.xlu0 %3572
      %3576 = vset.pattern.permute.xlu0 0
      %3577 = vperm.xlu0 %3576, %v3197
      %v3578 = vpop.permute.xlu0 %3577
      %3581 = vset.pattern.permute.xlu0 0
      %3582 = vperm.xlu0 %3581, %v3199
      %v3583 = vpop.permute.xlu0 %3582
      %v3585 = vmul.f32 %v3508, %v3489
      %v3586 = vmul.f32 %v3513, %v3490
      %v3587 = vmul.f32 %v3518, %v3491
      %v3588 = vmul.f32 %v3523, %v3492
      %v3589 = vmul.f32 %v3528, %v3493
      %v3590 = vmul.f32 %v3533, %v3494
      %v3591 = vmul.f32 %v3538, %v3495
      %v3592 = vmul.f32 %v3543, %v3496
      %v3593 = vmul.f32 %v3548, %v3497
      %v3594 = vmul.f32 %v3553, %v3498
      %v3595 = vmul.f32 %v3558, %v3499
      %v3596 = vmul.f32 %v3563, %v3500
      %v3597 = vmul.f32 %v3568, %v3501
      %v3598 = vmul.f32 %v3573, %v3502
      %v3599 = vmul.f32 %v3578, %v3503
      %v3600 = vmul.f32 %v3583, %v3504
      %v3601 = vpack.c.bf16 %v3317, %v3313
      %v3602 = vpack.c.bf16 %v3319, %v3315
      %v3603 = vpack.c.bf16 %v3325, %v3321
      %v3604 = vpack.c.bf16 %v3327, %v3323
      %v3605 = vpack.c.bf16 %v3333, %v3329
      %v3606 = vpack.c.bf16 %v3335, %v3331
      %v3607 = vpack.c.bf16 %v3341, %v3337
      %v3608 = vpack.c.bf16 %v3343, %v3339
      %v3609 = vpack.c.bf16 %v3349, %v3345
      %v3610 = vpack.c.bf16 %v3351, %v3347
      %v3611 = vpack.c.bf16 %v3357, %v3353
      %v3612 = vpack.c.bf16 %v3359, %v3355
      %v3613 = vpack.c.bf16 %v3365, %v3361
      %v3614 = vpack.c.bf16 %v3367, %v3363
      %v3615 = vpack.c.bf16 %v3373, %v3369
      %v3616 = vpack.c.bf16 %v3375, %v3371
      %3617 = vrot.lane.b32.xlu0 %v1615, 112
      %v3618 = vpop.permute.xlu0 %3617
      %3619 = vrot.lane.b32.xlu0 %v1616, 112
      %v3620 = vpop.permute.xlu0 %3619
      %3621 = vrot.lane.b32.xlu0 %v1617, 112
      %v3622 = vpop.permute.xlu0 %3621
      %3623 = vrot.lane.b32.xlu0 %v1618, 112
      %v3624 = vpop.permute.xlu0 %3623
      %3625 = vrot.lane.b32.xlu0 %v1619, 112
      %v3626 = vpop.permute.xlu0 %3625
      %3627 = vrot.lane.b32.xlu0 %v1620, 112
      %v3628 = vpop.permute.xlu0 %3627
      %3629 = vrot.lane.b32.xlu0 %v1621, 112
      %v3630 = vpop.permute.xlu0 %3629
      %3631 = vrot.lane.b32.xlu0 %v1622, 112
      %v3632 = vpop.permute.xlu0 %3631
      %3633 = vrot.lane.b32.xlu0 %v1623, 112
      %v3634 = vpop.permute.xlu0 %3633
      %3635 = vrot.lane.b32.xlu0 %v1624, 112
      %v3636 = vpop.permute.xlu0 %3635
      %3637 = vrot.lane.b32.xlu0 %v1625, 112
      %v3638 = vpop.permute.xlu0 %3637
      %3639 = vrot.lane.b32.xlu0 %v1626, 112
      %v3640 = vpop.permute.xlu0 %3639
      %3641 = vrot.lane.b32.xlu0 %v1627, 112
      %v3642 = vpop.permute.xlu0 %3641
      %3643 = vrot.lane.b32.xlu0 %v1628, 112
      %v3644 = vpop.permute.xlu0 %3643
      %3645 = vrot.lane.b32.xlu0 %v1629, 112
      %v3646 = vpop.permute.xlu0 %3645
      %3647 = vrot.lane.b32.xlu0 %v1630, 112
      %v3648 = vpop.permute.xlu0 %3647
      %3665 = vmatprep.subr.bf16.mxu0 0
      %3666 = vmatpush1.bf16.msra.mxu0 %v3618
      %3667 = vmatprep.subr.bf16.mxu0 0
      %3668 = vmatpush1.bf16.msra.mxu0 %v3620
      %3669 = vmatprep.subr.bf16.mxu0 0
      %3670 = vmatpush1.bf16.msra.mxu0 %v3622
      %3671 = vmatprep.subr.bf16.mxu0 0
      %3672 = vmatpush1.bf16.msra.mxu0 %v3624
      %3673 = vmatprep.subr.bf16.mxu0 0
      %3674 = vmatpush1.bf16.msra.mxu0 %v3626
      %3675 = vmatprep.subr.bf16.mxu0 0
      %3676 = vmatpush1.bf16.msra.mxu0 %v3628
      %3677 = vmatprep.subr.bf16.mxu0 0
      %3678 = vmatpush1.bf16.msra.mxu0 %v3630
      %3679 = vmatprep.subr.bf16.mxu0 0
      %3680 = vmatpush1.bf16.msra.mxu0 %v3632
      %3681 = vmatprep.subr.bf16.mxu0 0
      %3682 = vmatpush1.bf16.msra.mxu0 %v3634
      %3683 = vmatprep.subr.bf16.mxu0 0
      %3684 = vmatpush1.bf16.msra.mxu0 %v3636
      %3685 = vmatprep.subr.bf16.mxu0 0
      %3686 = vmatpush1.bf16.msra.mxu0 %v3638
      %3687 = vmatprep.subr.bf16.mxu0 0
      %3688 = vmatpush1.bf16.msra.mxu0 %v3640
      %3689 = vmatprep.subr.bf16.mxu0 0
      %3690 = vmatpush1.bf16.msra.mxu0 %v3642
      %3691 = vmatprep.subr.bf16.mxu0 0
      %3692 = vmatpush1.bf16.msra.mxu0 %v3644
      %3693 = vmatprep.subr.bf16.mxu0 0
      %3694 = vmatpush1.bf16.msra.mxu0 %v3646
      %3695 = vmatprep.subr.bf16.mxu0 0
      %3696 = vmatpush1.bf16.msra.mxu0 %v3648
      %3697 = vmatprep.mubr.bf16.mxu0 %v3602
      %3698 = vmatmul.mubr.bf16.gmra.mrb[0].mxu0 %v3601
      %v3699 = vpop.f32.mrb[0].mxu0
      %v3700 = vadd.f32 0.0, %v3699
      %v3701 = vpop.f32.mrb[0].mxu0
      %v3702 = vpop.f32.mrb[0].mxu0
      %v3703 = vadd.f32 0.0, %v3702
      %v3704 = vpop.f32.mrb[0].mxu0
      %3705 = vmatprep.mubr.bf16.mxu0 %v3604
      %3706 = vmatmul.mubr.bf16.gmra.mrb[0].mxu0 %v3603
      %v3707 = vpop.f32.mrb[0].mxu0
      %v3708 = vadd.f32 0.0, %v3707
      %v3709 = vpop.f32.mrb[0].mxu0
      %v3710 = vpop.f32.mrb[0].mxu0
      %v3711 = vadd.f32 0.0, %v3710
      %v3712 = vpop.f32.mrb[0].mxu0
      %3713 = vmatprep.mubr.bf16.mxu0 %v3606
      %3714 = vmatmul.mubr.bf16.gmra.mrb[0].mxu0 %v3605
      %v3715 = vpop.f32.mrb[0].mxu0
      %v3716 = vadd.f32 0.0, %v3715
      %v3717 = vpop.f32.mrb[0].mxu0
      %v3718 = vpop.f32.mrb[0].mxu0
      %v3719 = vadd.f32 0.0, %v3718
      %v3720 = vpop.f32.mrb[0].mxu0
      %3721 = vmatprep.mubr.bf16.mxu0 %v3608
      %3722 = vmatmul.mubr.bf16.gmra.mrb[0].mxu0 %v3607
      %v3723 = vpop.f32.mrb[0].mxu0
      %v3724 = vadd.f32 0.0, %v3723
      %v3725 = vpop.f32.mrb[0].mxu0
      %v3726 = vpop.f32.mrb[0].mxu0
      %v3727 = vadd.f32 0.0, %v3726
      %v3728 = vpop.f32.mrb[0].mxu0
      %3729 = vmatprep.mubr.bf16.mxu0 %v3610
      %3730 = vmatmul.mubr.bf16.gmra.mrb[0].mxu0 %v3609
      %v3731 = vpop.f32.mrb[0].mxu0
      %v3732 = vadd.f32 0.0, %v3731
      %v3733 = vpop.f32.mrb[0].mxu0
      %v3734 = vpop.f32.mrb[0].mxu0
      %v3735 = vadd.f32 0.0, %v3734
      %v3736 = vpop.f32.mrb[0].mxu0
      %3737 = vmatprep.mubr.bf16.mxu0 %v3612
      %3738 = vmatmul.mubr.bf16.gmra.mrb[0].mxu0 %v3611
      %v3739 = vpop.f32.mrb[0].mxu0
      %v3740 = vadd.f32 0.0, %v3739
      %v3741 = vpop.f32.mrb[0].mxu0
      %v3742 = vpop.f32.mrb[0].mxu0
      %v3743 = vadd.f32 0.0, %v3742
      %v3744 = vpop.f32.mrb[0].mxu0
      %3745 = vmatprep.mubr.bf16.mxu0 %v3614
      %3746 = vmatmul.mubr.bf16.gmra.mrb[0].mxu0 %v3613
      %v3747 = vpop.f32.mrb[0].mxu0
      %v3748 = vadd.f32 0.0, %v3747
      %v3749 = vpop.f32.mrb[0].mxu0
      %v3750 = vpop.f32.mrb[0].mxu0
      %v3751 = vadd.f32 0.0, %v3750
      %v3752 = vpop.f32.mrb[0].mxu0
      %3753 = vmatprep.mubr.bf16.mxu0 %v3616
      %3754 = vmatmul.mubr.bf16.gmra.mrb[0].mxu0 %v3615
      %v3755 = vpop.f32.mrb[0].mxu0
      %v3756 = vadd.f32 0.0, %v3755
      %v3757 = vpop.f32.mrb[0].mxu0
      %v3758 = vpop.f32.mrb[0].mxu0
      %v3759 = vadd.f32 0.0, %v3758
      %v3760 = vpop.f32.mrb[0].mxu0
      %3761 = vdwg.mxu0
      %3778 = vrot.lane.b32.xlu0 %v3700, 16
      %v3779 = vpop.permute.xlu0 %3778
      %3780 = vrot.lane.b32.xlu0 %v3703, 16
      %v3781 = vpop.permute.xlu0 %3780
      %3782 = vrot.lane.b32.xlu0 %v3708, 16
      %v3783 = vpop.permute.xlu0 %3782
      %3784 = vrot.lane.b32.xlu0 %v3711, 16
      %v3785 = vpop.permute.xlu0 %3784
      %3786 = vrot.lane.b32.xlu0 %v3716, 16
      %v3787 = vpop.permute.xlu0 %3786
      %3788 = vrot.lane.b32.xlu0 %v3719, 16
      %v3789 = vpop.permute.xlu0 %3788
      %3790 = vrot.lane.b32.xlu0 %v3724, 16
      %v3791 = vpop.permute.xlu0 %3790
      %3792 = vrot.lane.b32.xlu0 %v3727, 16
      %v3793 = vpop.permute.xlu0 %3792
      %3794 = vrot.lane.b32.xlu0 %v3732, 16
      %v3795 = vpop.permute.xlu0 %3794
      %3796 = vrot.lane.b32.xlu0 %v3735, 16
      %v3797 = vpop.permute.xlu0 %3796
      %3798 = vrot.lane.b32.xlu0 %v3740, 16
      %v3799 = vpop.permute.xlu0 %3798
      %3800 = vrot.lane.b32.xlu0 %v3743, 16
      %v3801 = vpop.permute.xlu0 %3800
      %3802 = vrot.lane.b32.xlu0 %v3748, 16
      %v3803 = vpop.permute.xlu0 %3802
      %3804 = vrot.lane.b32.xlu0 %v3751, 16
      %v3805 = vpop.permute.xlu0 %3804
      %3806 = vrot.lane.b32.xlu0 %v3756, 16
      %v3807 = vpop.permute.xlu0 %3806
      %3808 = vrot.lane.b32.xlu0 %v3759, 16
      %v3809 = vpop.permute.xlu0 %3808
      %v3826 = vadd.f32 %v3585, %v3779
      %v3827 = vadd.f32 %v3586, %v3781
      %v3828 = vadd.f32 %v3587, %v3783
      %v3829 = vadd.f32 %v3588, %v3785
      %v3830 = vadd.f32 %v3589, %v3787
      %v3831 = vadd.f32 %v3590, %v3789
      %v3832 = vadd.f32 %v3591, %v3791
      %v3833 = vadd.f32 %v3592, %v3793
      %v3834 = vadd.f32 %v3593, %v3795
      %v3835 = vadd.f32 %v3594, %v3797
      %v3836 = vadd.f32 %v3595, %v3799
      %v3837 = vadd.f32 %v3596, %v3801
      %v3838 = vadd.f32 %v3597, %v3803
      %v3839 = vadd.f32 %v3598, %v3805
      %v3840 = vadd.f32 %v3599, %v3807
      %v3841 = vadd.f32 %v3600, %v3809
      %vm3842 = vcmask 195712
      %3843 = vst.msk [vmem:[#allocation4] sm:$0xff] %vm3842, %v3826
      %3844 = vst.msk [vmem:[#allocation4 + $0x8] sm:$0xff] %vm3842, %v3827
      %3845 = vst.msk [vmem:[#allocation4 + $0x10] sm:$0xff] %vm3842, %v3828
      %3846 = vst.msk [vmem:[#allocation4 + $0x18] sm:$0xff] %vm3842, %v3829
      %3847 = vst.msk [vmem:[#allocation4 + $0x20] sm:$0xff] %vm3842, %v3830
      %3848 = vst.msk [vmem:[#allocation4 + $0x28] sm:$0xff] %vm3842, %v3831
      %3849 = vst.msk [vmem:[#allocation4 + $0x30] sm:$0xff] %vm3842, %v3832
      %3850 = vst.msk [vmem:[#allocation4 + $0x38] sm:$0xff] %vm3842, %v3833
      %3851 = vst.msk [vmem:[#allocation4 + $0x40] sm:$0xff] %vm3842, %v3834
      %3852 = vst.msk [vmem:[#allocation4 + $0x48] sm:$0xff] %vm3842, %v3835
      %3853 = vst.msk [vmem:[#allocation4 + $0x50] sm:$0xff] %vm3842, %v3836
      %3854 = vst.msk [vmem:[#allocation4 + $0x58] sm:$0xff] %vm3842, %v3837
      %3855 = vst.msk [vmem:[#allocation4 + $0x60] sm:$0xff] %vm3842, %v3838
      %3856 = vst.msk [vmem:[#allocation4 + $0x68] sm:$0xff] %vm3842, %v3839
      %3857 = vst.msk [vmem:[#allocation4 + $0x70] sm:$0xff] %vm3842, %v3840
      %3858 = vst.msk [vmem:[#allocation4 + $0x78] sm:$0xff] %vm3842, %v3841
      %3859 = vst.msk [vmem:[%s3071] sm:$0xff] %vm1406, %v3136
      %3860 = vst.msk [vmem:[%s3071 + $0x8] sm:$0xff] %vm1406, %v3137
      %3861 = vst.msk [vmem:[%s3071 + $0x10] sm:$0xff] %vm1406, %v3138
      %3862 = vst.msk [vmem:[%s3071 + $0x18] sm:$0xff] %vm1406, %v3139
      %3863 = vst.msk [vmem:[%s3071 + $0x20] sm:$0xff] %vm1406, %v3140
      %3864 = vst.msk [vmem:[%s3071 + $0x28] sm:$0xff] %vm1406, %v3141
      %3865 = vst.msk [vmem:[%s3071 + $0x30] sm:$0xff] %vm1406, %v3142
      %3866 = vst.msk [vmem:[%s3071 + $0x38] sm:$0xff] %vm1406, %v3143
      %3867 = vst.msk [vmem:[%s3071 + $0x40] sm:$0xff] %vm1406, %v3144
      %3868 = vst.msk [vmem:[%s3071 + $0x48] sm:$0xff] %vm1406, %v3145
      %3869 = vst.msk [vmem:[%s3071 + $0x50] sm:$0xff] %vm1406, %v3146
      %3870 = vst.msk [vmem:[%s3071 + $0x58] sm:$0xff] %vm1406, %v3147
      %3871 = vst.msk [vmem:[%s3071 + $0x60] sm:$0xff] %vm1406, %v3148
      %3872 = vst.msk [vmem:[%s3071 + $0x68] sm:$0xff] %vm1406, %v3149
      %3873 = vst.msk [vmem:[%s3071 + $0x70] sm:$0xff] %vm1406, %v3150
      %3874 = vst.msk [vmem:[%s3071 + $0x78] sm:$0xff] %vm1406, %v3151
      %s3875 = scalar_lea.vmem %s375, 3
      %v3876 = vld [vmem:[%s3875] ss:$4 sm:$0x3]
      %v3877 = vld [vmem:[%s381] sm:$0xff]
      %v3878 = vld [vmem:[%s381 + $0x8] sm:$0xff]
      %v3879 = vld [vmem:[%s381 + $0x10] sm:$0xff]
      %v3880 = vld [vmem:[%s381 + $0x18] sm:$0xff]
      %v3881 = vld [vmem:[%s381 + $0x20] sm:$0xff]
      %v3882 = vld [vmem:[%s381 + $0x28] sm:$0xff]
      %v3883 = vld [vmem:[%s381 + $0x30] sm:$0xff]
      %v3884 = vld [vmem:[%s381 + $0x38] sm:$0xff]
      %v3885 = vld [vmem:[%s381 + $0x40] sm:$0xff]
      %v3886 = vld [vmem:[%s381 + $0x48] sm:$0xff]
      %v3887 = vld [vmem:[%s381 + $0x50] sm:$0xff]
      %v3888 = vld [vmem:[%s381 + $0x58] sm:$0xff]
      %v3889 = vld [vmem:[%s381 + $0x60] sm:$0xff]
      %v3890 = vld [vmem:[%s381 + $0x68] sm:$0xff]
      %v3891 = vld [vmem:[%s381 + $0x70] sm:$0xff]
      %v3892 = vld [vmem:[%s381 + $0x78] sm:$0xff]
      %3894 = vset.pattern.permute.xlu0 3
      %3895 = vperm.xlu0 %3894, %v3877
      %v3896 = vpop.permute.xlu0 %3895
      %3899 = vset.pattern.permute.xlu0 3
      %3900 = vperm.xlu0 %3899, %v3878
      %v3901 = vpop.permute.xlu0 %3900
      %3904 = vset.pattern.permute.xlu0 3
      %3905 = vperm.xlu0 %3904, %v3879
      %v3906 = vpop.permute.xlu0 %3905
      %3909 = vset.pattern.permute.xlu0 3
      %3910 = vperm.xlu0 %3909, %v3880
      %v3911 = vpop.permute.xlu0 %3910
      %3914 = vset.pattern.permute.xlu0 3
      %3915 = vperm.xlu0 %3914, %v3881
      %v3916 = vpop.permute.xlu0 %3915
      %3919 = vset.pattern.permute.xlu0 3
      %3920 = vperm.xlu0 %3919, %v3882
      %v3921 = vpop.permute.xlu0 %3920
      %3924 = vset.pattern.permute.xlu0 3
      %3925 = vperm.xlu0 %3924, %v3883
      %v3926 = vpop.permute.xlu0 %3925
      %3929 = vset.pattern.permute.xlu0 3
      %3930 = vperm.xlu0 %3929, %v3884
      %v3931 = vpop.permute.xlu0 %3930
      %3934 = vset.pattern.permute.xlu0 3
      %3935 = vperm.xlu0 %3934, %v3885
      %v3936 = vpop.permute.xlu0 %3935
      %3939 = vset.pattern.permute.xlu0 3
      %3940 = vperm.xlu0 %3939, %v3886
      %v3941 = vpop.permute.xlu0 %3940
      %3944 = vset.pattern.permute.xlu0 3
      %3945 = vperm.xlu0 %3944, %v3887
      %v3946 = vpop.permute.xlu0 %3945
      %3949 = vset.pattern.permute.xlu0 3
      %3950 = vperm.xlu0 %3949, %v3888
      %v3951 = vpop.permute.xlu0 %3950
      %3954 = vset.pattern.permute.xlu0 3
      %3955 = vperm.xlu0 %3954, %v3889
      %v3956 = vpop.permute.xlu0 %3955
      %3959 = vset.pattern.permute.xlu0 3
      %3960 = vperm.xlu0 %3959, %v3890
      %v3961 = vpop.permute.xlu0 %3960
      %3964 = vset.pattern.permute.xlu0 3
      %3965 = vperm.xlu0 %3964, %v3891
      %v3966 = vpop.permute.xlu0 %3965
      %3969 = vset.pattern.permute.xlu0 3
      %3970 = vperm.xlu0 %3969, %v3892
      %v3971 = vpop.permute.xlu0 %3970
      %v3974 = vlaneseq
      %v3975 = vshrl.u32 %v3974, 7
      %v3976 = vsub.s32 0, %v3975
      %v3977 = vrot.slane %v3876, %v3976
      %v3978 = vlaneseq
      %v3979 = vshrl.u32 %v3978, 7
      %v3980 = vsub.s32 1, %v3979
      %v3981 = vrot.slane %v3876, %v3980
      %v3984 = vadd.f32 %v3896, %v3977
      %v3985 = vadd.f32 %v3896, %v3981
      %v3986 = vadd.f32 %v3901, %v3977
      %v3987 = vadd.f32 %v3901, %v3981
      %v3988 = vadd.f32 %v3906, %v3977
      %v3989 = vadd.f32 %v3906, %v3981
      %v3990 = vadd.f32 %v3911, %v3977
      %v3991 = vadd.f32 %v3911, %v3981
      %v3992 = vadd.f32 %v3916, %v3977
      %v3993 = vadd.f32 %v3916, %v3981
      %v3994 = vadd.f32 %v3921, %v3977
      %v3995 = vadd.f32 %v3921, %v3981
      %v3996 = vadd.f32 %v3926, %v3977
      %v3997 = vadd.f32 %v3926, %v3981
      %v3998 = vadd.f32 %v3931, %v3977
      %v3999 = vadd.f32 %v3931, %v3981
      %v4000 = vadd.f32 %v3936, %v3977
      %v4001 = vadd.f32 %v3936, %v3981
      %v4002 = vadd.f32 %v3941, %v3977
      %v4003 = vadd.f32 %v3941, %v3981
      %v4004 = vadd.f32 %v3946, %v3977
      %v4005 = vadd.f32 %v3946, %v3981
      %v4006 = vadd.f32 %v3951, %v3977
      %v4007 = vadd.f32 %v3951, %v3981
      %v4008 = vadd.f32 %v3956, %v3977
      %v4009 = vadd.f32 %v3956, %v3981
      %v4010 = vadd.f32 %v3961, %v3977
      %v4011 = vadd.f32 %v3961, %v3981
      %v4012 = vadd.f32 %v3966, %v3977
      %v4013 = vadd.f32 %v3966, %v3981
      %v4014 = vadd.f32 %v3971, %v3977
      %v4015 = vadd.f32 %v3971, %v3981
      %v4016 = vmul.f32 %v3984, 0.2
      %v4017 = vmul.f32 %v3985, 0.2
      %v4018 = vmul.f32 %v3986, 0.2
      %v4019 = vmul.f32 %v3987, 0.2
      %v4020 = vmul.f32 %v3988, 0.2
      %v4021 = vmul.f32 %v3989, 0.2
      %v4022 = vmul.f32 %v3990, 0.2
      %v4023 = vmul.f32 %v3991, 0.2
      %v4024 = vmul.f32 %v3992, 0.2
      %v4025 = vmul.f32 %v3993, 0.2
      %v4026 = vmul.f32 %v3994, 0.2
      %v4027 = vmul.f32 %v3995, 0.2
      %v4028 = vmul.f32 %v3996, 0.2
      %v4029 = vmul.f32 %v3997, 0.2
      %v4030 = vmul.f32 %v3998, 0.2
      %v4031 = vmul.f32 %v3999, 0.2
      %v4032 = vmul.f32 %v4000, 0.2
      %v4033 = vmul.f32 %v4001, 0.2
      %v4034 = vmul.f32 %v4002, 0.2
      %v4035 = vmul.f32 %v4003, 0.2
      %v4036 = vmul.f32 %v4004, 0.2
      %v4037 = vmul.f32 %v4005, 0.2
      %v4038 = vmul.f32 %v4006, 0.2
      %v4039 = vmul.f32 %v4007, 0.2
      %v4040 = vmul.f32 %v4008, 0.2
      %v4041 = vmul.f32 %v4009, 0.2
      %v4042 = vmul.f32 %v4010, 0.2
      %v4043 = vmul.f32 %v4011, 0.2
      %v4044 = vmul.f32 %v4012, 0.2
      %v4045 = vmul.f32 %v4013, 0.2
      %v4046 = vmul.f32 %v4014, 0.2
      %v4047 = vmul.f32 %v4015, 0.2
      %v4048 = vmax.f32 %v3984, %v4016
      %v4049 = vmax.f32 %v3985, %v4017
      %v4050 = vmax.f32 %v3986, %v4018
      %v4051 = vmax.f32 %v3987, %v4019
      %v4052 = vmax.f32 %v3988, %v4020
      %v4053 = vmax.f32 %v3989, %v4021
      %v4054 = vmax.f32 %v3990, %v4022
      %v4055 = vmax.f32 %v3991, %v4023
      %v4056 = vmax.f32 %v3992, %v4024
      %v4057 = vmax.f32 %v3993, %v4025
      %v4058 = vmax.f32 %v3994, %v4026
      %v4059 = vmax.f32 %v3995, %v4027
      %v4060 = vmax.f32 %v3996, %v4028
      %v4061 = vmax.f32 %v3997, %v4029
      %v4062 = vmax.f32 %v3998, %v4030
      %v4063 = vmax.f32 %v3999, %v4031
      %v4064 = vmax.f32 %v4000, %v4032
      %v4065 = vmax.f32 %v4001, %v4033
      %v4066 = vmax.f32 %v4002, %v4034
      %v4067 = vmax.f32 %v4003, %v4035
      %v4068 = vmax.f32 %v4004, %v4036
      %v4069 = vmax.f32 %v4005, %v4037
      %v4070 = vmax.f32 %v4006, %v4038
      %v4071 = vmax.f32 %v4007, %v4039
      %v4072 = vmax.f32 %v4008, %v4040
      %v4073 = vmax.f32 %v4009, %v4041
      %v4074 = vmax.f32 %v4010, %v4042
      %v4075 = vmax.f32 %v4011, %v4043
      %v4076 = vmax.f32 %v4012, %v4044
      %v4077 = vmax.f32 %v4013, %v4045
      %v4078 = vmax.f32 %v4014, %v4046
      %v4079 = vmax.f32 %v4015, %v4047
      %v4080 = vsel %vm942, %v4048, -1e+30
      %v4081 = vsel %vm943, %v4049, -1e+30
      %v4082 = vsel %vm944, %v4050, -1e+30
      %v4083 = vsel %vm945, %v4051, -1e+30
      %v4084 = vsel %vm946, %v4052, -1e+30
      %v4085 = vsel %vm947, %v4053, -1e+30
      %v4086 = vsel %vm948, %v4054, -1e+30
      %v4087 = vsel %vm949, %v4055, -1e+30
      %v4088 = vsel %vm950, %v4056, -1e+30
      %v4089 = vsel %vm951, %v4057, -1e+30
      %v4090 = vsel %vm952, %v4058, -1e+30
      %v4091 = vsel %vm953, %v4059, -1e+30
      %v4092 = vsel %vm954, %v4060, -1e+30
      %v4093 = vsel %vm955, %v4061, -1e+30
      %v4094 = vsel %vm956, %v4062, -1e+30
      %v4095 = vsel %vm957, %v4063, -1e+30
      %v4096 = vsel %vm958, %v4064, -1e+30
      %v4097 = vsel %vm959, %v4065, -1e+30
      %v4098 = vsel %vm960, %v4066, -1e+30
      %v4099 = vsel %vm961, %v4067, -1e+30
      %v4100 = vsel %vm962, %v4068, -1e+30
      %v4101 = vsel %vm963, %v4069, -1e+30
      %v4102 = vsel %vm964, %v4070, -1e+30
      %v4103 = vsel %vm965, %v4071, -1e+30
      %v4104 = vsel %vm966, %v4072, -1e+30
      %v4105 = vsel %vm967, %v4073, -1e+30
      %v4106 = vsel %vm968, %v4074, -1e+30
      %v4107 = vsel %vm969, %v4075, -1e+30
      %v4108 = vsel %vm970, %v4076, -1e+30
      %v4109 = vsel %vm971, %v4077, -1e+30
      %v4110 = vsel %vm972, %v4078, -1e+30
      %v4111 = vsel %vm973, %v4079, -1e+30
      %s4112 = scalar_lea.vmem [#allocation2], 384
      %v4113 = vld [vmem:[%s4112] sm:$0xff]
      %v4114 = vld [vmem:[%s4112 + $0x8] sm:$0xff]
      %v4115 = vld [vmem:[%s4112 + $0x10] sm:$0xff]
      %v4116 = vld [vmem:[%s4112 + $0x18] sm:$0xff]
      %v4117 = vld [vmem:[%s4112 + $0x20] sm:$0xff]
      %v4118 = vld [vmem:[%s4112 + $0x28] sm:$0xff]
      %v4119 = vld [vmem:[%s4112 + $0x30] sm:$0xff]
      %v4120 = vld [vmem:[%s4112 + $0x38] sm:$0xff]
      %v4121 = vld [vmem:[%s4112 + $0x40] sm:$0xff]
      %v4122 = vld [vmem:[%s4112 + $0x48] sm:$0xff]
      %v4123 = vld [vmem:[%s4112 + $0x50] sm:$0xff]
      %v4124 = vld [vmem:[%s4112 + $0x58] sm:$0xff]
      %v4125 = vld [vmem:[%s4112 + $0x60] sm:$0xff]
      %v4126 = vld [vmem:[%s4112 + $0x68] sm:$0xff]
      %v4127 = vld [vmem:[%s4112 + $0x70] sm:$0xff]
      %v4128 = vld [vmem:[%s4112 + $0x78] sm:$0xff]
      %v4129 = vmax.f32 %v4080, %v4081
      %4130 = vmax.xlane.f32.xlu0 %v4129
      %v4131 = vpop.xlane.xlu0 %4130
      %v4132 = vmax.f32 %v4082, %v4083
      %4133 = vmax.xlane.f32.xlu0 %v4132
      %v4134 = vpop.xlane.xlu0 %4133
      %v4135 = vmax.f32 %v4084, %v4085
      %4136 = vmax.xlane.f32.xlu0 %v4135
      %v4137 = vpop.xlane.xlu0 %4136
      %v4138 = vmax.f32 %v4086, %v4087
      %4139 = vmax.xlane.f32.xlu0 %v4138
      %v4140 = vpop.xlane.xlu0 %4139
      %v4141 = vmax.f32 %v4088, %v4089
      %4142 = vmax.xlane.f32.xlu0 %v4141
      %v4143 = vpop.xlane.xlu0 %4142
      %v4144 = vmax.f32 %v4090, %v4091
      %4145 = vmax.xlane.f32.xlu0 %v4144
      %v4146 = vpop.xlane.xlu0 %4145
      %v4147 = vmax.f32 %v4092, %v4093
      %4148 = vmax.xlane.f32.xlu0 %v4147
      %v4149 = vpop.xlane.xlu0 %4148
      %v4150 = vmax.f32 %v4094, %v4095
      %4151 = vmax.xlane.f32.xlu0 %v4150
      %v4152 = vpop.xlane.xlu0 %4151
      %v4153 = vmax.f32 %v4096, %v4097
      %4154 = vmax.xlane.f32.xlu0 %v4153
      %v4155 = vpop.xlane.xlu0 %4154
      %v4156 = vmax.f32 %v4098, %v4099
      %4157 = vmax.xlane.f32.xlu0 %v4156
      %v4158 = vpop.xlane.xlu0 %4157
      %v4159 = vmax.f32 %v4100, %v4101
      %4160 = vmax.xlane.f32.xlu0 %v4159
      %v4161 = vpop.xlane.xlu0 %4160
      %v4162 = vmax.f32 %v4102, %v4103
      %4163 = vmax.xlane.f32.xlu0 %v4162
      %v4164 = vpop.xlane.xlu0 %4163
      %v4165 = vmax.f32 %v4104, %v4105
      %4166 = vmax.xlane.f32.xlu0 %v4165
      %v4167 = vpop.xlane.xlu0 %4166
      %v4168 = vmax.f32 %v4106, %v4107
      %4169 = vmax.xlane.f32.xlu0 %v4168
      %v4170 = vpop.xlane.xlu0 %4169
      %v4171 = vmax.f32 %v4108, %v4109
      %4172 = vmax.xlane.f32.xlu0 %v4171
      %v4173 = vpop.xlane.xlu0 %4172
      %v4174 = vmax.f32 %v4110, %v4111
      %4175 = vmax.xlane.f32.xlu0 %v4174
      %v4176 = vpop.xlane.xlu0 %4175
      %v4177 = vmax.f32 %v4113, %v4131
      %v4178 = vmax.f32 %v4114, %v4134
      %v4179 = vmax.f32 %v4115, %v4137
      %v4180 = vmax.f32 %v4116, %v4140
      %v4181 = vmax.f32 %v4117, %v4143
      %v4182 = vmax.f32 %v4118, %v4146
      %v4183 = vmax.f32 %v4119, %v4149
      %v4184 = vmax.f32 %v4120, %v4152
      %v4185 = vmax.f32 %v4121, %v4155
      %v4186 = vmax.f32 %v4122, %v4158
      %v4187 = vmax.f32 %v4123, %v4161
      %v4188 = vmax.f32 %v4124, %v4164
      %v4189 = vmax.f32 %v4125, %v4167
      %v4190 = vmax.f32 %v4126, %v4170
      %v4191 = vmax.f32 %v4127, %v4173
      %v4192 = vmax.f32 %v4128, %v4176
      %v4193 = vsub.f32 %v4113, %v4177
      %v4194 = vsub.f32 %v4114, %v4178
      %v4195 = vsub.f32 %v4115, %v4179
      %v4196 = vsub.f32 %v4116, %v4180
      %v4197 = vsub.f32 %v4117, %v4181
      %v4198 = vsub.f32 %v4118, %v4182
      %v4199 = vsub.f32 %v4119, %v4183
      %v4200 = vsub.f32 %v4120, %v4184
      %v4201 = vsub.f32 %v4121, %v4185
      %v4202 = vsub.f32 %v4122, %v4186
      %v4203 = vsub.f32 %v4123, %v4187
      %v4204 = vsub.f32 %v4124, %v4188
      %v4205 = vsub.f32 %v4125, %v4189
      %v4206 = vsub.f32 %v4126, %v4190
      %v4207 = vsub.f32 %v4127, %v4191
      %v4208 = vsub.f32 %v4128, %v4192
      %v4209 = vmul.f32 %v4193, 1.442695
      %v4210 = vpow.pop %v4209
      %v4211 = vmul.f32 %v4194, 1.442695
      %v4212 = vpow.pop %v4211
      %v4213 = vmul.f32 %v4195, 1.442695
      %v4214 = vpow.pop %v4213
      %v4215 = vmul.f32 %v4196, 1.442695
      %v4216 = vpow.pop %v4215
      %v4217 = vmul.f32 %v4197, 1.442695
      %v4218 = vpow.pop %v4217
      %v4219 = vmul.f32 %v4198, 1.442695
      %v4220 = vpow.pop %v4219
      %v4221 = vmul.f32 %v4199, 1.442695
      %v4222 = vpow.pop %v4221
      %v4223 = vmul.f32 %v4200, 1.442695
      %v4224 = vpow.pop %v4223
      %v4225 = vmul.f32 %v4201, 1.442695
      %v4226 = vpow.pop %v4225
      %v4227 = vmul.f32 %v4202, 1.442695
      %v4228 = vpow.pop %v4227
      %v4229 = vmul.f32 %v4203, 1.442695
      %v4230 = vpow.pop %v4229
      %v4231 = vmul.f32 %v4204, 1.442695
      %v4232 = vpow.pop %v4231
      %v4233 = vmul.f32 %v4205, 1.442695
      %v4234 = vpow.pop %v4233
      %v4235 = vmul.f32 %v4206, 1.442695
      %v4236 = vpow.pop %v4235
      %v4237 = vmul.f32 %v4207, 1.442695
      %v4238 = vpow.pop %v4237
      %v4239 = vmul.f32 %v4208, 1.442695
      %v4240 = vpow.pop %v4239
      %4242 = vset.pattern.permute.xlu0 0
      %4243 = vperm.xlu0 %4242, %v4177
      %v4244 = vpop.permute.xlu0 %4243
      %4247 = vset.pattern.permute.xlu0 0
      %4248 = vperm.xlu0 %4247, %v4178
      %v4249 = vpop.permute.xlu0 %4248
      %4252 = vset.pattern.permute.xlu0 0
      %4253 = vperm.xlu0 %4252, %v4179
      %v4254 = vpop.permute.xlu0 %4253
      %4257 = vset.pattern.permute.xlu0 0
      %4258 = vperm.xlu0 %4257, %v4180
      %v4259 = vpop.permute.xlu0 %4258
      %4262 = vset.pattern.permute.xlu0 0
      %4263 = vperm.xlu0 %4262, %v4181
      %v4264 = vpop.permute.xlu0 %4263
      %4267 = vset.pattern.permute.xlu0 0
      %4268 = vperm.xlu0 %4267, %v4182
      %v4269 = vpop.permute.xlu0 %4268
      %4272 = vset.pattern.permute.xlu0 0
      %4273 = vperm.xlu0 %4272, %v4183
      %v4274 = vpop.permute.xlu0 %4273
      %4277 = vset.pattern.permute.xlu0 0
      %4278 = vperm.xlu0 %4277, %v4184
      %v4279 = vpop.permute.xlu0 %4278
      %4282 = vset.pattern.permute.xlu0 0
      %4283 = vperm.xlu0 %4282, %v4185
      %v4284 = vpop.permute.xlu0 %4283
      %4287 = vset.pattern.permute.xlu0 0
      %4288 = vperm.xlu0 %4287, %v4186
      %v4289 = vpop.permute.xlu0 %4288
      %4292 = vset.pattern.permute.xlu0 0
      %4293 = vperm.xlu0 %4292, %v4187
      %v4294 = vpop.permute.xlu0 %4293
      %4297 = vset.pattern.permute.xlu0 0
      %4298 = vperm.xlu0 %4297, %v4188
      %v4299 = vpop.permute.xlu0 %4298
      %4302 = vset.pattern.permute.xlu0 0
      %4303 = vperm.xlu0 %4302, %v4189
      %v4304 = vpop.permute.xlu0 %4303
      %4307 = vset.pattern.permute.xlu0 0
      %4308 = vperm.xlu0 %4307, %v4190
      %v4309 = vpop.permute.xlu0 %4308
      %4312 = vset.pattern.permute.xlu0 0
      %4313 = vperm.xlu0 %4312, %v4191
      %v4314 = vpop.permute.xlu0 %4313
      %4317 = vset.pattern.permute.xlu0 0
      %4318 = vperm.xlu0 %4317, %v4192
      %v4319 = vpop.permute.xlu0 %4318
      %v4321 = vsub.f32 %v4080, %v4244
      %v4322 = vsub.f32 %v4081, %v4244
      %v4323 = vsub.f32 %v4082, %v4249
      %v4324 = vsub.f32 %v4083, %v4249
      %v4325 = vsub.f32 %v4084, %v4254
      %v4326 = vsub.f32 %v4085, %v4254
      %v4327 = vsub.f32 %v4086, %v4259
      %v4328 = vsub.f32 %v4087, %v4259
      %v4329 = vsub.f32 %v4088, %v4264
      %v4330 = vsub.f32 %v4089, %v4264
      %v4331 = vsub.f32 %v4090, %v4269
      %v4332 = vsub.f32 %v4091, %v4269
      %v4333 = vsub.f32 %v4092, %v4274
      %v4334 = vsub.f32 %v4093, %v4274
      %v4335 = vsub.f32 %v4094, %v4279
      %v4336 = vsub.f32 %v4095, %v4279
      %v4337 = vsub.f32 %v4096, %v4284
      %v4338 = vsub.f32 %v4097, %v4284
      %v4339 = vsub.f32 %v4098, %v4289
      %v4340 = vsub.f32 %v4099, %v4289
      %v4341 = vsub.f32 %v4100, %v4294
      %v4342 = vsub.f32 %v4101, %v4294
      %v4343 = vsub.f32 %v4102, %v4299
      %v4344 = vsub.f32 %v4103, %v4299
      %v4345 = vsub.f32 %v4104, %v4304
      %v4346 = vsub.f32 %v4105, %v4304
      %v4347 = vsub.f32 %v4106, %v4309
      %v4348 = vsub.f32 %v4107, %v4309
      %v4349 = vsub.f32 %v4108, %v4314
      %v4350 = vsub.f32 %v4109, %v4314
      %v4351 = vsub.f32 %v4110, %v4319
      %v4352 = vsub.f32 %v4111, %v4319
      %v4353 = vmul.f32 %v4321, 1.442695
      %v4354 = vpow.pop %v4353
      %v4355 = vmul.f32 %v4322, 1.442695
      %v4356 = vpow.pop %v4355
      %v4357 = vmul.f32 %v4323, 1.442695
      %v4358 = vpow.pop %v4357
      %v4359 = vmul.f32 %v4324, 1.442695
      %v4360 = vpow.pop %v4359
      %v4361 = vmul.f32 %v4325, 1.442695
      %v4362 = vpow.pop %v4361
      %v4363 = vmul.f32 %v4326, 1.442695
      %v4364 = vpow.pop %v4363
      %v4365 = vmul.f32 %v4327, 1.442695
      %v4366 = vpow.pop %v4365
      %v4367 = vmul.f32 %v4328, 1.442695
      %v4368 = vpow.pop %v4367
      %v4369 = vmul.f32 %v4329, 1.442695
      %v4370 = vpow.pop %v4369
      %v4371 = vmul.f32 %v4330, 1.442695
      %v4372 = vpow.pop %v4371
      %v4373 = vmul.f32 %v4331, 1.442695
      %v4374 = vpow.pop %v4373
      %v4375 = vmul.f32 %v4332, 1.442695
      %v4376 = vpow.pop %v4375
      %v4377 = vmul.f32 %v4333, 1.442695
      %v4378 = vpow.pop %v4377
      %v4379 = vmul.f32 %v4334, 1.442695
      %v4380 = vpow.pop %v4379
      %v4381 = vmul.f32 %v4335, 1.442695
      %v4382 = vpow.pop %v4381
      %v4383 = vmul.f32 %v4336, 1.442695
      %v4384 = vpow.pop %v4383
      %v4385 = vmul.f32 %v4337, 1.442695
      %v4386 = vpow.pop %v4385
      %v4387 = vmul.f32 %v4338, 1.442695
      %v4388 = vpow.pop %v4387
      %v4389 = vmul.f32 %v4339, 1.442695
      %v4390 = vpow.pop %v4389
      %v4391 = vmul.f32 %v4340, 1.442695
      %v4392 = vpow.pop %v4391
      %v4393 = vmul.f32 %v4341, 1.442695
      %v4394 = vpow.pop %v4393
      %v4395 = vmul.f32 %v4342, 1.442695
      %v4396 = vpow.pop %v4395
      %v4397 = vmul.f32 %v4343, 1.442695
      %v4398 = vpow.pop %v4397
      %v4399 = vmul.f32 %v4344, 1.442695
      %v4400 = vpow.pop %v4399
      %v4401 = vmul.f32 %v4345, 1.442695
      %v4402 = vpow.pop %v4401
      %v4403 = vmul.f32 %v4346, 1.442695
      %v4404 = vpow.pop %v4403
      %v4405 = vmul.f32 %v4347, 1.442695
      %v4406 = vpow.pop %v4405
      %v4407 = vmul.f32 %v4348, 1.442695
      %v4408 = vpow.pop %v4407
      %v4409 = vmul.f32 %v4349, 1.442695
      %v4410 = vpow.pop %v4409
      %v4411 = vmul.f32 %v4350, 1.442695
      %v4412 = vpow.pop %v4411
      %v4413 = vmul.f32 %v4351, 1.442695
      %v4414 = vpow.pop %v4413
      %v4415 = vmul.f32 %v4352, 1.442695
      %v4416 = vpow.pop %v4415
      %s4417 = scalar_lea.vmem [#allocation3], 384
      %v4418 = vld [vmem:[%s4417] sm:$0xff]
      %v4419 = vld [vmem:[%s4417 + $0x8] sm:$0xff]
      %v4420 = vld [vmem:[%s4417 + $0x10] sm:$0xff]
      %v4421 = vld [vmem:[%s4417 + $0x18] sm:$0xff]
      %v4422 = vld [vmem:[%s4417 + $0x20] sm:$0xff]
      %v4423 = vld [vmem:[%s4417 + $0x28] sm:$0xff]
      %v4424 = vld [vmem:[%s4417 + $0x30] sm:$0xff]
      %v4425 = vld [vmem:[%s4417 + $0x38] sm:$0xff]
      %v4426 = vld [vmem:[%s4417 + $0x40] sm:$0xff]
      %v4427 = vld [vmem:[%s4417 + $0x48] sm:$0xff]
      %v4428 = vld [vmem:[%s4417 + $0x50] sm:$0xff]
      %v4429 = vld [vmem:[%s4417 + $0x58] sm:$0xff]
      %v4430 = vld [vmem:[%s4417 + $0x60] sm:$0xff]
      %v4431 = vld [vmem:[%s4417 + $0x68] sm:$0xff]
      %v4432 = vld [vmem:[%s4417 + $0x70] sm:$0xff]
      %v4433 = vld [vmem:[%s4417 + $0x78] sm:$0xff]
      %v4434 = vmul.f32 %v4210, %v4418
      %v4435 = vmul.f32 %v4212, %v4419
      %v4436 = vmul.f32 %v4214, %v4420
      %v4437 = vmul.f32 %v4216, %v4421
      %v4438 = vmul.f32 %v4218, %v4422
      %v4439 = vmul.f32 %v4220, %v4423
      %v4440 = vmul.f32 %v4222, %v4424
      %v4441 = vmul.f32 %v4224, %v4425
      %v4442 = vmul.f32 %v4226, %v4426
      %v4443 = vmul.f32 %v4228, %v4427
      %v4444 = vmul.f32 %v4230, %v4428
      %v4445 = vmul.f32 %v4232, %v4429
      %v4446 = vmul.f32 %v4234, %v4430
      %v4447 = vmul.f32 %v4236, %v4431
      %v4448 = vmul.f32 %v4238, %v4432
      %v4449 = vmul.f32 %v4240, %v4433
      %v4450 = vadd.f32 %v4354, %v4356
      %4451 = vadd.xlane.f32.xlu0 %v4450
      %v4452 = vpop.xlane.xlu0 %4451
      %v4453 = vadd.f32 %v4358, %v4360
      %4454 = vadd.xlane.f32.xlu0 %v4453
      %v4455 = vpop.xlane.xlu0 %4454
      %v4456 = vadd.f32 %v4362, %v4364
      %4457 = vadd.xlane.f32.xlu0 %v4456
      %v4458 = vpop.xlane.xlu0 %4457
      %v4459 = vadd.f32 %v4366, %v4368
      %4460 = vadd.xlane.f32.xlu0 %v4459
      %v4461 = vpop.xlane.xlu0 %4460
      %v4462 = vadd.f32 %v4370, %v4372
      %4463 = vadd.xlane.f32.xlu0 %v4462
      %v4464 = vpop.xlane.xlu0 %4463
      %v4465 = vadd.f32 %v4374, %v4376
      %4466 = vadd.xlane.f32.xlu0 %v4465
      %v4467 = vpop.xlane.xlu0 %4466
      %v4468 = vadd.f32 %v4378, %v4380
      %4469 = vadd.xlane.f32.xlu0 %v4468
      %v4470 = vpop.xlane.xlu0 %4469
      %v4471 = vadd.f32 %v4382, %v4384
      %4472 = vadd.xlane.f32.xlu0 %v4471
      %v4473 = vpop.xlane.xlu0 %4472
      %v4474 = vadd.f32 %v4386, %v4388
      %4475 = vadd.xlane.f32.xlu0 %v4474
      %v4476 = vpop.xlane.xlu0 %4475
      %v4477 = vadd.f32 %v4390, %v4392
      %4478 = vadd.xlane.f32.xlu0 %v4477
      %v4479 = vpop.xlane.xlu0 %4478
      %v4480 = vadd.f32 %v4394, %v4396
      %4481 = vadd.xlane.f32.xlu0 %v4480
      %v4482 = vpop.xlane.xlu0 %4481
      %v4483 = vadd.f32 %v4398, %v4400
      %4484 = vadd.xlane.f32.xlu0 %v4483
      %v4485 = vpop.xlane.xlu0 %4484
      %v4486 = vadd.f32 %v4402, %v4404
      %4487 = vadd.xlane.f32.xlu0 %v4486
      %v4488 = vpop.xlane.xlu0 %4487
      %v4489 = vadd.f32 %v4406, %v4408
      %4490 = vadd.xlane.f32.xlu0 %v4489
      %v4491 = vpop.xlane.xlu0 %4490
      %v4492 = vadd.f32 %v4410, %v4412
      %4493 = vadd.xlane.f32.xlu0 %v4492
      %v4494 = vpop.xlane.xlu0 %4493
      %v4495 = vadd.f32 %v4414, %v4416
      %4496 = vadd.xlane.f32.xlu0 %v4495
      %v4497 = vpop.xlane.xlu0 %4496
      %v4498 = vadd.f32 %v4434, %v4452
      %v4499 = vadd.f32 %v4435, %v4455
      %v4500 = vadd.f32 %v4436, %v4458
      %v4501 = vadd.f32 %v4437, %v4461
      %v4502 = vadd.f32 %v4438, %v4464
      %v4503 = vadd.f32 %v4439, %v4467
      %v4504 = vadd.f32 %v4440, %v4470
      %v4505 = vadd.f32 %v4441, %v4473
      %v4506 = vadd.f32 %v4442, %v4476
      %v4507 = vadd.f32 %v4443, %v4479
      %v4508 = vadd.f32 %v4444, %v4482
      %v4509 = vadd.f32 %v4445, %v4485
      %v4510 = vadd.f32 %v4446, %v4488
      %v4511 = vadd.f32 %v4447, %v4491
      %v4512 = vadd.f32 %v4448, %v4494
      %v4513 = vadd.f32 %v4449, %v4497
      %4514 = vst.msk [vmem:[%s4417] sm:$0xff] %vm1406, %v4498
      %4515 = vst.msk [vmem:[%s4417 + $0x8] sm:$0xff] %vm1406, %v4499
      %4516 = vst.msk [vmem:[%s4417 + $0x10] sm:$0xff] %vm1406, %v4500
      %4517 = vst.msk [vmem:[%s4417 + $0x18] sm:$0xff] %vm1406, %v4501
      %4518 = vst.msk [vmem:[%s4417 + $0x20] sm:$0xff] %vm1406, %v4502
      %4519 = vst.msk [vmem:[%s4417 + $0x28] sm:$0xff] %vm1406, %v4503
      %4520 = vst.msk [vmem:[%s4417 + $0x30] sm:$0xff] %vm1406, %v4504
      %4521 = vst.msk [vmem:[%s4417 + $0x38] sm:$0xff] %vm1406, %v4505
      %4522 = vst.msk [vmem:[%s4417 + $0x40] sm:$0xff] %vm1406, %v4506
      %4523 = vst.msk [vmem:[%s4417 + $0x48] sm:$0xff] %vm1406, %v4507
      %4524 = vst.msk [vmem:[%s4417 + $0x50] sm:$0xff] %vm1406, %v4508
      %4525 = vst.msk [vmem:[%s4417 + $0x58] sm:$0xff] %vm1406, %v4509
      %4526 = vst.msk [vmem:[%s4417 + $0x60] sm:$0xff] %vm1406, %v4510
      %4527 = vst.msk [vmem:[%s4417 + $0x68] sm:$0xff] %vm1406, %v4511
      %4528 = vst.msk [vmem:[%s4417 + $0x70] sm:$0xff] %vm1406, %v4512
      %4529 = vst.msk [vmem:[%s4417 + $0x78] sm:$0xff] %vm1406, %v4513
      %v4530 = vld [vmem:[#allocation4] sm:$0xff]
      %v4531 = vld [vmem:[#allocation4 + $0x8] sm:$0xff]
      %v4532 = vld [vmem:[#allocation4 + $0x10] sm:$0xff]
      %v4533 = vld [vmem:[#allocation4 + $0x18] sm:$0xff]
      %v4534 = vld [vmem:[#allocation4 + $0x20] sm:$0xff]
      %v4535 = vld [vmem:[#allocation4 + $0x28] sm:$0xff]
      %v4536 = vld [vmem:[#allocation4 + $0x30] sm:$0xff]
      %v4537 = vld [vmem:[#allocation4 + $0x38] sm:$0xff]
      %v4538 = vld [vmem:[#allocation4 + $0x40] sm:$0xff]
      %v4539 = vld [vmem:[#allocation4 + $0x48] sm:$0xff]
      %v4540 = vld [vmem:[#allocation4 + $0x50] sm:$0xff]
      %v4541 = vld [vmem:[#allocation4 + $0x58] sm:$0xff]
      %v4542 = vld [vmem:[#allocation4 + $0x60] sm:$0xff]
      %v4543 = vld [vmem:[#allocation4 + $0x68] sm:$0xff]
      %v4544 = vld [vmem:[#allocation4 + $0x70] sm:$0xff]
      %v4545 = vld [vmem:[#allocation4 + $0x78] sm:$0xff]
      %4547 = vset.pattern.permute.xlu0 0
      %4548 = vperm.xlu0 %4547, %v4210
      %v4549 = vpop.permute.xlu0 %4548
      %4552 = vset.pattern.permute.xlu0 0
      %4553 = vperm.xlu0 %4552, %v4212
      %v4554 = vpop.permute.xlu0 %4553
      %4557 = vset.pattern.permute.xlu0 0
      %4558 = vperm.xlu0 %4557, %v4214
      %v4559 = vpop.permute.xlu0 %4558
      %4562 = vset.pattern.permute.xlu0 0
      %4563 = vperm.xlu0 %4562, %v4216
      %v4564 = vpop.permute.xlu0 %4563
      %4567 = vset.pattern.permute.xlu0 0
      %4568 = vperm.xlu0 %4567, %v4218
      %v4569 = vpop.permute.xlu0 %4568
      %4572 = vset.pattern.permute.xlu0 0
      %4573 = vperm.xlu0 %4572, %v4220
      %v4574 = vpop.permute.xlu0 %4573
      %4577 = vset.pattern.permute.xlu0 0
      %4578 = vperm.xlu0 %4577, %v4222
      %v4579 = vpop.permute.xlu0 %4578
      %4582 = vset.pattern.permute.xlu0 0
      %4583 = vperm.xlu0 %4582, %v4224
      %v4584 = vpop.permute.xlu0 %4583
      %4587 = vset.pattern.permute.xlu0 0
      %4588 = vperm.xlu0 %4587, %v4226
      %v4589 = vpop.permute.xlu0 %4588
      %4592 = vset.pattern.permute.xlu0 0
      %4593 = vperm.xlu0 %4592, %v4228
      %v4594 = vpop.permute.xlu0 %4593
      %4597 = vset.pattern.permute.xlu0 0
      %4598 = vperm.xlu0 %4597, %v4230
      %v4599 = vpop.permute.xlu0 %4598
      %4602 = vset.pattern.permute.xlu0 0
      %4603 = vperm.xlu0 %4602, %v4232
      %v4604 = vpop.permute.xlu0 %4603
      %4607 = vset.pattern.permute.xlu0 0
      %4608 = vperm.xlu0 %4607, %v4234
      %v4609 = vpop.permute.xlu0 %4608
      %4612 = vset.pattern.permute.xlu0 0
      %4613 = vperm.xlu0 %4612, %v4236
      %v4614 = vpop.permute.xlu0 %4613
      %4617 = vset.pattern.permute.xlu0 0
      %4618 = vperm.xlu0 %4617, %v4238
      %v4619 = vpop.permute.xlu0 %4618
      %4622 = vset.pattern.permute.xlu0 0
      %4623 = vperm.xlu0 %4622, %v4240
      %v4624 = vpop.permute.xlu0 %4623
      %v4626 = vmul.f32 %v4549, %v4530
      %v4627 = vmul.f32 %v4554, %v4531
      %v4628 = vmul.f32 %v4559, %v4532
      %v4629 = vmul.f32 %v4564, %v4533
      %v4630 = vmul.f32 %v4569, %v4534
      %v4631 = vmul.f32 %v4574, %v4535
      %v4632 = vmul.f32 %v4579, %v4536
      %v4633 = vmul.f32 %v4584, %v4537
      %v4634 = vmul.f32 %v4589, %v4538
      %v4635 = vmul.f32 %v4594, %v4539
      %v4636 = vmul.f32 %v4599, %v4540
      %v4637 = vmul.f32 %v4604, %v4541
      %v4638 = vmul.f32 %v4609, %v4542
      %v4639 = vmul.f32 %v4614, %v4543
      %v4640 = vmul.f32 %v4619, %v4544
      %v4641 = vmul.f32 %v4624, %v4545
      %v4642 = vpack.c.bf16 %v4358, %v4354
      %v4643 = vpack.c.bf16 %v4360, %v4356
      %v4644 = vpack.c.bf16 %v4366, %v4362
      %v4645 = vpack.c.bf16 %v4368, %v4364
      %v4646 = vpack.c.bf16 %v4374, %v4370
      %v4647 = vpack.c.bf16 %v4376, %v4372
      %v4648 = vpack.c.bf16 %v4382, %v4378
      %v4649 = vpack.c.bf16 %v4384, %v4380
      %v4650 = vpack.c.bf16 %v4390, %v4386
      %v4651 = vpack.c.bf16 %v4392, %v4388
      %v4652 = vpack.c.bf16 %v4398, %v4394
      %v4653 = vpack.c.bf16 %v4400, %v4396
      %v4654 = vpack.c.bf16 %v4406, %v4402
      %v4655 = vpack.c.bf16 %v4408, %v4404
      %v4656 = vpack.c.bf16 %v4414, %v4410
      %v4657 = vpack.c.bf16 %v4416, %v4412
      %4658 = vrot.lane.b32.xlu0 %v1615, 104
      %v4659 = vpop.permute.xlu0 %4658
      %4660 = vrot.lane.b32.xlu0 %v1616, 104
      %v4661 = vpop.permute.xlu0 %4660
      %4662 = vrot.lane.b32.xlu0 %v1617, 104
      %v4663 = vpop.permute.xlu0 %4662
      %4664 = vrot.lane.b32.xlu0 %v1618, 104
      %v4665 = vpop.permute.xlu0 %4664
      %4666 = vrot.lane.b32.xlu0 %v1619, 104
      %v4667 = vpop.permute.xlu0 %4666
      %4668 = vrot.lane.b32.xlu0 %v1620, 104
      %v4669 = vpop.permute.xlu0 %4668
      %4670 = vrot.lane.b32.xlu0 %v1621, 104
      %v4671 = vpop.permute.xlu0 %4670
      %4672 = vrot.lane.b32.xlu0 %v1622, 104
      %v4673 = vpop.permute.xlu0 %4672
      %4674 = vrot.lane.b32.xlu0 %v1623, 104
      %v4675 = vpop.permute.xlu0 %4674
      %4676 = vrot.lane.b32.xlu0 %v1624, 104
      %v4677 = vpop.permute.xlu0 %4676
      %4678 = vrot.lane.b32.xlu0 %v1625, 104
      %v4679 = vpop.permute.xlu0 %4678
      %4680 = vrot.lane.b32.xlu0 %v1626, 104
      %v4681 = vpop.permute.xlu0 %4680
      %4682 = vrot.lane.b32.xlu0 %v1627, 104
      %v4683 = vpop.permute.xlu0 %4682
      %4684 = vrot.lane.b32.xlu0 %v1628, 104
      %v4685 = vpop.permute.xlu0 %4684
      %4686 = vrot.lane.b32.xlu0 %v1629, 104
      %v4687 = vpop.permute.xlu0 %4686
      %4688 = vrot.lane.b32.xlu0 %v1630, 104
      %v4689 = vpop.permute.xlu0 %4688
      %4706 = vmatprep.subr.bf16.mxu0 0
      %4707 = vmatpush1.bf16.msra.mxu0 %v4659
      %4708 = vmatprep.subr.bf16.mxu0 0
      %4709 = vmatpush1.bf16.msra.mxu0 %v4661
      %4710 = vmatprep.subr.bf16.mxu0 0
      %4711 = vmatpush1.bf16.msra.mxu0 %v4663
      %4712 = vmatprep.subr.bf16.mxu0 0
      %4713 = vmatpush1.bf16.msra.mxu0 %v4665
      %4714 = vmatprep.subr.bf16.mxu0 0
      %4715 = vmatpush1.bf16.msra.mxu0 %v4667
      %4716 = vmatprep.subr.bf16.mxu0 0
      %4717 = vmatpush1.bf16.msra.mxu0 %v4669
      %4718 = vmatprep.subr.bf16.mxu0 0
      %4719 = vmatpush1.bf16.msra.mxu0 %v4671
      %4720 = vmatprep.subr.bf16.mxu0 0
      %4721 = vmatpush1.bf16.msra.mxu0 %v4673
      %4722 = vmatprep.subr.bf16.mxu0 0
      %4723 = vmatpush1.bf16.msra.mxu0 %v4675
      %4724 = vmatprep.subr.bf16.mxu0 0
      %4725 = vmatpush1.bf16.msra.mxu0 %v4677
      %4726 = vmatprep.subr.bf16.mxu0 0
      %4727 = vmatpush1.bf16.msra.mxu0 %v4679
      %4728 = vmatprep.subr.bf16.mxu0 0
      %4729 = vmatpush1.bf16.msra.mxu0 %v4681
      %4730 = vmatprep.subr.bf16.mxu0 0
      %4731 = vmatpush1.bf16.msra.mxu0 %v4683
      %4732 = vmatprep.subr.bf16.mxu0 0
      %4733 = vmatpush1.bf16.msra.mxu0 %v4685
      %4734 = vmatprep.subr.bf16.mxu0 0
      %4735 = vmatpush1.bf16.msra.mxu0 %v4687
      %4736 = vmatprep.subr.bf16.mxu0 0
      %4737 = vmatpush1.bf16.msra.mxu0 %v4689
      %4738 = vmatprep.mubr.bf16.mxu0 %v4643
      %4739 = vmatmul.mubr.bf16.gmra.mrb[0].mxu0 %v4642
      %v4740 = vpop.f32.mrb[0].mxu0
      %v4741 = vadd.f32 0.0, %v4740
      %v4742 = vpop.f32.mrb[0].mxu0
      %v4743 = vpop.f32.mrb[0].mxu0
      %v4744 = vadd.f32 0.0, %v4743
      %v4745 = vpop.f32.mrb[0].mxu0
      %4746 = vmatprep.mubr.bf16.mxu0 %v4645
      %4747 = vmatmul.mubr.bf16.gmra.mrb[0].mxu0 %v4644
      %v4748 = vpop.f32.mrb[0].mxu0
      %v4749 = vadd.f32 0.0, %v4748
      %v4750 = vpop.f32.mrb[0].mxu0
      %v4751 = vpop.f32.mrb[0].mxu0
      %v4752 = vadd.f32 0.0, %v4751
      %v4753 = vpop.f32.mrb[0].mxu0
      %4754 = vmatprep.mubr.bf16.mxu0 %v4647
      %4755 = vmatmul.mubr.bf16.gmra.mrb[0].mxu0 %v4646
      %v4756 = vpop.f32.mrb[0].mxu0
      %v4757 = vadd.f32 0.0, %v4756
      %v4758 = vpop.f32.mrb[0].mxu0
      %v4759 = vpop.f32.mrb[0].mxu0
      %v4760 = vadd.f32 0.0, %v4759
      %v4761 = vpop.f32.mrb[0].mxu0
      %4762 = vmatprep.mubr.bf16.mxu0 %v4649
      %4763 = vmatmul.mubr.bf16.gmra.mrb[0].mxu0 %v4648
      %v4764 = vpop.f32.mrb[0].mxu0
      %v4765 = vadd.f32 0.0, %v4764
      %v4766 = vpop.f32.mrb[0].mxu0
      %v4767 = vpop.f32.mrb[0].mxu0
      %v4768 = vadd.f32 0.0, %v4767
      %v4769 = vpop.f32.mrb[0].mxu0
      %4770 = vmatprep.mubr.bf16.mxu0 %v4651
      %4771 = vmatmul.mubr.bf16.gmra.mrb[0].mxu0 %v4650
      %v4772 = vpop.f32.mrb[0].mxu0
      %v4773 = vadd.f32 0.0, %v4772
      %v4774 = vpop.f32.mrb[0].mxu0
      %v4775 = vpop.f32.mrb[0].mxu0
      %v4776 = vadd.f32 0.0, %v4775
      %v4777 = vpop.f32.mrb[0].mxu0
      %4778 = vmatprep.mubr.bf16.mxu0 %v4653
      %4779 = vmatmul.mubr.bf16.gmra.mrb[0].mxu0 %v4652
      %v4780 = vpop.f32.mrb[0].mxu0
      %v4781 = vadd.f32 0.0, %v4780
      %v4782 = vpop.f32.mrb[0].mxu0
      %v4783 = vpop.f32.mrb[0].mxu0
      %v4784 = vadd.f32 0.0, %v4783
      %v4785 = vpop.f32.mrb[0].mxu0
      %4786 = vmatprep.mubr.bf16.mxu0 %v4655
      %4787 = vmatmul.mubr.bf16.gmra.mrb[0].mxu0 %v4654
      %v4788 = vpop.f32.mrb[0].mxu0
      %v4789 = vadd.f32 0.0, %v4788
      %v4790 = vpop.f32.mrb[0].mxu0
      %v4791 = vpop.f32.mrb[0].mxu0
      %v4792 = vadd.f32 0.0, %v4791
      %v4793 = vpop.f32.mrb[0].mxu0
      %4794 = vmatprep.mubr.bf16.mxu0 %v4657
      %4795 = vmatmul.mubr.bf16.gmra.mrb[0].mxu0 %v4656
      %v4796 = vpop.f32.mrb[0].mxu0
      %v4797 = vadd.f32 0.0, %v4796
      %v4798 = vpop.f32.mrb[0].mxu0
      %v4799 = vpop.f32.mrb[0].mxu0
      %v4800 = vadd.f32 0.0, %v4799
      %v4801 = vpop.f32.mrb[0].mxu0
      %4802 = vdwg.mxu0
      %4819 = vrot.lane.b32.xlu0 %v4741, 24
      %v4820 = vpop.permute.xlu0 %4819
      %4821 = vrot.lane.b32.xlu0 %v4744, 24
      %v4822 = vpop.permute.xlu0 %4821
      %4823 = vrot.lane.b32.xlu0 %v4749, 24
      %v4824 = vpop.permute.xlu0 %4823
      %4825 = vrot.lane.b32.xlu0 %v4752, 24
      %v4826 = vpop.permute.xlu0 %4825
      %4827 = vrot.lane.b32.xlu0 %v4757, 24
      %v4828 = vpop.permute.xlu0 %4827
      %4829 = vrot.lane.b32.xlu0 %v4760, 24
      %v4830 = vpop.permute.xlu0 %4829
      %4831 = vrot.lane.b32.xlu0 %v4765, 24
      %v4832 = vpop.permute.xlu0 %4831
      %4833 = vrot.lane.b32.xlu0 %v4768, 24
      %v4834 = vpop.permute.xlu0 %4833
      %4835 = vrot.lane.b32.xlu0 %v4773, 24
      %v4836 = vpop.permute.xlu0 %4835
      %4837 = vrot.lane.b32.xlu0 %v4776, 24
      %v4838 = vpop.permute.xlu0 %4837
      %4839 = vrot.lane.b32.xlu0 %v4781, 24
      %v4840 = vpop.permute.xlu0 %4839
      %4841 = vrot.lane.b32.xlu0 %v4784, 24
      %v4842 = vpop.permute.xlu0 %4841
      %4843 = vrot.lane.b32.xlu0 %v4789, 24
      %v4844 = vpop.permute.xlu0 %4843
      %4845 = vrot.lane.b32.xlu0 %v4792, 24
      %v4846 = vpop.permute.xlu0 %4845
      %4847 = vrot.lane.b32.xlu0 %v4797, 24
      %v4848 = vpop.permute.xlu0 %4847
      %4849 = vrot.lane.b32.xlu0 %v4800, 24
      %v4850 = vpop.permute.xlu0 %4849
      %v4867 = vadd.f32 %v4626, %v4820
      %v4868 = vadd.f32 %v4627, %v4822
      %v4869 = vadd.f32 %v4628, %v4824
      %v4870 = vadd.f32 %v4629, %v4826
      %v4871 = vadd.f32 %v4630, %v4828
      %v4872 = vadd.f32 %v4631, %v4830
      %v4873 = vadd.f32 %v4632, %v4832
      %v4874 = vadd.f32 %v4633, %v4834
      %v4875 = vadd.f32 %v4634, %v4836
      %v4876 = vadd.f32 %v4635, %v4838
      %v4877 = vadd.f32 %v4636, %v4840
      %v4878 = vadd.f32 %v4637, %v4842
      %v4879 = vadd.f32 %v4638, %v4844
      %v4880 = vadd.f32 %v4639, %v4846
      %v4881 = vadd.f32 %v4640, %v4848
      %v4882 = vadd.f32 %v4641, %v4850
      %vm4883 = vcmask 261312
      %4884 = vst.msk [vmem:[#allocation4] sm:$0xff] %vm4883, %v4867
      %4885 = vst.msk [vmem:[#allocation4 + $0x8] sm:$0xff] %vm4883, %v4868
      %4886 = vst.msk [vmem:[#allocation4 + $0x10] sm:$0xff] %vm4883, %v4869
      %4887 = vst.msk [vmem:[#allocation4 + $0x18] sm:$0xff] %vm4883, %v4870
      %4888 = vst.msk [vmem:[#allocation4 + $0x20] sm:$0xff] %vm4883, %v4871
      %4889 = vst.msk [vmem:[#allocation4 + $0x28] sm:$0xff] %vm4883, %v4872
      %4890 = vst.msk [vmem:[#allocation4 + $0x30] sm:$0xff] %vm4883, %v4873
      %4891 = vst.msk [vmem:[#allocation4 + $0x38] sm:$0xff] %vm4883, %v4874
      %4892 = vst.msk [vmem:[#allocation4 + $0x40] sm:$0xff] %vm4883, %v4875
      %4893 = vst.msk [vmem:[#allocation4 + $0x48] sm:$0xff] %vm4883, %v4876
      %4894 = vst.msk [vmem:[#allocation4 + $0x50] sm:$0xff] %vm4883, %v4877
      %4895 = vst.msk [vmem:[#allocation4 + $0x58] sm:$0xff] %vm4883, %v4878
      %4896 = vst.msk [vmem:[#allocation4 + $0x60] sm:$0xff] %vm4883, %v4879
      %4897 = vst.msk [vmem:[#allocation4 + $0x68] sm:$0xff] %vm4883, %v4880
      %4898 = vst.msk [vmem:[#allocation4 + $0x70] sm:$0xff] %vm4883, %v4881
      %4899 = vst.msk [vmem:[#allocation4 + $0x78] sm:$0xff] %vm4883, %v4882
      %4900 = vst.msk [vmem:[%s4112] sm:$0xff] %vm1406, %v4177
      %4901 = vst.msk [vmem:[%s4112 + $0x8] sm:$0xff] %vm1406, %v4178
      %4902 = vst.msk [vmem:[%s4112 + $0x10] sm:$0xff] %vm1406, %v4179
      %4903 = vst.msk [vmem:[%s4112 + $0x18] sm:$0xff] %vm1406, %v4180
      %4904 = vst.msk [vmem:[%s4112 + $0x20] sm:$0xff] %vm1406, %v4181
      %4905 = vst.msk [vmem:[%s4112 + $0x28] sm:$0xff] %vm1406, %v4182
      %4906 = vst.msk [vmem:[%s4112 + $0x30] sm:$0xff] %vm1406, %v4183
      %4907 = vst.msk [vmem:[%s4112 + $0x38] sm:$0xff] %vm1406, %v4184
      %4908 = vst.msk [vmem:[%s4112 + $0x40] sm:$0xff] %vm1406, %v4185
      %4909 = vst.msk [vmem:[%s4112 + $0x48] sm:$0xff] %vm1406, %v4186
      %4910 = vst.msk [vmem:[%s4112 + $0x50] sm:$0xff] %vm1406, %v4187
      %4911 = vst.msk [vmem:[%s4112 + $0x58] sm:$0xff] %vm1406, %v4188
      %4912 = vst.msk [vmem:[%s4112 + $0x60] sm:$0xff] %vm1406, %v4189
      %4913 = vst.msk [vmem:[%s4112 + $0x68] sm:$0xff] %vm1406, %v4190
      %4914 = vst.msk [vmem:[%s4112 + $0x70] sm:$0xff] %vm1406, %v4191
      %4915 = vst.msk [vmem:[%s4112 + $0x78] sm:$0xff] %vm1406, %v4192
      // Predicated region
      $region53: #{tpu_custom_call.1} parent=47 // pred_check
        %p4916 = pneg %p404
      $region54: #{tpu_custom_call.1} parent=47 // pred_check_branch
        %4918 = sbr.rel (%p4916) target = $region56
      $region55: #{tpu_custom_call.1} parent=47 // pred_region
        %v4919 = vld [vmem:[#allocation3] sm:$0xff]
        %v4920 = vld [vmem:[#allocation3 + $0x8] sm:$0xff]
        %v4921 = vld [vmem:[#allocation3 + $0x10] sm:$0xff]
        %v4922 = vld [vmem:[#allocation3 + $0x18] sm:$0xff]
        %v4923 = vld [vmem:[#allocation3 + $0x20] sm:$0xff]
        %v4924 = vld [vmem:[#allocation3 + $0x28] sm:$0xff]
        %v4925 = vld [vmem:[#allocation3 + $0x30] sm:$0xff]
        %v4926 = vld [vmem:[#allocation3 + $0x38] sm:$0xff]
        %v4927 = vld [vmem:[#allocation3 + $0x40] sm:$0xff]
        %v4928 = vld [vmem:[#allocation3 + $0x48] sm:$0xff]
        %v4929 = vld [vmem:[#allocation3 + $0x50] sm:$0xff]
        %v4930 = vld [vmem:[#allocation3 + $0x58] sm:$0xff]
        %v4931 = vld [vmem:[#allocation3 + $0x60] sm:$0xff]
        %v4932 = vld [vmem:[#allocation3 + $0x68] sm:$0xff]
        %v4933 = vld [vmem:[#allocation3 + $0x70] sm:$0xff]
        %v4934 = vld [vmem:[#allocation3 + $0x78] sm:$0xff]
        %v4935 = vmax.f32 %v4919, 1e-30
        %v4936 = vmax.f32 %v4920, 1e-30
        %v4937 = vmax.f32 %v4921, 1e-30
        %v4938 = vmax.f32 %v4922, 1e-30
        %v4939 = vmax.f32 %v4923, 1e-30
        %v4940 = vmax.f32 %v4924, 1e-30
        %v4941 = vmax.f32 %v4925, 1e-30
        %v4942 = vmax.f32 %v4926, 1e-30
        %v4943 = vmax.f32 %v4927, 1e-30
        %v4944 = vmax.f32 %v4928, 1e-30
        %v4945 = vmax.f32 %v4929, 1e-30
        %v4946 = vmax.f32 %v4930, 1e-30
        %v4947 = vmax.f32 %v4931, 1e-30
        %v4948 = vmax.f32 %v4932, 1e-30
        %v4949 = vmax.f32 %v4933, 1e-30
        %v4950 = vmax.f32 %v4934, 1e-30
        %v4951 = vrcp.pop %v4935
        %v4952 = vrcp.pop %v4936
        %v4953 = vrcp.pop %v4937
        %v4954 = vrcp.pop %v4938
        %v4955 = vrcp.pop %v4939
        %v4956 = vrcp.pop %v4940
        %v4957 = vrcp.pop %v4941
        %v4958 = vrcp.pop %v4942
        %v4959 = vrcp.pop %v4943
        %v4960 = vrcp.pop %v4944
        %v4961 = vrcp.pop %v4945
        %v4962 = vrcp.pop %v4946
        %v4963 = vrcp.pop %v4947
        %v4964 = vrcp.pop %v4948
        %v4965 = vrcp.pop %v4949
        %v4966 = vrcp.pop %v4950
        %v4967 = vld [vmem:[#allocation4] sm:$0xff]
        %v4968 = vld [vmem:[#allocation4 + $0x8] sm:$0xff]
        %v4969 = vld [vmem:[#allocation4 + $0x10] sm:$0xff]
        %v4970 = vld [vmem:[#allocation4 + $0x18] sm:$0xff]
        %v4971 = vld [vmem:[#allocation4 + $0x20] sm:$0xff]
        %v4972 = vld [vmem:[#allocation4 + $0x28] sm:$0xff]
        %v4973 = vld [vmem:[#allocation4 + $0x30] sm:$0xff]
        %v4974 = vld [vmem:[#allocation4 + $0x38] sm:$0xff]
        %v4975 = vld [vmem:[#allocation4 + $0x40] sm:$0xff]
        %v4976 = vld [vmem:[#allocation4 + $0x48] sm:$0xff]
        %v4977 = vld [vmem:[#allocation4 + $0x50] sm:$0xff]
        %v4978 = vld [vmem:[#allocation4 + $0x58] sm:$0xff]
        %v4979 = vld [vmem:[#allocation4 + $0x60] sm:$0xff]
        %v4980 = vld [vmem:[#allocation4 + $0x68] sm:$0xff]
        %v4981 = vld [vmem:[#allocation4 + $0x70] sm:$0xff]
        %v4982 = vld [vmem:[#allocation4 + $0x78] sm:$0xff]
        %4984 = vset.pattern.permute.xlu0 0
        %4985 = vperm.xlu0 %4984, %v4951
        %v4986 = vpop.permute.xlu0 %4985
        %4989 = vset.pattern.permute.xlu0 0
        %4990 = vperm.xlu0 %4989, %v4952
        %v4991 = vpop.permute.xlu0 %4990
        %4994 = vset.pattern.permute.xlu0 0
        %4995 = vperm.xlu0 %4994, %v4953
        %v4996 = vpop.permute.xlu0 %4995
        %4999 = vset.pattern.permute.xlu0 0
        %5000 = vperm.xlu0 %4999, %v4954
        %v5001 = vpop.permute.xlu0 %5000
        %5004 = vset.pattern.permute.xlu0 0
        %5005 = vperm.xlu0 %5004, %v4955
        %v5006 = vpop.permute.xlu0 %5005
        %5009 = vset.pattern.permute.xlu0 0
        %5010 = vperm.xlu0 %5009, %v4956
        %v5011 = vpop.permute.xlu0 %5010
        %5014 = vset.pattern.permute.xlu0 0
        %5015 = vperm.xlu0 %5014, %v4957
        %v5016 = vpop.permute.xlu0 %5015
        %5019 = vset.pattern.permute.xlu0 0
        %5020 = vperm.xlu0 %5019, %v4958
        %v5021 = vpop.permute.xlu0 %5020
        %5024 = vset.pattern.permute.xlu0 0
        %5025 = vperm.xlu0 %5024, %v4959
        %v5026 = vpop.permute.xlu0 %5025
        %5029 = vset.pattern.permute.xlu0 0
        %5030 = vperm.xlu0 %5029, %v4960
        %v5031 = vpop.permute.xlu0 %5030
        %5034 = vset.pattern.permute.xlu0 0
        %5035 = vperm.xlu0 %5034, %v4961
        %v5036 = vpop.permute.xlu0 %5035
        %5039 = vset.pattern.permute.xlu0 0
        %5040 = vperm.xlu0 %5039, %v4962
        %v5041 = vpop.permute.xlu0 %5040
        %5044 = vset.pattern.permute.xlu0 0
        %5045 = vperm.xlu0 %5044, %v4963
        %v5046 = vpop.permute.xlu0 %5045
        %5049 = vset.pattern.permute.xlu0 0
        %5050 = vperm.xlu0 %5049, %v4964
        %v5051 = vpop.permute.xlu0 %5050
        %5054 = vset.pattern.permute.xlu0 0
        %5055 = vperm.xlu0 %5054, %v4965
        %v5056 = vpop.permute.xlu0 %5055
        %5059 = vset.pattern.permute.xlu0 0
        %5060 = vperm.xlu0 %5059, %v4966
        %v5061 = vpop.permute.xlu0 %5060
        %v5063 = vmul.f32 %v4967, %v4986
        %v5064 = vmul.f32 %v4968, %v4991
        %v5065 = vmul.f32 %v4969, %v4996
        %v5066 = vmul.f32 %v4970, %v5001
        %v5067 = vmul.f32 %v4971, %v5006
        %v5068 = vmul.f32 %v4972, %v5011
        %v5069 = vmul.f32 %v4973, %v5016
        %v5070 = vmul.f32 %v4974, %v5021
        %v5071 = vmul.f32 %v4975, %v5026
        %v5072 = vmul.f32 %v4976, %v5031
        %v5073 = vmul.f32 %v4977, %v5036
        %v5074 = vmul.f32 %v4978, %v5041
        %v5075 = vmul.f32 %v4979, %v5046
        %v5076 = vmul.f32 %v4980, %v5051
        %v5077 = vmul.f32 %v4981, %v5056
        %v5078 = vmul.f32 %v4982, %v5061
        %5079 = vst.msk [vmem:[#allocation4] sm:$0xff] %vm1760, %v5063
        %5080 = vst.msk [vmem:[#allocation4 + $0x8] sm:$0xff] %vm1760, %v5064
        %5081 = vst.msk [vmem:[#allocation4 + $0x10] sm:$0xff] %vm1760, %v5065
        %5082 = vst.msk [vmem:[#allocation4 + $0x18] sm:$0xff] %vm1760, %v5066
        %5083 = vst.msk [vmem:[#allocation4 + $0x20] sm:$0xff] %vm1760, %v5067
        %5084 = vst.msk [vmem:[#allocation4 + $0x28] sm:$0xff] %vm1760, %v5068
        %5085 = vst.msk [vmem:[#allocation4 + $0x30] sm:$0xff] %vm1760, %v5069
        %5086 = vst.msk [vmem:[#allocation4 + $0x38] sm:$0xff] %vm1760, %v5070
        %5087 = vst.msk [vmem:[#allocation4 + $0x40] sm:$0xff] %vm1760, %v5071
        %5088 = vst.msk [vmem:[#allocation4 + $0x48] sm:$0xff] %vm1760, %v5072
        %5089 = vst.msk [vmem:[#allocation4 + $0x50] sm:$0xff] %vm1760, %v5073
        %5090 = vst.msk [vmem:[#allocation4 + $0x58] sm:$0xff] %vm1760, %v5074
        %5091 = vst.msk [vmem:[#allocation4 + $0x60] sm:$0xff] %vm1760, %v5075
        %5092 = vst.msk [vmem:[#allocation4 + $0x68] sm:$0xff] %vm1760, %v5076
        %5093 = vst.msk [vmem:[#allocation4 + $0x70] sm:$0xff] %vm1760, %v5077
        %5094 = vst.msk [vmem:[#allocation4 + $0x78] sm:$0xff] %vm1760, %v5078
        %v5095 = vld [vmem:[%s2335] sm:$0xff]
        %v5096 = vld [vmem:[%s2335 + $0x8] sm:$0xff]
        %v5097 = vld [vmem:[%s2335 + $0x10] sm:$0xff]
        %v5098 = vld [vmem:[%s2335 + $0x18] sm:$0xff]
        %v5099 = vld [vmem:[%s2335 + $0x20] sm:$0xff]
        %v5100 = vld [vmem:[%s2335 + $0x28] sm:$0xff]
        %v5101 = vld [vmem:[%s2335 + $0x30] sm:$0xff]
        %v5102 = vld [vmem:[%s2335 + $0x38] sm:$0xff]
        %v5103 = vld [vmem:[%s2335 + $0x40] sm:$0xff]
        %v5104 = vld [vmem:[%s2335 + $0x48] sm:$0xff]
        %v5105 = vld [vmem:[%s2335 + $0x50] sm:$0xff]
        %v5106 = vld [vmem:[%s2335 + $0x58] sm:$0xff]
        %v5107 = vld [vmem:[%s2335 + $0x60] sm:$0xff]
        %v5108 = vld [vmem:[%s2335 + $0x68] sm:$0xff]
        %v5109 = vld [vmem:[%s2335 + $0x70] sm:$0xff]
        %v5110 = vld [vmem:[%s2335 + $0x78] sm:$0xff]
        %v5111 = vmax.f32 %v5095, 1e-30
        %v5112 = vmax.f32 %v5096, 1e-30
        %v5113 = vmax.f32 %v5097, 1e-30
        %v5114 = vmax.f32 %v5098, 1e-30
        %v5115 = vmax.f32 %v5099, 1e-30
        %v5116 = vmax.f32 %v5100, 1e-30
        %v5117 = vmax.f32 %v5101, 1e-30
        %v5118 = vmax.f32 %v5102, 1e-30
        %v5119 = vmax.f32 %v5103, 1e-30
        %v5120 = vmax.f32 %v5104, 1e-30
        %v5121 = vmax.f32 %v5105, 1e-30
        %v5122 = vmax.f32 %v5106, 1e-30
        %v5123 = vmax.f32 %v5107, 1e-30
        %v5124 = vmax.f32 %v5108, 1e-30
        %v5125 = vmax.f32 %v5109, 1e-30
        %v5126 = vmax.f32 %v5110, 1e-30
        %v5127 = vrcp.pop %v5111
        %v5128 = vrcp.pop %v5112
        %v5129 = vrcp.pop %v5113
        %v5130 = vrcp.pop %v5114
        %v5131 = vrcp.pop %v5115
        %v5132 = vrcp.pop %v5116
        %v5133 = vrcp.pop %v5117
        %v5134 = vrcp.pop %v5118
        %v5135 = vrcp.pop %v5119
        %v5136 = vrcp.pop %v5120
        %v5137 = vrcp.pop %v5121
        %v5138 = vrcp.pop %v5122
        %v5139 = vrcp.pop %v5123
        %v5140 = vrcp.pop %v5124
        %v5141 = vrcp.pop %v5125
        %v5142 = vrcp.pop %v5126
        %v5143 = vld [vmem:[#allocation4] sm:$0xff]
        %v5144 = vld [vmem:[#allocation4 + $0x8] sm:$0xff]
        %v5145 = vld [vmem:[#allocation4 + $0x10] sm:$0xff]
        %v5146 = vld [vmem:[#allocation4 + $0x18] sm:$0xff]
        %v5147 = vld [vmem:[#allocation4 + $0x20] sm:$0xff]
        %v5148 = vld [vmem:[#allocation4 + $0x28] sm:$0xff]
        %v5149 = vld [vmem:[#allocation4 + $0x30] sm:$0xff]
        %v5150 = vld [vmem:[#allocation4 + $0x38] sm:$0xff]
        %v5151 = vld [vmem:[#allocation4 + $0x40] sm:$0xff]
        %v5152 = vld [vmem:[#allocation4 + $0x48] sm:$0xff]
        %v5153 = vld [vmem:[#allocation4 + $0x50] sm:$0xff]
        %v5154 = vld [vmem:[#allocation4 + $0x58] sm:$0xff]
        %v5155 = vld [vmem:[#allocation4 + $0x60] sm:$0xff]
        %v5156 = vld [vmem:[#allocation4 + $0x68] sm:$0xff]
        %v5157 = vld [vmem:[#allocation4 + $0x70] sm:$0xff]
        %v5158 = vld [vmem:[#allocation4 + $0x78] sm:$0xff]
        %5160 = vset.pattern.permute.xlu0 0
        %5161 = vperm.xlu0 %5160, %v5127
        %v5162 = vpop.permute.xlu0 %5161
        %5165 = vset.pattern.permute.xlu0 0
        %5166 = vperm.xlu0 %5165, %v5128
        %v5167 = vpop.permute.xlu0 %5166
        %5170 = vset.pattern.permute.xlu0 0
        %5171 = vperm.xlu0 %5170, %v5129
        %v5172 = vpop.permute.xlu0 %5171
        %5175 = vset.pattern.permute.xlu0 0
        %5176 = vperm.xlu0 %5175, %v5130
        %v5177 = vpop.permute.xlu0 %5176
        %5180 = vset.pattern.permute.xlu0 0
        %5181 = vperm.xlu0 %5180, %v5131
        %v5182 = vpop.permute.xlu0 %5181
        %5185 = vset.pattern.permute.xlu0 0
        %5186 = vperm.xlu0 %5185, %v5132
        %v5187 = vpop.permute.xlu0 %5186
        %5190 = vset.pattern.permute.xlu0 0
        %5191 = vperm.xlu0 %5190, %v5133
        %v5192 = vpop.permute.xlu0 %5191
        %5195 = vset.pattern.permute.xlu0 0
        %5196 = vperm.xlu0 %5195, %v5134
        %v5197 = vpop.permute.xlu0 %5196
        %5200 = vset.pattern.permute.xlu0 0
        %5201 = vperm.xlu0 %5200, %v5135
        %v5202 = vpop.permute.xlu0 %5201
        %5205 = vset.pattern.permute.xlu0 0
        %5206 = vperm.xlu0 %5205, %v5136
        %v5207 = vpop.permute.xlu0 %5206
        %5210 = vset.pattern.permute.xlu0 0
        %5211 = vperm.xlu0 %5210, %v5137
        %v5212 = vpop.permute.xlu0 %5211
        %5215 = vset.pattern.permute.xlu0 0
        %5216 = vperm.xlu0 %5215, %v5138
        %v5217 = vpop.permute.xlu0 %5216
        %5220 = vset.pattern.permute.xlu0 0
        %5221 = vperm.xlu0 %5220, %v5139
        %v5222 = vpop.permute.xlu0 %5221
        %5225 = vset.pattern.permute.xlu0 0
        %5226 = vperm.xlu0 %5225, %v5140
        %v5227 = vpop.permute.xlu0 %5226
        %5230 = vset.pattern.permute.xlu0 0
        %5231 = vperm.xlu0 %5230, %v5141
        %v5232 = vpop.permute.xlu0 %5231
        %5235 = vset.pattern.permute.xlu0 0
        %5236 = vperm.xlu0 %5235, %v5142
        %v5237 = vpop.permute.xlu0 %5236
        %v5239 = vmul.f32 %v5143, %v5162
        %v5240 = vmul.f32 %v5144, %v5167
        %v5241 = vmul.f32 %v5145, %v5172
        %v5242 = vmul.f32 %v5146, %v5177
        %v5243 = vmul.f32 %v5147, %v5182
        %v5244 = vmul.f32 %v5148, %v5187
        %v5245 = vmul.f32 %v5149, %v5192
        %v5246 = vmul.f32 %v5150, %v5197
        %v5247 = vmul.f32 %v5151, %v5202
        %v5248 = vmul.f32 %v5152, %v5207
        %v5249 = vmul.f32 %v5153, %v5212
        %v5250 = vmul.f32 %v5154, %v5217
        %v5251 = vmul.f32 %v5155, %v5222
        %v5252 = vmul.f32 %v5156, %v5227
        %v5253 = vmul.f32 %v5157, %v5232
        %v5254 = vmul.f32 %v5158, %v5237
        %5255 = vst.msk [vmem:[#allocation4] sm:$0xff] %vm2801, %v5239
        %5256 = vst.msk [vmem:[#allocation4 + $0x8] sm:$0xff] %vm2801, %v5240
        %5257 = vst.msk [vmem:[#allocation4 + $0x10] sm:$0xff] %vm2801, %v5241
        %5258 = vst.msk [vmem:[#allocation4 + $0x18] sm:$0xff] %vm2801, %v5242
        %5259 = vst.msk [vmem:[#allocation4 + $0x20] sm:$0xff] %vm2801, %v5243
        %5260 = vst.msk [vmem:[#allocation4 + $0x28] sm:$0xff] %vm2801, %v5244
        %5261 = vst.msk [vmem:[#allocation4 + $0x30] sm:$0xff] %vm2801, %v5245
        %5262 = vst.msk [vmem:[#allocation4 + $0x38] sm:$0xff] %vm2801, %v5246
        %5263 = vst.msk [vmem:[#allocation4 + $0x40] sm:$0xff] %vm2801, %v5247
        %5264 = vst.msk [vmem:[#allocation4 + $0x48] sm:$0xff] %vm2801, %v5248
        %5265 = vst.msk [vmem:[#allocation4 + $0x50] sm:$0xff] %vm2801, %v5249
        %5266 = vst.msk [vmem:[#allocation4 + $0x58] sm:$0xff] %vm2801, %v5250
        %5267 = vst.msk [vmem:[#allocation4 + $0x60] sm:$0xff] %vm2801, %v5251
        %5268 = vst.msk [vmem:[#allocation4 + $0x68] sm:$0xff] %vm2801, %v5252
        %5269 = vst.msk [vmem:[#allocation4 + $0x70] sm:$0xff] %vm2801, %v5253
        %5270 = vst.msk [vmem:[#allocation4 + $0x78] sm:$0xff] %vm2801, %v5254
        %v5271 = vld [vmem:[%s3376] sm:$0xff]
        %v5272 = vld [vmem:[%s3376 + $0x8] sm:$0xff]
        %v5273 = vld [vmem:[%s3376 + $0x10] sm:$0xff]
        %v5274 = vld [vmem:[%s3376 + $0x18] sm:$0xff]
        %v5275 = vld [vmem:[%s3376 + $0x20] sm:$0xff]
        %v5276 = vld [vmem:[%s3376 + $0x28] sm:$0xff]
        %v5277 = vld [vmem:[%s3376 + $0x30] sm:$0xff]
        %v5278 = vld [vmem:[%s3376 + $0x38] sm:$0xff]
        %v5279 = vld [vmem:[%s3376 + $0x40] sm:$0xff]
        %v5280 = vld [vmem:[%s3376 + $0x48] sm:$0xff]
        %v5281 = vld [vmem:[%s3376 + $0x50] sm:$0xff]
        %v5282 = vld [vmem:[%s3376 + $0x58] sm:$0xff]
        %v5283 = vld [vmem:[%s3376 + $0x60] sm:$0xff]
        %v5284 = vld [vmem:[%s3376 + $0x68] sm:$0xff]
        %v5285 = vld [vmem:[%s3376 + $0x70] sm:$0xff]
        %v5286 = vld [vmem:[%s3376 + $0x78] sm:$0xff]
        %v5287 = vmax.f32 %v5271, 1e-30
        %v5288 = vmax.f32 %v5272, 1e-30
        %v5289 = vmax.f32 %v5273, 1e-30
        %v5290 = vmax.f32 %v5274, 1e-30
        %v5291 = vmax.f32 %v5275, 1e-30
        %v5292 = vmax.f32 %v5276, 1e-30
        %v5293 = vmax.f32 %v5277, 1e-30
        %v5294 = vmax.f32 %v5278, 1e-30
        %v5295 = vmax.f32 %v5279, 1e-30
        %v5296 = vmax.f32 %v5280, 1e-30
        %v5297 = vmax.f32 %v5281, 1e-30
        %v5298 = vmax.f32 %v5282, 1e-30
        %v5299 = vmax.f32 %v5283, 1e-30
        %v5300 = vmax.f32 %v5284, 1e-30
        %v5301 = vmax.f32 %v5285, 1e-30
        %v5302 = vmax.f32 %v5286, 1e-30
        %v5303 = vrcp.pop %v5287
        %v5304 = vrcp.pop %v5288
        %v5305 = vrcp.pop %v5289
        %v5306 = vrcp.pop %v5290
        %v5307 = vrcp.pop %v5291
        %v5308 = vrcp.pop %v5292
        %v5309 = vrcp.pop %v5293
        %v5310 = vrcp.pop %v5294
        %v5311 = vrcp.pop %v5295
        %v5312 = vrcp.pop %v5296
        %v5313 = vrcp.pop %v5297
        %v5314 = vrcp.pop %v5298
        %v5315 = vrcp.pop %v5299
        %v5316 = vrcp.pop %v5300
        %v5317 = vrcp.pop %v5301
        %v5318 = vrcp.pop %v5302
        %v5319 = vld [vmem:[#allocation4] sm:$0xff]
        %v5320 = vld [vmem:[#allocation4 + $0x8] sm:$0xff]
        %v5321 = vld [vmem:[#allocation4 + $0x10] sm:$0xff]
        %v5322 = vld [vmem:[#allocation4 + $0x18] sm:$0xff]
        %v5323 = vld [vmem:[#allocation4 + $0x20] sm:$0xff]
        %v5324 = vld [vmem:[#allocation4 + $0x28] sm:$0xff]
        %v5325 = vld [vmem:[#allocation4 + $0x30] sm:$0xff]
        %v5326 = vld [vmem:[#allocation4 + $0x38] sm:$0xff]
        %v5327 = vld [vmem:[#allocation4 + $0x40] sm:$0xff]
        %v5328 = vld [vmem:[#allocation4 + $0x48] sm:$0xff]
        %v5329 = vld [vmem:[#allocation4 + $0x50] sm:$0xff]
        %v5330 = vld [vmem:[#allocation4 + $0x58] sm:$0xff]
        %v5331 = vld [vmem:[#allocation4 + $0x60] sm:$0xff]
        %v5332 = vld [vmem:[#allocation4 + $0x68] sm:$0xff]
        %v5333 = vld [vmem:[#allocation4 + $0x70] sm:$0xff]
        %v5334 = vld [vmem:[#allocation4 + $0x78] sm:$0xff]
        %5336 = vset.pattern.permute.xlu0 0
        %5337 = vperm.xlu0 %5336, %v5303
        %v5338 = vpop.permute.xlu0 %5337
        %5341 = vset.pattern.permute.xlu0 0
        %5342 = vperm.xlu0 %5341, %v5304
        %v5343 = vpop.permute.xlu0 %5342
        %5346 = vset.pattern.permute.xlu0 0
        %5347 = vperm.xlu0 %5346, %v5305
        %v5348 = vpop.permute.xlu0 %5347
        %5351 = vset.pattern.permute.xlu0 0
        %5352 = vperm.xlu0 %5351, %v5306
        %v5353 = vpop.permute.xlu0 %5352
        %5356 = vset.pattern.permute.xlu0 0
        %5357 = vperm.xlu0 %5356, %v5307
        %v5358 = vpop.permute.xlu0 %5357
        %5361 = vset.pattern.permute.xlu0 0
        %5362 = vperm.xlu0 %5361, %v5308
        %v5363 = vpop.permute.xlu0 %5362
        %5366 = vset.pattern.permute.xlu0 0
        %5367 = vperm.xlu0 %5366, %v5309
        %v5368 = vpop.permute.xlu0 %5367
        %5371 = vset.pattern.permute.xlu0 0
        %5372 = vperm.xlu0 %5371, %v5310
        %v5373 = vpop.permute.xlu0 %5372
        %5376 = vset.pattern.permute.xlu0 0
        %5377 = vperm.xlu0 %5376, %v5311
        %v5378 = vpop.permute.xlu0 %5377
        %5381 = vset.pattern.permute.xlu0 0
        %5382 = vperm.xlu0 %5381, %v5312
        %v5383 = vpop.permute.xlu0 %5382
        %5386 = vset.pattern.permute.xlu0 0
        %5387 = vperm.xlu0 %5386, %v5313
        %v5388 = vpop.permute.xlu0 %5387
        %5391 = vset.pattern.permute.xlu0 0
        %5392 = vperm.xlu0 %5391, %v5314
        %v5393 = vpop.permute.xlu0 %5392
        %5396 = vset.pattern.permute.xlu0 0
        %5397 = vperm.xlu0 %5396, %v5315
        %v5398 = vpop.permute.xlu0 %5397
        %5401 = vset.pattern.permute.xlu0 0
        %5402 = vperm.xlu0 %5401, %v5316
        %v5403 = vpop.permute.xlu0 %5402
        %5406 = vset.pattern.permute.xlu0 0
        %5407 = vperm.xlu0 %5406, %v5317
        %v5408 = vpop.permute.xlu0 %5407
        %5411 = vset.pattern.permute.xlu0 0
        %5412 = vperm.xlu0 %5411, %v5318
        %v5413 = vpop.permute.xlu0 %5412
        %v5415 = vmul.f32 %v5319, %v5338
        %v5416 = vmul.f32 %v5320, %v5343
        %v5417 = vmul.f32 %v5321, %v5348
        %v5418 = vmul.f32 %v5322, %v5353
        %v5419 = vmul.f32 %v5323, %v5358
        %v5420 = vmul.f32 %v5324, %v5363
        %v5421 = vmul.f32 %v5325, %v5368
        %v5422 = vmul.f32 %v5326, %v5373
        %v5423 = vmul.f32 %v5327, %v5378
        %v5424 = vmul.f32 %v5328, %v5383
        %v5425 = vmul.f32 %v5329, %v5388
        %v5426 = vmul.f32 %v5330, %v5393
        %v5427 = vmul.f32 %v5331, %v5398
        %v5428 = vmul.f32 %v5332, %v5403
        %v5429 = vmul.f32 %v5333, %v5408
        %v5430 = vmul.f32 %v5334, %v5413
        %5431 = vst.msk [vmem:[#allocation4] sm:$0xff] %vm3842, %v5415
        %5432 = vst.msk [vmem:[#allocation4 + $0x8] sm:$0xff] %vm3842, %v5416
        %5433 = vst.msk [vmem:[#allocation4 + $0x10] sm:$0xff] %vm3842, %v5417
        %5434 = vst.msk [vmem:[#allocation4 + $0x18] sm:$0xff] %vm3842, %v5418
        %5435 = vst.msk [vmem:[#allocation4 + $0x20] sm:$0xff] %vm3842, %v5419
        %5436 = vst.msk [vmem:[#allocation4 + $0x28] sm:$0xff] %vm3842, %v5420
        %5437 = vst.msk [vmem:[#allocation4 + $0x30] sm:$0xff] %vm3842, %v5421
        %5438 = vst.msk [vmem:[#allocation4 + $0x38] sm:$0xff] %vm3842, %v5422
        %5439 = vst.msk [vmem:[#allocation4 + $0x40] sm:$0xff] %vm3842, %v5423
        %5440 = vst.msk [vmem:[#allocation4 + $0x48] sm:$0xff] %vm3842, %v5424
        %5441 = vst.msk [vmem:[#allocation4 + $0x50] sm:$0xff] %vm3842, %v5425
        %5442 = vst.msk [vmem:[#allocation4 + $0x58] sm:$0xff] %vm3842, %v5426
        %5443 = vst.msk [vmem:[#allocation4 + $0x60] sm:$0xff] %vm3842, %v5427
        %5444 = vst.msk [vmem:[#allocation4 + $0x68] sm:$0xff] %vm3842, %v5428
        %5445 = vst.msk [vmem:[#allocation4 + $0x70] sm:$0xff] %vm3842, %v5429
        %5446 = vst.msk [vmem:[#allocation4 + $0x78] sm:$0xff] %vm3842, %v5430
        %v5447 = vld [vmem:[%s4417] sm:$0xff]
        %v5448 = vld [vmem:[%s4417 + $0x8] sm:$0xff]
        %v5449 = vld [vmem:[%s4417 + $0x10] sm:$0xff]
        %v5450 = vld [vmem:[%s4417 + $0x18] sm:$0xff]
        %v5451 = vld [vmem:[%s4417 + $0x20] sm:$0xff]
        %v5452 = vld [vmem:[%s4417 + $0x28] sm:$0xff]
        %v5453 = vld [vmem:[%s4417 + $0x30] sm:$0xff]
        %v5454 = vld [vmem:[%s4417 + $0x38] sm:$0xff]
        %v5455 = vld [vmem:[%s4417 + $0x40] sm:$0xff]
        %v5456 = vld [vmem:[%s4417 + $0x48] sm:$0xff]
        %v5457 = vld [vmem:[%s4417 + $0x50] sm:$0xff]
        %v5458 = vld [vmem:[%s4417 + $0x58] sm:$0xff]
        %v5459 = vld [vmem:[%s4417 + $0x60] sm:$0xff]
        %v5460 = vld [vmem:[%s4417 + $0x68] sm:$0xff]
        %v5461 = vld [vmem:[%s4417 + $0x70] sm:$0xff]
        %v5462 = vld [vmem:[%s4417 + $0x78] sm:$0xff]
        %v5463 = vmax.f32 %v5447, 1e-30
        %v5464 = vmax.f32 %v5448, 1e-30
        %v5465 = vmax.f32 %v5449, 1e-30
        %v5466 = vmax.f32 %v5450, 1e-30
        %v5467 = vmax.f32 %v5451, 1e-30
        %v5468 = vmax.f32 %v5452, 1e-30
        %v5469 = vmax.f32 %v5453, 1e-30
        %v5470 = vmax.f32 %v5454, 1e-30
        %v5471 = vmax.f32 %v5455, 1e-30
        %v5472 = vmax.f32 %v5456, 1e-30
        %v5473 = vmax.f32 %v5457, 1e-30
        %v5474 = vmax.f32 %v5458, 1e-30
        %v5475 = vmax.f32 %v5459, 1e-30
        %v5476 = vmax.f32 %v5460, 1e-30
        %v5477 = vmax.f32 %v5461, 1e-30
        %v5478 = vmax.f32 %v5462, 1e-30
        %v5479 = vrcp.pop %v5463
        %v5480 = vrcp.pop %v5464
        %v5481 = vrcp.pop %v5465
        %v5482 = vrcp.pop %v5466
        %v5483 = vrcp.pop %v5467
        %v5484 = vrcp.pop %v5468
        %v5485 = vrcp.pop %v5469
        %v5486 = vrcp.pop %v5470
        %v5487 = vrcp.pop %v5471
        %v5488 = vrcp.pop %v5472
        %v5489 = vrcp.pop %v5473
        %v5490 = vrcp.pop %v5474
        %v5491 = vrcp.pop %v5475
        %v5492 = vrcp.pop %v5476
        %v5493 = vrcp.pop %v5477
        %v5494 = vrcp.pop %v5478
        %v5495 = vld [vmem:[#allocation4] sm:$0xff]
        %v5496 = vld [vmem:[#allocation4 + $0x8] sm:$0xff]
        %v5497 = vld [vmem:[#allocation4 + $0x10] sm:$0xff]
        %v5498 = vld [vmem:[#allocation4 + $0x18] sm:$0xff]
        %v5499 = vld [vmem:[#allocation4 + $0x20] sm:$0xff]
        %v5500 = vld [vmem:[#allocation4 + $0x28] sm:$0xff]
        %v5501 = vld [vmem:[#allocation4 + $0x30] sm:$0xff]
        %v5502 = vld [vmem:[#allocation4 + $0x38] sm:$0xff]
        %v5503 = vld [vmem:[#allocation4 + $0x40] sm:$0xff]
        %v5504 = vld [vmem:[#allocation4 + $0x48] sm:$0xff]
        %v5505 = vld [vmem:[#allocation4 + $0x50] sm:$0xff]
        %v5506 = vld [vmem:[#allocation4 + $0x58] sm:$0xff]
        %v5507 = vld [vmem:[#allocation4 + $0x60] sm:$0xff]
        %v5508 = vld [vmem:[#allocation4 + $0x68] sm:$0xff]
        %v5509 = vld [vmem:[#allocation4 + $0x70] sm:$0xff]
        %v5510 = vld [vmem:[#allocation4 + $0x78] sm:$0xff]
        %5512 = vset.pattern.permute.xlu0 0
        %5513 = vperm.xlu0 %5512, %v5479
        %v5514 = vpop.permute.xlu0 %5513
        %5517 = vset.pattern.permute.xlu0 0
        %5518 = vperm.xlu0 %5517, %v5480
        %v5519 = vpop.permute.xlu0 %5518
        %5522 = vset.pattern.permute.xlu0 0
        %5523 = vperm.xlu0 %5522, %v5481
        %v5524 = vpop.permute.xlu0 %5523
        %5527 = vset.pattern.permute.xlu0 0
        %5528 = vperm.xlu0 %5527, %v5482
        %v5529 = vpop.permute.xlu0 %5528
        %5532 = vset.pattern.permute.xlu0 0
        %5533 = vperm.xlu0 %5532, %v5483
        %v5534 = vpop.permute.xlu0 %5533
        %5537 = vset.pattern.permute.xlu0 0
        %5538 = vperm.xlu0 %5537, %v5484
        %v5539 = vpop.permute.xlu0 %5538
        %5542 = vset.pattern.permute.xlu0 0
        %5543 = vperm.xlu0 %5542, %v5485
        %v5544 = vpop.permute.xlu0 %5543
        %5547 = vset.pattern.permute.xlu0 0
        %5548 = vperm.xlu0 %5547, %v5486
        %v5549 = vpop.permute.xlu0 %5548
        %5552 = vset.pattern.permute.xlu0 0
        %5553 = vperm.xlu0 %5552, %v5487
        %v5554 = vpop.permute.xlu0 %5553
        %5557 = vset.pattern.permute.xlu0 0
        %5558 = vperm.xlu0 %5557, %v5488
        %v5559 = vpop.permute.xlu0 %5558
        %5562 = vset.pattern.permute.xlu0 0
        %5563 = vperm.xlu0 %5562, %v5489
        %v5564 = vpop.permute.xlu0 %5563
        %5567 = vset.pattern.permute.xlu0 0
        %5568 = vperm.xlu0 %5567, %v5490
        %v5569 = vpop.permute.xlu0 %5568
        %5572 = vset.pattern.permute.xlu0 0
        %5573 = vperm.xlu0 %5572, %v5491
        %v5574 = vpop.permute.xlu0 %5573
        %5577 = vset.pattern.permute.xlu0 0
        %5578 = vperm.xlu0 %5577, %v5492
        %v5579 = vpop.permute.xlu0 %5578
        %5582 = vset.pattern.permute.xlu0 0
        %5583 = vperm.xlu0 %5582, %v5493
        %v5584 = vpop.permute.xlu0 %5583
        %5587 = vset.pattern.permute.xlu0 0
        %5588 = vperm.xlu0 %5587, %v5494
        %v5589 = vpop.permute.xlu0 %5588
        %v5591 = vmul.f32 %v5495, %v5514
        %v5592 = vmul.f32 %v5496, %v5519
        %v5593 = vmul.f32 %v5497, %v5524
        %v5594 = vmul.f32 %v5498, %v5529
        %v5595 = vmul.f32 %v5499, %v5534
        %v5596 = vmul.f32 %v5500, %v5539
        %v5597 = vmul.f32 %v5501, %v5544
        %v5598 = vmul.f32 %v5502, %v5549
        %v5599 = vmul.f32 %v5503, %v5554
        %v5600 = vmul.f32 %v5504, %v5559
        %v5601 = vmul.f32 %v5505, %v5564
        %v5602 = vmul.f32 %v5506, %v5569
        %v5603 = vmul.f32 %v5507, %v5574
        %v5604 = vmul.f32 %v5508, %v5579
        %v5605 = vmul.f32 %v5509, %v5584
        %v5606 = vmul.f32 %v5510, %v5589
        %5607 = vst.msk [vmem:[#allocation4] sm:$0xff] %vm4883, %v5591
        %5608 = vst.msk [vmem:[#allocation4 + $0x8] sm:$0xff] %vm4883, %v5592
        %5609 = vst.msk [vmem:[#allocation4 + $0x10] sm:$0xff] %vm4883, %v5593
        %5610 = vst.msk [vmem:[#allocation4 + $0x18] sm:$0xff] %vm4883, %v5594
        %5611 = vst.msk [vmem:[#allocation4 + $0x20] sm:$0xff] %vm4883, %v5595
        %5612 = vst.msk [vmem:[#allocation4 + $0x28] sm:$0xff] %vm4883, %v5596
        %5613 = vst.msk [vmem:[#allocation4 + $0x30] sm:$0xff] %vm4883, %v5597
        %5614 = vst.msk [vmem:[#allocation4 + $0x38] sm:$0xff] %vm4883, %v5598
        %5615 = vst.msk [vmem:[#allocation4 + $0x40] sm:$0xff] %vm4883, %v5599
        %5616 = vst.msk [vmem:[#allocation4 + $0x48] sm:$0xff] %vm4883, %v5600
        %5617 = vst.msk [vmem:[#allocation4 + $0x50] sm:$0xff] %vm4883, %v5601
        %5618 = vst.msk [vmem:[#allocation4 + $0x58] sm:$0xff] %vm4883, %v5602
        %5619 = vst.msk [vmem:[#allocation4 + $0x60] sm:$0xff] %vm4883, %v5603
        %5620 = vst.msk [vmem:[#allocation4 + $0x68] sm:$0xff] %vm4883, %v5604
        %5621 = vst.msk [vmem:[#allocation4 + $0x70] sm:$0xff] %vm4883, %v5605
        %5622 = vst.msk [vmem:[#allocation4 + $0x78] sm:$0xff] %vm4883, %v5606
        %v5623 = vld [vmem:[#allocation4] sm:$0xff]
        %v5624 = vld [vmem:[#allocation4 + $0x8] sm:$0xff]
        %v5625 = vld [vmem:[#allocation4 + $0x10] sm:$0xff]
        %v5626 = vld [vmem:[#allocation4 + $0x18] sm:$0xff]
        %v5627 = vld [vmem:[#allocation4 + $0x20] sm:$0xff]
        %v5628 = vld [vmem:[#allocation4 + $0x28] sm:$0xff]
        %v5629 = vld [vmem:[#allocation4 + $0x30] sm:$0xff]
        %v5630 = vld [vmem:[#allocation4 + $0x38] sm:$0xff]
        %v5631 = vld [vmem:[#allocation4 + $0x40] sm:$0xff]
        %v5632 = vld [vmem:[#allocation4 + $0x48] sm:$0xff]
        %v5633 = vld [vmem:[#allocation4 + $0x50] sm:$0xff]
        %v5634 = vld [vmem:[#allocation4 + $0x58] sm:$0xff]
        %v5635 = vld [vmem:[#allocation4 + $0x60] sm:$0xff]
        %v5636 = vld [vmem:[#allocation4 + $0x68] sm:$0xff]
        %v5637 = vld [vmem:[#allocation4 + $0x70] sm:$0xff]
        %v5638 = vld [vmem:[#allocation4 + $0x78] sm:$0xff]
        %v5639 = vld [vmem:[%s363] sm:$0xff]
        %v5640 = vld [vmem:[%s363 + $0x8] sm:$0xff]
        %v5641 = vld [vmem:[%s363 + $0x10] sm:$0xff]
        %v5642 = vld [vmem:[%s363 + $0x18] sm:$0xff]
        %v5643 = vld [vmem:[%s363 + $0x20] sm:$0xff]
        %v5644 = vld [vmem:[%s363 + $0x28] sm:$0xff]
        %v5645 = vld [vmem:[%s363 + $0x30] sm:$0xff]
        %v5646 = vld [vmem:[%s363 + $0x38] sm:$0xff]
        %v5647 = vld [vmem:[%s363 + $0x40] sm:$0xff]
        %v5648 = vld [vmem:[%s363 + $0x48] sm:$0xff]
        %v5649 = vld [vmem:[%s363 + $0x50] sm:$0xff]
        %v5650 = vld [vmem:[%s363 + $0x58] sm:$0xff]
        %v5651 = vld [vmem:[%s363 + $0x60] sm:$0xff]
        %v5652 = vld [vmem:[%s363 + $0x68] sm:$0xff]
        %v5653 = vld [vmem:[%s363 + $0x70] sm:$0xff]
        %v5654 = vld [vmem:[%s363 + $0x78] sm:$0xff]
        %v5655 = vld [vmem:[%s5] sm:$0xff]
        %v5656 = vld [vmem:[%s5 + $0x8] sm:$0xff]
        %vm5657 = vcmask 130048
        %v5659 = vsel %vm5657, %v5639, 0
        %v5662 = vsel %vm5657, %v5640, 0
        %v5665 = vsel %vm5657, %v5641, 0
        %v5668 = vsel %vm5657, %v5642, 0
        %v5671 = vsel %vm5657, %v5643, 0
        %v5674 = vsel %vm5657, %v5644, 0
        %v5677 = vsel %vm5657, %v5645, 0
        %v5680 = vsel %vm5657, %v5646, 0
        %v5683 = vsel %vm5657, %v5647, 0
        %v5686 = vsel %vm5657, %v5648, 0
        %v5689 = vsel %vm5657, %v5649, 0
        %v5692 = vsel %vm5657, %v5650, 0
        %v5695 = vsel %vm5657, %v5651, 0
        %v5698 = vsel %vm5657, %v5652, 0
        %v5701 = vsel %vm5657, %v5653, 0
        %v5704 = vsel %vm5657, %v5654, 0
        %5706 = vmatprep.subr.mxu0 0.0
        %5707 = vmatpush1.msra.mxu0 %v5655
        %5708 = vmatprep.subr.mxu0 0.0
        %5709 = vmatpush1.msra.mxu0 %v5656
        %5710 = vmatprep.subr.mxu0 0.0
        %5711 = vmatpush1.msra.mxu0 0.0
        %5712 = vmatprep.subr.mxu0 0.0
        %5713 = vmatpush1.msra.mxu0 0.0
        %5714 = vmatprep.subr.mxu0 0.0
        %5715 = vmatpush1.msra.mxu0 0.0
        %5716 = vmatprep.subr.mxu0 0.0
        %5717 = vmatpush1.msra.mxu0 0.0
        %5718 = vmatprep.subr.mxu0 0.0
        %5719 = vmatpush1.msra.mxu0 0.0
        %5720 = vmatprep.subr.mxu0 0.0
        %5721 = vmatpush1.msra.mxu0 0.0
        %5722 = vmatprep.subr.mxu0 0.0
        %5723 = vmatpush1.msra.mxu0 0.0
        %5724 = vmatprep.subr.mxu0 0.0
        %5725 = vmatpush1.msra.mxu0 0.0
        %5726 = vmatprep.subr.mxu0 0.0
        %5727 = vmatpush1.msra.mxu0 0.0
        %5728 = vmatprep.subr.mxu0 0.0
        %5729 = vmatpush1.msra.mxu0 0.0
        %5730 = vmatprep.subr.mxu0 0.0
        %5731 = vmatpush1.msra.mxu0 0.0
        %5732 = vmatprep.subr.mxu0 0.0
        %5733 = vmatpush1.msra.mxu0 0.0
        %5734 = vmatprep.subr.mxu0 0.0
        %5735 = vmatpush1.msra.mxu0 0.0
        %5736 = vmatprep.subr.mxu0 0.0
        %5737 = vmatpush1.msra.mxu0 0.0
        %5738 = vmatprep.subr.mxu0 0.0
        %5739 = vmatpush1.msra.mxu0 0.0
        %5740 = vmatprep.subr.mxu0 0.0
        %5741 = vmatpush1.msra.mxu0 0.0
        %5742 = vmatprep.subr.mxu0 0.0
        %5743 = vmatpush1.msra.mxu0 0.0
        %5744 = vmatprep.subr.mxu0 0.0
        %5745 = vmatpush1.msra.mxu0 0.0
        %5746 = vmatprep.subr.mxu0 0.0
        %5747 = vmatpush1.msra.mxu0 0.0
        %5748 = vmatprep.subr.mxu0 0.0
        %5749 = vmatpush1.msra.mxu0 0.0
        %5750 = vmatprep.subr.mxu0 0.0
        %5751 = vmatpush1.msra.mxu0 0.0
        %5752 = vmatprep.subr.mxu0 0.0
        %5753 = vmatpush1.msra.mxu0 0.0
        %5754 = vmatprep.subr.mxu0 0.0
        %5755 = vmatpush1.msra.mxu0 0.0
        %5756 = vmatprep.subr.mxu0 0.0
        %5757 = vmatpush1.msra.mxu0 0.0
        %5758 = vmatprep.subr.mxu0 0.0
        %5759 = vmatpush1.msra.mxu0 0.0
        %5760 = vmatprep.subr.mxu0 0.0
        %5761 = vmatpush1.msra.mxu0 0.0
        %5762 = vmatprep.subr.mxu0 0.0
        %5763 = vmatpush1.msra.mxu0 0.0
        %5764 = vmatprep.subr.mxu0 0.0
        %5765 = vmatpush1.msra.mxu0 0.0
        %5766 = vmatprep.subr.mxu0 0.0
        %5767 = vmatpush1.msra.mxu0 0.0
        %5768 = vmatprep.subr.mxu0 0.0
        %5769 = vmatpush1.msra.mxu0 0.0
        %5770 = vmatprep.mubr.f32.mxu0 0.0
        %5771 = vmatmul.mubr.f32.gmra.mrb[0].mxu0 %v5659
        %v5772 = vpop.f32.mrb[0].mxu0
        %v5773 = vadd.f32 0.0, %v5772
        %v5774 = vpop.f32.mrb[0].mxu0
        %5775 = vmatprep.mubr.f32.mxu0 0.0
        %5776 = vmatmul.mubr.f32.gmra.mrb[0].mxu0 %v5662
        %v5777 = vpop.f32.mrb[0].mxu0
        %v5778 = vadd.f32 0.0, %v5777
        %v5779 = vpop.f32.mrb[0].mxu0
        %5780 = vmatprep.mubr.f32.mxu0 0.0
        %5781 = vmatmul.mubr.f32.gmra.mrb[0].mxu0 %v5665
        %v5782 = vpop.f32.mrb[0].mxu0
        %v5783 = vadd.f32 0.0, %v5782
        %v5784 = vpop.f32.mrb[0].mxu0
        %5785 = vmatprep.mubr.f32.mxu0 0.0
        %5786 = vmatmul.mubr.f32.gmra.mrb[0].mxu0 %v5668
        %v5787 = vpop.f32.mrb[0].mxu0
        %v5788 = vadd.f32 0.0, %v5787
        %v5789 = vpop.f32.mrb[0].mxu0
        %5790 = vmatprep.mubr.f32.mxu0 0.0
        %5791 = vmatmul.mubr.f32.gmra.mrb[0].mxu0 %v5671
        %v5792 = vpop.f32.mrb[0].mxu0
        %v5793 = vadd.f32 0.0, %v5792
        %v5794 = vpop.f32.mrb[0].mxu0
        %5795 = vmatprep.mubr.f32.mxu0 0.0
        %5796 = vmatmul.mubr.f32.gmra.mrb[0].mxu0 %v5674
        %v5797 = vpop.f32.mrb[0].mxu0
        %v5798 = vadd.f32 0.0, %v5797
        %v5799 = vpop.f32.mrb[0].mxu0
        %5800 = vmatprep.mubr.f32.mxu0 0.0
        %5801 = vmatmul.mubr.f32.gmra.mrb[0].mxu0 %v5677
        %v5802 = vpop.f32.mrb[0].mxu0
        %v5803 = vadd.f32 0.0, %v5802
        %v5804 = vpop.f32.mrb[0].mxu0
        %5805 = vmatprep.mubr.f32.mxu0 0.0
        %5806 = vmatmul.mubr.f32.gmra.mrb[0].mxu0 %v5680
        %v5807 = vpop.f32.mrb[0].mxu0
        %v5808 = vadd.f32 0.0, %v5807
        %v5809 = vpop.f32.mrb[0].mxu0
        %5810 = vmatprep.mubr.f32.mxu0 0.0
        %5811 = vmatmul.mubr.f32.gmra.mrb[0].mxu0 %v5683
        %v5812 = vpop.f32.mrb[0].mxu0
        %v5813 = vadd.f32 0.0, %v5812
        %v5814 = vpop.f32.mrb[0].mxu0
        %5815 = vmatprep.mubr.f32.mxu0 0.0
        %5816 = vmatmul.mubr.f32.gmra.mrb[0].mxu0 %v5686
        %v5817 = vpop.f32.mrb[0].mxu0
        %v5818 = vadd.f32 0.0, %v5817
        %v5819 = vpop.f32.mrb[0].mxu0
        %5820 = vmatprep.mubr.f32.mxu0 0.0
        %5821 = vmatmul.mubr.f32.gmra.mrb[0].mxu0 %v5689
        %v5822 = vpop.f32.mrb[0].mxu0
        %v5823 = vadd.f32 0.0, %v5822
        %v5824 = vpop.f32.mrb[0].mxu0
        %5825 = vmatprep.mubr.f32.mxu0 0.0
        %5826 = vmatmul.mubr.f32.gmra.mrb[0].mxu0 %v5692
        %v5827 = vpop.f32.mrb[0].mxu0
        %v5828 = vadd.f32 0.0, %v5827
        %v5829 = vpop.f32.mrb[0].mxu0
        %5830 = vmatprep.mubr.f32.mxu0 0.0
        %5831 = vmatmul.mubr.f32.gmra.mrb[0].mxu0 %v5695
        %v5832 = vpop.f32.mrb[0].mxu0
        %v5833 = vadd.f32 0.0, %v5832
        %v5834 = vpop.f32.mrb[0].mxu0
        %5835 = vmatprep.mubr.f32.mxu0 0.0
        %5836 = vmatmul.mubr.f32.gmra.mrb[0].mxu0 %v5698
        %v5837 = vpop.f32.mrb[0].mxu0
        %v5838 = vadd.f32 0.0, %v5837
        %v5839 = vpop.f32.mrb[0].mxu0
        %5840 = vmatprep.mubr.f32.mxu0 0.0
        %5841 = vmatmul.mubr.f32.gmra.mrb[0].mxu0 %v5701
        %v5842 = vpop.f32.mrb[0].mxu0
        %v5843 = vadd.f32 0.0, %v5842
        %v5844 = vpop.f32.mrb[0].mxu0
        %5845 = vmatprep.mubr.f32.mxu0 0.0
        %5846 = vmatmul.mubr.f32.gmra.mrb[0].mxu0 %v5704
        %v5847 = vpop.f32.mrb[0].mxu0
        %v5848 = vadd.f32 0.0, %v5847
        %v5849 = vpop.f32.mrb[0].mxu0
        %5850 = vdwg.mxu0
        %v5851 = vadd.f32 %v5623, %v5773
        %v5852 = vadd.f32 %v5624, %v5778
        %v5853 = vadd.f32 %v5625, %v5783
        %v5854 = vadd.f32 %v5626, %v5788
        %v5855 = vadd.f32 %v5627, %v5793
        %v5856 = vadd.f32 %v5628, %v5798
        %v5857 = vadd.f32 %v5629, %v5803
        %v5858 = vadd.f32 %v5630, %v5808
        %v5859 = vadd.f32 %v5631, %v5813
        %v5860 = vadd.f32 %v5632, %v5818
        %v5861 = vadd.f32 %v5633, %v5823
        %v5862 = vadd.f32 %v5634, %v5828
        %v5863 = vadd.f32 %v5635, %v5833
        %v5864 = vadd.f32 %v5636, %v5838
        %v5865 = vadd.f32 %v5637, %v5843
        %v5866 = vadd.f32 %v5638, %v5848
        %v5867 = vmul.f32 %v5851, 0.999995
        %v5868 = vmul.f32 %v5852, 0.999995
        %v5869 = vmul.f32 %v5853, 0.999995
        %v5870 = vmul.f32 %v5854, 0.999995
        %v5871 = vmul.f32 %v5855, 0.999995
        %v5872 = vmul.f32 %v5856, 0.999995
        %v5873 = vmul.f32 %v5857, 0.999995
        %v5874 = vmul.f32 %v5858, 0.999995
        %v5875 = vmul.f32 %v5859, 0.999995
        %v5876 = vmul.f32 %v5860, 0.999995
        %v5877 = vmul.f32 %v5861, 0.999995
        %v5878 = vmul.f32 %v5862, 0.999995
        %v5879 = vmul.f32 %v5863, 0.999995
        %v5880 = vmul.f32 %v5864, 0.999995
        %v5881 = vmul.f32 %v5865, 0.999995
        %v5882 = vmul.f32 %v5866, 0.999995
        %v5883 = vmax.f32 %v5867, 0.0
        %v5884 = vmax.f32 %v5868, 0.0
        %v5885 = vmax.f32 %v5869, 0.0
        %v5886 = vmax.f32 %v5870, 0.0
        %v5887 = vmax.f32 %v5871, 0.0
        %v5888 = vmax.f32 %v5872, 0.0
        %v5889 = vmax.f32 %v5873, 0.0
        %v5890 = vmax.f32 %v5874, 0.0
        %v5891 = vmax.f32 %v5875, 0.0
        %v5892 = vmax.f32 %v5876, 0.0
        %v5893 = vmax.f32 %v5877, 0.0
        %v5894 = vmax.f32 %v5878, 0.0
        %v5895 = vmax.f32 %v5879, 0.0
        %v5896 = vmax.f32 %v5880, 0.0
        %v5897 = vmax.f32 %v5881, 0.0
        %v5898 = vmax.f32 %v5882, 0.0
        %v5899 = vld [vmem:[%s6] sm:$0x1]
        %v5901 = vlaneseq
        %v5902 = vshrl.u32 %v5901, 7
        %v5903 = vsub.s32 0, %v5902
        %v5904 = vrot.slane %v5899, %v5903
        %v5906 = vadd.f32 %v5883, %v5904
        %v5907 = vadd.f32 %v5884, %v5904
        %v5908 = vadd.f32 %v5885, %v5904
        %v5909 = vadd.f32 %v5886, %v5904
        %v5910 = vadd.f32 %v5887, %v5904
        %v5911 = vadd.f32 %v5888, %v5904
        %v5912 = vadd.f32 %v5889, %v5904
        %v5913 = vadd.f32 %v5890, %v5904
        %v5914 = vadd.f32 %v5891, %v5904
        %v5915 = vadd.f32 %v5892, %v5904
        %v5916 = vadd.f32 %v5893, %v5904
        %v5917 = vadd.f32 %v5894, %v5904
        %v5918 = vadd.f32 %v5895, %v5904
        %v5919 = vadd.f32 %v5896, %v5904
        %v5920 = vadd.f32 %v5897, %v5904
        %v5921 = vadd.f32 %v5898, %v5904
        %vm5922 = vcmask 261120
        %5923 = vst.msk [vmem:[%s399] sm:$0xff] %vm5922, %v5906
        %5924 = vst.msk [vmem:[%s399 + $0x8] sm:$0xff] %vm5922, %v5907
        %5925 = vst.msk [vmem:[%s399 + $0x10] sm:$0xff] %vm5922, %v5908
        %5926 = vst.msk [vmem:[%s399 + $0x18] sm:$0xff] %vm5922, %v5909
        %5927 = vst.msk [vmem:[%s399 + $0x20] sm:$0xff] %vm5922, %v5910
        %5928 = vst.msk [vmem:[%s399 + $0x28] sm:$0xff] %vm5922, %v5911
        %5929 = vst.msk [vmem:[%s399 + $0x30] sm:$0xff] %vm5922, %v5912
        %5930 = vst.msk [vmem:[%s399 + $0x38] sm:$0xff] %vm5922, %v5913
        %5931 = vst.msk [vmem:[%s399 + $0x40] sm:$0xff] %vm5922, %v5914
        %5932 = vst.msk [vmem:[%s399 + $0x48] sm:$0xff] %vm5922, %v5915
        %5933 = vst.msk [vmem:[%s399 + $0x50] sm:$0xff] %vm5922, %v5916
        %5934 = vst.msk [vmem:[%s399 + $0x58] sm:$0xff] %vm5922, %v5917
        %5935 = vst.msk [vmem:[%s399 + $0x60] sm:$0xff] %vm5922, %v5918
        %5936 = vst.msk [vmem:[%s399 + $0x68] sm:$0xff] %vm5922, %v5919
        %5937 = vst.msk [vmem:[%s399 + $0x70] sm:$0xff] %vm5922, %v5920
        %5938 = vst.msk [vmem:[%s399 + $0x78] sm:$0xff] %vm5922, %v5921
      $region56: #{tpu_custom_call.1} parent=47 // pred_fallthru
        _
      %s5939 = smul.u32 16, %s22
      %p5940 = scmp.lt.s32.totalorder %s5939, 31
      %s5941 = scalar_select %p5940, %s5939, 31
      %s5942 = smul.addr %s5941, 8
      %s5943 = scalar_lea.vmem %s7, %s5942
      // Predicated region
      $region57: #{tpu_custom_call.1} parent=47 // pred_check
        %p5944 = pneg %p222
      $region58: #{tpu_custom_call.1} parent=47 // pred_check_branch
        %5946 = sbr.rel (%p5944) target = $region60
      $region59: #{tpu_custom_call.1} parent=47 // pred_region
        %s5947 = smul.u32 16, %s22
      $region60: #{tpu_custom_call.1} parent=47 // pred_fallthru
        _
    $region48: #{tpu_custom_call.1} parent=5 // pred_fallthru
      _
    %p5948 = scmp.le.s32.totalorder 2, %s13
    // Predicated region
    $region61: #{tpu_custom_call.1} parent=5 // pred_check
      %p5949 = pneg %p5948
    $region62: #{tpu_custom_call.1} parent=5 // pred_check_branch
      %5951 = sbr.rel (%p5949) target = $region64
    $region63: #{tpu_custom_call.1} parent=5 // pred_region
      %s5952 = ssub.s32 %s13, 2
      // Predicated region
      $region65: #{tpu_custom_call.1} parent=63 // pred_check
        %p5953 = pneg %p228
      $region66: #{tpu_custom_call.1} parent=63 // pred_check_branch
        %5955 = sbr.rel (%p5953) target = $region68
      $region67: #{tpu_custom_call.1} parent=63 // pred_region
        %s5956 = smul.u32 16, %s24
        %p5957 = scmp.lt.s32.totalorder %s5956, 31
        %s5958 = scalar_select %p5957, %s5956, 31
        %s5959 = smul.addr %s5958, 8
        %s5960 = scalar_lea.vmem %s7, %s5959
      $region68: #{tpu_custom_call.1} parent=63 // pred_fallthru
        _
    $region64: #{tpu_custom_call.1} parent=5 // pred_fallthru
      _
  $region6: #{tpu_custom_call.1} parent=0 // loop_footer
    %s17 = sadd.s32 1, %s13
  $region7: #{tpu_custom_call.1} parent=0 // loop_footer_branch
    %12 = sbr.rel target = $region3
  $region8: #{tpu_custom_call.1} parent=0 // loop_exit
    _

</llo_original>
